<compile_context>
chip_gen: v7x
topology: tpu7x:2x2x1
jax: 0.10.0
libtpu: 0.0.40
codegen_flags: <defaults>
</compile_context>

<pallas_src>
import numpy as np
import jax
import jax.numpy as jnp
from jax import lax
from jax.experimental import pallas as pl
from jax.experimental.pallas import tpu as pltpu

# ----------------------------- configuration --------------------------------
HIDDEN_DIM = 32          # hidden_dim = input_dim = output_dim
N_HEADS = 4
NUM_R_GAUSSIAN = 16      # r_feat_dim
R_MIN, R_MAX = 0.0, 10.0
NUM_X2H = 1
LN_EPS = 1e-5

KV_DIM = 2 * HIDDEN_DIM + NUM_R_GAUSSIAN     # 80
EDGE_FEAT_WIDTH = 96                         # [kv (80) | rel_x (3) | zero pad (13)]
REL_W = 8                                    # lane slot used for rel_x / dx
OUT_W = 128                                  # lane-dense output slab width
NEG_INF = -1e30


# ------------------------------ Pallas kernel --------------------------------
def _make_x2h_kernel(tile_n, tile_e, n_heads, hidden):
    H, Dh = n_heads, hidden
    dh = Dh // H                     # per-head dim (8)

    def ln_relu(t, g, beta):
        mu = jnp.mean(t, axis=-1, keepdims=True)
        var = jnp.mean(jnp.square(t - mu), axis=-1, keepdims=True)
        return jnp.maximum((t - mu) * lax.rsqrt(var + LN_EPS) * g + beta, 0.0)

    def kernel(blk_start_ref, blk_count_ref,                 # scalar prefetch
               h_ref, hm_ref, ef_ref, dst_ref,               # tensors
               w1e_ref, ln1_ref, w2e_ref, b2e_ref,
               wq_ref, auxq_ref, wn1_ref, wn2_ref, auxn_ref,
               out_ref,                                      # output slab
               q_sc, m_sc, l_sc, acch_sc, accx_sc):          # scratch
        b = pl.program_id(0)
        j = pl.program_id(1)

        # --- per-node-block init: query MLP + accumulator reset --------------
        @pl.when(j == 0)
        def _init():
            wq = wq_ref[...]
            aq = auxq_ref[...]
            tq = jnp.dot(h_ref[...], wq[:, :Dh],
                         preferred_element_type=jnp.float32) + aq[0:1, :]
            tq = ln_relu(tq, aq[1:2, :], aq[2:3, :])
            # 1/sqrt(d_head) is folded into wq[:, Dh:] / aq[3]
            q_sc[...] = jnp.dot(tq, wq[:, Dh:],
                                preferred_element_type=jnp.float32) + aq[3:4, :]
            m_sc[...] = jnp.full((tile_n, 1), NEG_INF, jnp.float32)
            l_sc[...] = jnp.zeros((tile_n, H), jnp.float32)
            acch_sc[...] = jnp.zeros((tile_n, Dh), jnp.float32)
            accx_sc[...] = jnp.zeros((tile_n, H * REL_W), jnp.float32)

        # --- edge-block pass: edge MLPs + online segment softmax -------------
        @pl.when(j < blk_count_ref[b])
        def _edge_block():
            ef = ef_ref[...]                                    # [TE, 96] f32
            # fused first layer of the hk / hv / xv edge MLPs
            t_all = jnp.dot(ef, w1e_ref[...],
                            preferred_element_type=jnp.float32)
            ln1 = ln1_ref[...]
            t_all = t_all + ln1[0:1, :]
            hk_h = ln_relu(t_all[:, 0:Dh], ln1[1:2, 0:Dh], ln1[2:3, 0:Dh])
            hv_h = ln_relu(t_all[:, Dh:2 * Dh],
                           ln1[1:2, Dh:2 * Dh], ln1[2:3, Dh:2 * Dh])
            hx_h = ln_relu(t_all[:, 2 * Dh:3 * Dh],
                           ln1[1:2, 2 * Dh:3 * Dh], ln1[2:3, 2 * Dh:3 * Dh])
            w2 = w2e_ref[...]
            b2 = b2e_ref[...]
            k = jnp.dot(hk_h, w2[:, 0:Dh],
                        preferred_element_type=jnp.float32) + b2[:, 0:Dh]
            v = jnp.dot(hv_h, w2[:, Dh:2 * Dh],
                        preferred_element_type=jnp.float32) + b2[:, Dh:2 * Dh]
            # 1/n_heads is folded into the xv second-layer weights
            xw = jnp.dot(hx_h, w2[:, 2 * Dh:],
                         preferred_element_type=jnp.float32) + b2[:, 2 * Dh:]
            rel_x = ef[:, KV_DIM:KV_DIM + REL_W]                # [TE, 8] f32

            # local segment mask: edge e belongs to node row n iff dst[e]==b*TN+n
            dst_row = dst_ref[0]                                # [1, TE] int32
            nid = (lax.broadcasted_iota(jnp.int32, (tile_n, tile_e), 0)
                   + b * tile_n)
            seg = nid == dst_row                                # [TN, TE]

            q = q_sc[...]
            m_prev = m_sc[...]
            m_new = m_prev
            scores = []
            for hh in range(H):
                s_h = lax.dot_general(
                    q[:, hh * dh:(hh + 1) * dh], k[:, hh * dh:(hh + 1) * dh],
                    (((1,), (1,)), ((), ())),
                    preferred_element_type=jnp.float32)          # [TN, TE]
                s_h = jnp.where(seg, s_h, NEG_INF)
                scores.append(s_h)
                m_new = jnp.maximum(m_new, jnp.max(s_h, axis=1, keepdims=True))

            rescale = jnp.exp(m_prev - m_new)                   # [TN, 1]
            l_cols, mh_cols, mx_cols = [], [], []
            for hh in range(H):
                p_h = jnp.where(seg, jnp.exp(scores[hh] - m_new), 0.0)
                l_cols.append(jnp.sum(p_h, axis=1, keepdims=True))
                p_b = p_h.astype(jnp.bfloat16)
                v_h = v[:, hh * dh:(hh + 1) * dh].astype(jnp.bfloat16)
                mh_cols.append(jnp.dot(p_b, v_h,
                                       preferred_element_type=jnp.float32))
                rx_h = (xw[:, hh:hh + 1] * rel_x).astype(jnp.bfloat16)
                mx_cols.append(jnp.dot(p_b, rx_h,
                                       preferred_element_type=jnp.float32))

            m_sc[...] = m_new
            l_sc[...] = l_sc[...] * rescale + jnp.concatenate(l_cols, axis=1)
            acch_sc[...] = acch_sc[...] * rescale + jnp.concatenate(mh_cols, axis=1)
            accx_sc[...] = accx_sc[...] * rescale + jnp.concatenate(mx_cols, axis=1)

        # --- finalize: normalize, node_output MLP + residual, dense store ----
        @pl.when(j == pl.num_programs(1) - 1)
        def _finalize():
            l = l_sc[...]
            l_safe = jnp.where(l > 0.0, l, 1.0)   # nodes with no edges -> msg 0
            inv_l = pl.reciprocal(l_safe, approx=True)
            acc_h = acch_sc[...]
            acc_x = accx_sc[...]
            msg_cols = []
            dx = jnp.zeros((tile_n, REL_W), jnp.float32)
            for hh in range(H):
                inv_h = inv_l[:, hh:hh + 1]
                msg_cols.append(acc_h[:, hh * dh:(hh + 1) * dh] * inv_h)
                dx = dx + acc_x[:, hh * REL_W:(hh + 1) * REL_W] * inv_h
            msg = jnp.concatenate(msg_cols, axis=1)             # [TN, Dh]

            hb = h_ref[...]
            wn1 = wn1_ref[...]
            an = auxn_ref[...]
            t = (jnp.dot(msg, wn1[:Dh, :], preferred_element_type=jnp.float32)
                 + jnp.dot(hm_ref[...], wn1[Dh:, :],
                           preferred_element_type=jnp.float32)
                 + an[0:1, :])
            t = ln_relu(t, an[1:2, :], an[2:3, :])
            out_fc = jnp.dot(t, wn2_ref[...],
                             preferred_element_type=jnp.float32) + an[3:4, :]
            h_new = out_fc + hb

            pad = jnp.zeros((tile_n, OUT_W - Dh - REL_W), jnp.float32)
            out_ref[...] = jnp.concatenate([h_new, dx, pad], axis=1)

    return kernel


# ------------------------------ glue / wrapper --------------------------------
def pack_x2h_params(p):
    """Pack the 31 small tensors into 9 refs, folding the score scale and the
    1/n_heads head-mean into the hq / xv second-layer weights."""
    Dh, H, F = HIDDEN_DIM, N_HEADS, EDGE_FEAT_WIDTH
    hk, hv, xv, hq, no = p['hk'], p['hv'], p['xv'], p['hq'], p['node_output']
    sq = jnp.float32(1.0 / np.sqrt(Dh // H))
    sx = jnp.float32(1.0 / H)

    w1 = jnp.concatenate([hk['w1'], hv['w1'], xv['w1']], axis=1)          # [80,96]
    w1e = jnp.concatenate(
        [w1, jnp.zeros((F - KV_DIM, 3 * Dh), jnp.float32)], axis=0)       # [96,96]
    ln1 = jnp.concatenate([
        jnp.concatenate([hk['b1'], hv['b1'], xv['b1']], axis=1),
        jnp.concatenate([hk['g'], hv['g'], xv['g']], axis=1),
        jnp.concatenate([hk['beta'], hv['beta'], xv['beta']], axis=1)],
        axis=0)                                                            # [3,96]
    w2e = jnp.concatenate([hk['w2'], hv['w2'], xv['w2'] * sx], axis=1)     # [32,68]
    b2e = jnp.concatenate([hk['b2'], hv['b2'], xv['b2'] * sx], axis=1)     # [1,68]
    wq = jnp.concatenate([hq['w1'], hq['w2'] * sq], axis=1)                # [32,64]
    auxq = jnp.concatenate([hq['b1'], hq['g'], hq['beta'], hq['b2'] * sq],
                           axis=0)                                         # [4,32]
    wn1 = no['w1']                                                         # [64,32]
    wn2 = no['w2']                                                         # [32,32]
    auxn = jnp.concatenate([no['b1'], no['g'], no['beta'], no['b2']], axis=0)
    return (w1e, ln1, w2e, b2e, wq, auxq, wn1, wn2, auxn)


def x2h_layer_pallas(packed_w, h, x, mask_ligand, meta, offsets, coeff):
    """BaseX2HAttLayer_cross.forward (plus GaussianSmearing) on sorted edges."""
    N, Dh = h.shape
    H = N_HEADS
    TN, TE = meta['tile_n'], meta['tile_e']
    N_pad, NB = meta['n_pad'], meta['nb']
    E_pad, EB, KB = meta['e_pad'], meta['eb'], meta['kb']

    d_g = meta['d_gather']      # scatter node per edge (layer "dst")
    s_g = meta['s_gather']      # other endpoint per edge (layer "src")

    # per-edge features in sorted edge order, lane-packed, f32
    rel_x = jnp.take(x, d_g, axis=0) - jnp.take(x, s_g, axis=0)           # [E,3]
    dist = jnp.sqrt(jnp.sum(rel_x * rel_x, axis=-1, keepdims=True))
    # GaussianSmearing; outer_product with a single argument is identity
    r_feat = jnp.exp(coeff * jnp.square(dist - offsets[None, :]))         # [E,G]
    hi = jnp.take(h, s_g, axis=0)
    hj = jnp.take(h, d_g, axis=0)
    pad_cols = EDGE_FEAT_WIDTH - (KV_DIM + 3)
    ef = jnp.concatenate(
        [r_feat, hi, hj, rel_x, jnp.zeros((E_pad, pad_cols), jnp.float32)],
        axis=1).astype(jnp.float32)                                       # [E,96]
    dst_lanes = meta['d_mask'].reshape(EB, 1, TE)                         # int32

    h_pad = jnp.pad(h, ((0, N_pad - N), (0, 0)))
    # NOTE: as in the PyTorch code, mask_ligand is an integer 0/1 vector, so
    # h[mask_ligand] is a row gather of rows 0/1 (shape [N, Dh]).
    # TODO(synk): if the source model passes a bool mask this becomes a
    # boolean row-selection with a different shape; verify upstream.
    hm_pad = jnp.pad(jnp.take(h, mask_ligand, axis=0), ((0, N_pad - N), (0, 0)))

    def nb_map(b, j, bs, bc):
        return (b, 0)

    def const_map(b, j, bs, bc):
        return (0, 0)

    def e_map(b, j, bs, bc):
        jj = jnp.minimum(j, jnp.maximum(bc[b] - 1, 0))
        return (bs[b] + jj, 0)

    def e3_map(b, j, bs, bc):
        jj = jnp.minimum(j, jnp.maximum(bc[b] - 1, 0))
        return (bs[b] + jj, 0, 0)

    F = EDGE_FEAT_WIDTH
    in_specs = [
        pl.BlockSpec((TN, Dh), nb_map),                   # h
        pl.BlockSpec((TN, Dh), nb_map),                   # h[mask_ligand]
        pl.BlockSpec((TE, F), e_map),                     # per-edge features
        pl.BlockSpec((1, 1, TE), e3_map),                 # per-edge dst (lanes)
        pl.BlockSpec((F, 3 * Dh), const_map),             # fused edge W1
        pl.BlockSpec((3, 3 * Dh), const_map),             # fused edge b1/g/beta
        pl.BlockSpec((Dh, 2 * Dh + H), const_map),        # fused edge W2
        pl.BlockSpec((1, 2 * Dh + H), const_map),         # fused edge b2
        pl.BlockSpec((Dh, 2 * Dh), const_map),            # hq W1|W2
        pl.BlockSpec((4, Dh), const_map),                 # hq b1/g/beta/b2
        pl.BlockSpec((2 * Dh, Dh), const_map),            # node_output W1
        pl.BlockSpec((Dh, Dh), const_map),                # node_output W2
        pl.BlockSpec((4, Dh), const_map),                 # node_output b1/g/beta/b2
    ]
    out_specs = pl.BlockSpec((TN, OUT_W), nb_map)
    scratch = [
        pltpu.VMEM((TN, Dh), jnp.float32),                # q (pre-scaled)
        pltpu.VMEM((TN, 1), jnp.float32),                 # running max per node
        pltpu.VMEM((TN, H), jnp.float32),                 # running softmax denom
        pltpu.VMEM((TN, Dh), jnp.float32),                # message accumulator
        pltpu.VMEM((TN, H * REL_W), jnp.float32),         # coordinate accumulator
    ]

    out = pl.pallas_call(
        _make_x2h_kernel(TN, TE, H, Dh),
        out_shape=jax.ShapeDtypeStruct((N_pad, OUT_W), jnp.float32),
        grid_spec=pltpu.PrefetchScalarGridSpec(
            num_scalar_prefetch=2,
            grid=(NB, KB),
            in_specs=in_specs,
            out_specs=out_specs,
            scratch_shapes=scratch),
        compiler_params=pltpu.CompilerParams(
            dimension_semantics=("parallel", "arbitrary"),
            vmem_limit_bytes=32 * 1024 * 1024),
    )(meta['blk_start'], meta['blk_count'],
      h_pad, hm_pad, ef, dst_lanes, *packed_w)

    return out[:N, :Dh], out[:N, Dh:Dh + 3]


def attention_layer_forward(params, h, x, mask_ligand, meta):
    """AttentionLayerO2TwoUpdateNodeGeneral_cross.forward (edges preprocessed)."""
    offsets = params['gauss_offset']
    coeff = params['gauss_coeff']
    packed = pack_x2h_params(params['x2h_0'])
    h_in = h
    for _ in range(NUM_X2H):
        h_out, delta_x = x2h_layer_pallas(packed, h_in, x, mask_ligand, meta,
                                          offsets, coeff)
        h_in = h_out
        x = x + delta_x
    return h_in, x


# --------------------------- parameter construction --------------------------
def _init_linear(key, fan_in, fan_out):
    kw, kb = jax.random.split(key)
    bound = 1.0 / np.sqrt(fan_in)
    w = jax.random.uniform(kw, (fan_in, fan_out), jnp.float32, -bound, bound)
    b = jax.random.uniform(kb, (1, fan_out), jnp.float32, -bound, bound)
    return w, b


def _init_mlp(key, in_dim, hidden_dim, out_dim):
    k1, k2 = jax.random.split(key)
    w1, b1 = _init_linear(k1, in_dim, hidden_dim)
    w2, b2 = _init_linear(k2, hidden_dim, out_dim)
    return dict(w1=w1, b1=b1,
                g=jnp.ones((1, hidden_dim), jnp.float32),
                beta=jnp.zeros((1, hidden_dim), jnp.float32),
                w2=w2, b2=b2)


def init_params(key):
    keys = jax.random.split(key, 5)
    Dh, G = HIDDEN_DIM, NUM_R_GAUSSIAN
    kv_dim = 2 * Dh + G
    hk = _init_mlp(keys[0], kv_dim, Dh, Dh)
    hv = _init_mlp(keys[1], kv_dim, Dh, Dh)
    xv = _init_mlp(keys[2], kv_dim, Dh, N_HEADS)
    hq = _init_mlp(keys[3], Dh, Dh, Dh)
    no = _init_mlp(keys[4], 2 * Dh, Dh, Dh)
    offsets = jnp.linspace(R_MIN, R_MAX, G).astype(jnp.float32)
    delta = (R_MAX - R_MIN) / (G - 1)
    coeff = jnp.float32(-0.5 / delta ** 2)
    # NOTE: self.ew_net exists in the module but is never used in forward -> omitted.
    return dict(gauss_offset=offsets, gauss_coeff=coeff,
                x2h_0=dict(hk=hk, hv=hv, xv=xv, hq=hq, node_output=no))


# ------------------------- host-side edge construction ------------------------
# TODO(synk): the per-batch ligand/protein edge-list build and the segment
# preprocessing have dynamic shapes, so they stay host-side in NumPy (mirrors
# the torch.no_grad() loop exactly).
def build_cross_edges(batch, mask_ligand):
    src_list, dst_list = [], []
    batch_size = int(batch.max()) + 1
    for i in range(batch_size):
        ligand_index = np.nonzero((batch == i) & (mask_ligand == 1))[0]
        protein_index = np.nonzero((batch == i) & (mask_ligand == 0))[0]
        dst1 = np.repeat(protein_index, len(ligand_index))    # repeat_interleave
        src1 = np.tile(ligand_index, len(protein_index))      # .repeat()
        dst_list.append(dst1)
        src_list.append(src1)
    return (np.concatenate(src_list).astype(np.int32),
            np.concatenate(dst_list).astype(np.int32))


def preprocess_edges(src_outer, dst_outer, num_nodes, tile_n, tile_e):
    """Sort edges by scatter destination, pad to tile multiples and compute
    per-node-block edge-block offsets for the scalar-prefetch index maps."""
    # Inside BaseX2HAttLayer_cross: dst, src = edge_index with edge_index=(src, dst)
    scat = np.asarray(src_outer, dtype=np.int64)     # scatter index (layer "dst")
    other = np.asarray(dst_outer, dtype=np.int64)    # other endpoint (layer "src")
    assert scat.shape[0] > 0
    order = np.argsort(scat, kind="stable")
    scat_s, other_s = scat[order], other[order]
    E = int(scat_s.shape[0])

    e_pad = max(tile_e, ((E + tile_e - 1) // tile_e) * tile_e)
    eb = e_pad // tile_e
    n_pad = ((num_nodes + tile_n - 1) // tile_n) * tile_n
    nb = n_pad // tile_n

    d_mask = np.full((e_pad,), -1, dtype=np.int32)
    d_mask[:E] = scat_s
    d_gather = np.zeros((e_pad,), dtype=np.int32)
    d_gather[:E] = scat_s
    s_gather = np.zeros((e_pad,), dtype=np.int32)
    s_gather[:E] = other_s

    starts = np.searchsorted(scat_s, np.arange(nb) * tile_n, side="left")
    ends = np.searchsorted(scat_s, (np.arange(nb) + 1) * tile_n, side="left")
    has = ends > starts
    blk_start = np.where(has, starts // tile_e, 0).astype(np.int32)
    blk_last = np.where(has, np.maximum(ends - 1, 0) // tile_e, 0).astype(np.int32)
    blk_count = np.where(has, blk_last - blk_start + 1, 0).astype(np.int32)
    kb = int(max(1, blk_count.max()))

    return dict(
        tile_n=int(tile_n), tile_e=int(tile_e), n_pad=int(n_pad), nb=int(nb),
        e_pad=int(e_pad), eb=int(eb), kb=kb,
        d_mask=jnp.asarray(d_mask), d_gather=jnp.asarray(d_gather),
        s_gather=jnp.asarray(s_gather),
        blk_start=jnp.asarray(blk_start), blk_count=jnp.asarray(blk_count))


# -------------------------- pure-JAX reference check --------------------------
def reference_forward(params, h, x, src, dst, mask_ligand):
    offsets = params['gauss_offset']
    coeff = params['gauss_coeff']
    p = params['x2h_0']
    H = N_HEADS
    N = h.shape[0]

    def mlp(xx, pp):
        t = xx @ pp['w1'] + pp['b1']
        mu = t.mean(-1, keepdims=True)
        var = ((t - mu) ** 2).mean(-1, keepdims=True)
        t = (t - mu) / jnp.sqrt(var + LN_EPS) * pp['g'] + pp['beta']
        return jnp.maximum(t, 0.0) @ pp['w2'] + pp['b2']

    rel_x = x[src] - x[dst]
    dist = jnp.linalg.norm(rel_x, axis=-1, keepdims=True)
    h_in = h
    for _ in range(NUM_X2H):
        dist_feat = jnp.exp(coeff * (dist - offsets[None, :]) ** 2)
        dst_i, src_i = src, dst                 # layer unpacks (dst, src) = edge_index
        hi, hj = h_in[src_i], h_in[dst_i]
        kv = jnp.concatenate([dist_feat, hi, hj], -1)
        E = kv.shape[0]
        k = mlp(kv, p['hk']).reshape(E, H, -1)
        q = mlp(h_in, p['hq']).reshape(N, H, -1)
        v = mlp(kv, p['hv']).reshape(E, H, -1)
        xw = mlp(kv, p['xv'])
        d = k.shape[-1]
        scores = (q[dst_i] * k / np.sqrt(d)).sum(-1)
        smax = jax.ops.segment_max(scores, dst_i, num_segments=N)
        sexp = jnp.exp(scores - smax[dst_i])
        ssum = jax.ops.segment_sum(sexp, dst_i, num_segments=N)
        alpha = sexp / ssum[dst_i]
        x_v = xw[:, :, None] * rel_x[:, None, :]
        m = alpha[..., None] * v
        m_x = alpha[..., None] * x_v
        output = jax.ops.segment_sum(m, dst_i, num_segments=N).reshape(N, -1)
        output_x = jax.ops.segment_sum(m_x, dst_i, num_segments=N)
        pn = p['node_output']
        hmask = h_in[mask_ligand]
        fused = jnp.concatenate([output, hmask], -1)
        t = fused @ pn['w1'] + pn['b1']
        mu = t.mean(-1, keepdims=True)
        var = ((t - mu) ** 2).mean(-1, keepdims=True)
        t = jnp.maximum((t - mu) / jnp.sqrt(var + LN_EPS) * pn['g'] + pn['beta'], 0.0)
        output = t @ pn['w2'] + pn['b2']
        output = output + h_in
        delta_x = output_x.mean(1)
        h_in = output
        x = x + delta_x
        rel_x = x[src] - x[dst]
        dist = jnp.linalg.norm(rel_x, axis=-1, keepdims=True)
    return h_in, x


# ------------------------------------ main ------------------------------------
if __name__ == "__main__":
    key = jax.random.PRNGKey(0)
    kp, kh, kx = jax.random.split(key, 3)
    params = init_params(kp)

    # small synthetic graph: 2 batch samples
    # sample 0: 4 ligand + 5 protein nodes, sample 1: 3 ligand + 5 protein nodes
    batch_np = np.array([0] * 9 + [1] * 8, dtype=np.int32)
    mask_np = np.array([1, 1, 1, 1, 0, 0, 0, 0, 0,
                        1, 1, 1, 0, 0, 0, 0, 0], dtype=np.int32)
    N = batch_np.shape[0]                                    # 17 nodes
    src_np, dst_np = build_cross_edges(batch_np, mask_np)    # E = 4*5 + 3*5 = 35

    h = jax.random.normal(kh, (N, HIDDEN_DIM), jnp.float32)
    x = jax.random.normal(kx, (N, 3), jnp.float32) * 2.0
    mask_ligand = jnp.asarray(mask_np)
    src_j = jnp.asarray(src_np)
    dst_j = jnp.asarray(dst_np)

    # tiny tiles for the toy graph (production would use e.g. tile_n=128, tile_e=512)
    meta = preprocess_edges(src_np, dst_np, N, tile_n=8, tile_e=16)

    fwd = jax.jit(lambda hh, xx: attention_layer_forward(params, hh, xx,
                                                         mask_ligand, meta))
    h_out, x_out = fwd(h, x)
    jax.block_until_ready((h_out, x_out))

    ref = jax.jit(lambda hh, xx: reference_forward(params, hh, xx,
                                                   src_j, dst_j, mask_ligand))
    h_ref, x_ref = ref(h, x)
    jax.block_until_ready((h_ref, x_ref))

    np.testing.assert_allclose(np.asarray(h_out), np.asarray(h_ref),
                               rtol=5e-2, atol=5e-2)
    np.testing.assert_allclose(np.asarray(x_out), np.asarray(x_ref),
                               rtol=5e-2, atol=5e-2)
    print("KERNEL_OK")
</pallas_src>

<mosaic_0001>
module attributes {stable_mosaic.version = 11 : i64} {
  func.func @kernel(%arg0: i32, %arg1: i32, %arg2: memref<3xi32, #tpu.memory_space<smem>>, %arg3: memref<3xi32, #tpu.memory_space<smem>>, %arg4: memref<8x32xf32, #tpu.memory_space<vmem>>, %arg5: memref<8x32xf32, #tpu.memory_space<vmem>>, %arg6: memref<16x96xf32, #tpu.memory_space<vmem>>, %arg7: memref<1x1x16xi32, #tpu.memory_space<vmem>>, %arg8: memref<96x96xf32, #tpu.memory_space<vmem>>, %arg9: memref<3x96xf32, #tpu.memory_space<vmem>>, %arg10: memref<32x68xf32, #tpu.memory_space<vmem>>, %arg11: memref<1x68xf32, #tpu.memory_space<vmem>>, %arg12: memref<32x64xf32, #tpu.memory_space<vmem>>, %arg13: memref<4x32xf32, #tpu.memory_space<vmem>>, %arg14: memref<64x32xf32, #tpu.memory_space<vmem>>, %arg15: memref<32x32xf32, #tpu.memory_space<vmem>>, %arg16: memref<4x32xf32, #tpu.memory_space<vmem>>, %arg17: memref<8x128xf32, #tpu.memory_space<vmem>>, %arg18: memref<8x32xf32, #tpu.memory_space<vmem>>, %arg19: memref<8x1xf32, #tpu.memory_space<vmem>>, %arg20: memref<8x4xf32, #tpu.memory_space<vmem>>, %arg21: memref<8x32xf32, #tpu.memory_space<vmem>>, %arg22: memref<8x32xf32, #tpu.memory_space<vmem>>) attributes {dimension_semantics = [#tpu.dimension_semantics<parallel>, #tpu.dimension_semantics<arbitrary>], iteration_bounds = array<i64: 3, 2>, scalar_prefetch = 2 : i64, scratch_operands = 5 : i64, tpu.core_type = #tpu.core_type<tc>, window_params = [{transform_indices = @transform_0, window_bounds = array<i64: 8, 32>}, {transform_indices = @transform_1, window_bounds = array<i64: 8, 32>}, {transform_indices = @transform_2, window_bounds = array<i64: 16, 96>}, {transform_indices = @transform_3, window_bounds = array<i64: 1, 1, 16>}, {pipeline_mode = #tpu.pipeline_mode<synchronous>, transform_indices = @transform_4, window_bounds = array<i64: 96, 96>}, {pipeline_mode = #tpu.pipeline_mode<synchronous>, transform_indices = @transform_5, window_bounds = array<i64: 3, 96>}, {pipeline_mode = #tpu.pipeline_mode<synchronous>, transform_indices = @transform_6, window_bounds = array<i64: 32, 68>}, {pipeline_mode = #tpu.pipeline_mode<synchronous>, transform_indices = @transform_7, window_bounds = array<i64: 1, 68>}, {pipeline_mode = #tpu.pipeline_mode<synchronous>, transform_indices = @transform_8, window_bounds = array<i64: 32, 64>}, {pipeline_mode = #tpu.pipeline_mode<synchronous>, transform_indices = @transform_9, window_bounds = array<i64: 4, 32>}, {pipeline_mode = #tpu.pipeline_mode<synchronous>, transform_indices = @transform_10, window_bounds = array<i64: 64, 32>}, {pipeline_mode = #tpu.pipeline_mode<synchronous>, transform_indices = @transform_11, window_bounds = array<i64: 32, 32>}, {pipeline_mode = #tpu.pipeline_mode<synchronous>, transform_indices = @transform_12, window_bounds = array<i64: 4, 32>}, {transform_indices = @transform_13, window_bounds = array<i64: 8, 128>}]} {
    %c0_i32 = arith.constant 0 : i32
    %0 = arith.cmpi eq, %arg1, %c0_i32 : i32
    %1 = arith.extui %0 : i1 to i32
    %c0_i32_0 = arith.constant 0 : i32
    %2 = arith.cmpi ne, %1, %c0_i32_0 : i32
    scf.if %2 {
      %c0 = arith.constant 0 : index
      %c0_3 = arith.constant 0 : index
      %11 = vector.load %arg12[%c0, %c0_3] : memref<32x64xf32, #tpu.memory_space<vmem>>, vector<32x64xf32>
      %c0_4 = arith.constant 0 : index
      %c0_5 = arith.constant 0 : index
      %12 = vector.load %arg13[%c0_4, %c0_5] : memref<4x32xf32, #tpu.memory_space<vmem>>, vector<4x32xf32>
      %c0_6 = arith.constant 0 : index
      %c0_7 = arith.constant 0 : index
      %13 = vector.load %arg4[%c0_6, %c0_7] : memref<8x32xf32, #tpu.memory_space<vmem>>, vector<8x32xf32>
      %14 = vector.extract_strided_slice %11 {offsets = [0, 0], sizes = [32, 32], strides = [1, 1]} : vector<32x64xf32> to vector<32x32xf32>
      %cst = arith.constant dense<0.000000e+00> : vector<8x32xf32>
      %15 = tpu.matmul %13, %14, %cst {dimension_numbers = #tpu.dot_dimension_numbers<[1], [0], [0], [1], [0, 0, 1, 1], [], []>} : vector<8x32xf32>, vector<32x32xf32>, vector<8x32xf32> -> vector<8x32xf32>
      %16 = vector.extract_strided_slice %12 {offsets = [0, 0], sizes = [1, 32], strides = [1, 1]} : vector<4x32xf32> to vector<1x32xf32>
      %17 = vector.broadcast %16 : vector<1x32xf32> to vector<8x32xf32>
      %18 = arith.addf %15, %17 : vector<8x32xf32>
      %19 = vector.extract_strided_slice %12 {offsets = [1, 0], sizes = [1, 32], strides = [1, 1]} : vector<4x32xf32> to vector<1x32xf32>
      %20 = vector.extract_strided_slice %12 {offsets = [2, 0], sizes = [1, 32], strides = [1, 1]} : vector<4x32xf32> to vector<1x32xf32>
      %cst_8 = arith.constant dense<0.000000e+00> : vector<8xf32>
      %21 = vector.multi_reduction <add>, %18, %cst_8 [1] : vector<8x32xf32> to vector<8xf32>
      %22 = vector.shape_cast %21 : vector<8xf32> to vector<8x1xf32>
      %cst_9 = arith.constant 3.200000e+01 : f32
      %23 = vector.broadcast %cst_9 : f32 to vector<8x1xf32>
      %24 = arith.divf %22, %23 : vector<8x1xf32>
      %25 = vector.broadcast %24 : vector<8x1xf32> to vector<8x32xf32>
      %26 = arith.subf %18, %25 : vector<8x32xf32>
      %27 = arith.mulf %26, %26 : vector<8x32xf32>
      %cst_10 = arith.constant dense<0.000000e+00> : vector<8xf32>
      %28 = vector.multi_reduction <add>, %27, %cst_10 [1] : vector<8x32xf32> to vector<8xf32>
      %29 = vector.shape_cast %28 : vector<8xf32> to vector<8x1xf32>
      %cst_11 = arith.constant 3.200000e+01 : f32
      %30 = vector.broadcast %cst_11 : f32 to vector<8x1xf32>
      %31 = arith.divf %29, %30 : vector<8x1xf32>
      %32 = vector.broadcast %24 : vector<8x1xf32> to vector<8x32xf32>
      %33 = arith.subf %18, %32 : vector<8x32xf32>
      %cst_12 = arith.constant 9.99999974E-6 : f32
      %34 = vector.broadcast %cst_12 : f32 to vector<8x1xf32>
      %35 = arith.addf %31, %34 : vector<8x1xf32>
      %36 = math.rsqrt %35 : vector<8x1xf32>
      %37 = vector.broadcast %36 : vector<8x1xf32> to vector<8x32xf32>
      %38 = arith.mulf %33, %37 : vector<8x32xf32>
      %39 = vector.broadcast %19 : vector<1x32xf32> to vector<8x32xf32>
      %40 = arith.mulf %38, %39 : vector<8x32xf32>
      %41 = vector.broadcast %20 : vector<1x32xf32> to vector<8x32xf32>
      %42 = arith.addf %40, %41 : vector<8x32xf32>
      %cst_13 = arith.constant 0.000000e+00 : f32
      %43 = vector.broadcast %cst_13 : f32 to vector<8x32xf32>
      %44 = arith.maximumf %42, %43 : vector<8x32xf32>
      %45 = vector.extract_strided_slice %11 {offsets = [0, 32], sizes = [32, 32], strides = [1, 1]} : vector<32x64xf32> to vector<32x32xf32>
      %cst_14 = arith.constant dense<0.000000e+00> : vector<8x32xf32>
      %46 = tpu.matmul %44, %45, %cst_14 {dimension_numbers = #tpu.dot_dimension_numbers<[1], [0], [0], [1], [0, 0, 1, 1], [], []>} : vector<8x32xf32>, vector<32x32xf32>, vector<8x32xf32> -> vector<8x32xf32>
      %47 = vector.extract_strided_slice %12 {offsets = [3, 0], sizes = [1, 32], strides = [1, 1]} : vector<4x32xf32> to vector<1x32xf32>
      %48 = vector.broadcast %47 : vector<1x32xf32> to vector<8x32xf32>
      %49 = arith.addf %46, %48 : vector<8x32xf32>
      %c0_15 = arith.constant 0 : index
      %c0_16 = arith.constant 0 : index
      %50 = vector.load %arg18[%c0_15, %c0_16] : memref<8x32xf32, #tpu.memory_space<vmem>>, vector<8x32xf32>
      tpu.vector_store %arg18[%c0_15, %c0_16], %49 {strides = array<i32>} : memref<8x32xf32, #tpu.memory_space<vmem>>, vector<8x32xf32>,
      %cst_17 = arith.constant -1.000000e+30 : f32
      %51 = vector.broadcast %cst_17 : f32 to vector<8x1xf32>
      %c0_18 = arith.constant 0 : index
      %c0_19 = arith.constant 0 : index
      %52 = vector.load %arg19[%c0_18, %c0_19] : memref<8x1xf32, #tpu.memory_space<vmem>>, vector<8x1xf32>
      tpu.vector_store %arg19[%c0_18, %c0_19], %51 {strides = array<i32>} : memref<8x1xf32, #tpu.memory_space<vmem>>, vector<8x1xf32>,
      %cst_20 = arith.constant 0.000000e+00 : f32
      %53 = vector.broadcast %cst_20 : f32 to vector<8x4xf32>
      %c0_21 = arith.constant 0 : index
      %c0_22 = arith.constant 0 : index
      %54 = vector.load %arg20[%c0_21, %c0_22] : memref<8x4xf32, #tpu.memory_space<vmem>>, vector<8x4xf32>
      tpu.vector_store %arg20[%c0_21, %c0_22], %53 {strides = array<i32>} : memref<8x4xf32, #tpu.memory_space<vmem>>, vector<8x4xf32>,
      %cst_23 = arith.constant 0.000000e+00 : f32
      %55 = vector.broadcast %cst_23 : f32 to vector<8x32xf32>
      %c0_24 = arith.constant 0 : index
      %c0_25 = arith.constant 0 : index
      %56 = vector.load %arg21[%c0_24, %c0_25] : memref<8x32xf32, #tpu.memory_space<vmem>>, vector<8x32xf32>
      tpu.vector_store %arg21[%c0_24, %c0_25], %55 {strides = array<i32>} : memref<8x32xf32, #tpu.memory_space<vmem>>, vector<8x32xf32>,
      %cst_26 = arith.constant 0.000000e+00 : f32
      %57 = vector.broadcast %cst_26 : f32 to vector<8x32xf32>
      %c0_27 = arith.constant 0 : index
      %c0_28 = arith.constant 0 : index
      %58 = vector.load %arg22[%c0_27, %c0_28] : memref<8x32xf32, #tpu.memory_space<vmem>>, vector<8x32xf32>
      tpu.vector_store %arg22[%c0_27, %c0_28], %57 {strides = array<i32>} : memref<8x32xf32, #tpu.memory_space<vmem>>, vector<8x32xf32>,
    } else {
    }
    %3 = arith.index_cast %arg0 : i32 to index
    %4 = memref.load %arg3[%3] : memref<3xi32, #tpu.memory_space<smem>>
    %5 = arith.cmpi slt, %arg1, %4 : i32
    %6 = arith.extui %5 : i1 to i32
    %c0_i32_1 = arith.constant 0 : i32
    %7 = arith.cmpi ne, %6, %c0_i32_1 : i32
    scf.if %7 {
      %c0 = arith.constant 0 : index
      %c0_3 = arith.constant 0 : index
      %11 = vector.load %arg6[%c0, %c0_3] : memref<16x96xf32, #tpu.memory_space<vmem>>, vector<16x96xf32>
      %c0_4 = arith.constant 0 : index
      %c0_5 = arith.constant 0 : index
      %12 = vector.load %arg8[%c0_4, %c0_5] : memref<96x96xf32, #tpu.memory_space<vmem>>, vector<96x96xf32>
      %cst = arith.constant dense<0.000000e+00> : vector<16x96xf32>
      %13 = tpu.matmul %11, %12, %cst {dimension_numbers = #tpu.dot_dimension_numbers<[1], [0], [0], [1], [0, 0, 1, 1], [], []>} : vector<16x96xf32>, vector<96x96xf32>, vector<16x96xf32> -> vector<16x96xf32>
      %c0_6 = arith.constant 0 : index
      %c0_7 = arith.constant 0 : index
      %14 = vector.load %arg9[%c0_6, %c0_7] : memref<3x96xf32, #tpu.memory_space<vmem>>, vector<3x96xf32>
      %15 = vector.extract_strided_slice %14 {offsets = [0, 0], sizes = [1, 96], strides = [1, 1]} : vector<3x96xf32> to vector<1x96xf32>
      %16 = vector.broadcast %15 : vector<1x96xf32> to vector<16x96xf32>
      %17 = arith.addf %13, %16 : vector<16x96xf32>
      %18 = vector.extract_strided_slice %17 {offsets = [0, 0], sizes = [16, 32], strides = [1, 1]} : vector<16x96xf32> to vector<16x32xf32>
      %19 = vector.extract_strided_slice %14 {offsets = [1, 0], sizes = [1, 32], strides = [1, 1]} : vector<3x96xf32> to vector<1x32xf32>
      %20 = vector.extract_strided_slice %14 {offsets = [2, 0], sizes = [1, 32], strides = [1, 1]} : vector<3x96xf32> to vector<1x32xf32>
      %cst_8 = arith.constant dense<0.000000e+00> : vector<16xf32>
      %21 = vector.multi_reduction <add>, %18, %cst_8 [1] : vector<16x32xf32> to vector<16xf32>
      %22 = vector.shape_cast %21 : vector<16xf32> to vector<16x1xf32>
      %cst_9 = arith.constant 3.200000e+01 : f32
      %23 = vector.broadcast %cst_9 : f32 to vector<16x1xf32>
      %24 = arith.divf %22, %23 : vector<16x1xf32>
      %25 = vector.broadcast %24 : vector<16x1xf32> to vector<16x32xf32>
      %26 = arith.subf %18, %25 : vector<16x32xf32>
      %27 = arith.mulf %26, %26 : vector<16x32xf32>
      %cst_10 = arith.constant dense<0.000000e+00> : vector<16xf32>
      %28 = vector.multi_reduction <add>, %27, %cst_10 [1] : vector<16x32xf32> to vector<16xf32>
      %29 = vector.shape_cast %28 : vector<16xf32> to vector<16x1xf32>
      %cst_11 = arith.constant 3.200000e+01 : f32
      %30 = vector.broadcast %cst_11 : f32 to vector<16x1xf32>
      %31 = arith.divf %29, %30 : vector<16x1xf32>
      %32 = vector.broadcast %24 : vector<16x1xf32> to vector<16x32xf32>
      %33 = arith.subf %18, %32 : vector<16x32xf32>
      %cst_12 = arith.constant 9.99999974E-6 : f32
      %34 = vector.broadcast %cst_12 : f32 to vector<16x1xf32>
      %35 = arith.addf %31, %34 : vector<16x1xf32>
      %36 = math.rsqrt %35 : vector<16x1xf32>
      %37 = vector.broadcast %36 : vector<16x1xf32> to vector<16x32xf32>
      %38 = arith.mulf %33, %37 : vector<16x32xf32>
      %39 = vector.broadcast %19 : vector<1x32xf32> to vector<16x32xf32>
      %40 = arith.mulf %38, %39 : vector<16x32xf32>
      %41 = vector.broadcast %20 : vector<1x32xf32> to vector<16x32xf32>
      %42 = arith.addf %40, %41 : vector<16x32xf32>
      %cst_13 = arith.constant 0.000000e+00 : f32
      %43 = vector.broadcast %cst_13 : f32 to vector<16x32xf32>
      %44 = arith.maximumf %42, %43 : vector<16x32xf32>
      %45 = vector.extract_strided_slice %17 {offsets = [0, 32], sizes = [16, 32], strides = [1, 1]} : vector<16x96xf32> to vector<16x32xf32>
      %46 = vector.extract_strided_slice %14 {offsets = [1, 32], sizes = [1, 32], strides = [1, 1]} : vector<3x96xf32> to vector<1x32xf32>
      %47 = vector.extract_strided_slice %14 {offsets = [2, 32], sizes = [1, 32], strides = [1, 1]} : vector<3x96xf32> to vector<1x32xf32>
      %cst_14 = arith.constant dense<0.000000e+00> : vector<16xf32>
      %48 = vector.multi_reduction <add>, %45, %cst_14 [1] : vector<16x32xf32> to vector<16xf32>
      %49 = vector.shape_cast %48 : vector<16xf32> to vector<16x1xf32>
      %cst_15 = arith.constant 3.200000e+01 : f32
      %50 = vector.broadcast %cst_15 : f32 to vector<16x1xf32>
      %51 = arith.divf %49, %50 : vector<16x1xf32>
      %52 = vector.broadcast %51 : vector<16x1xf32> to vector<16x32xf32>
      %53 = arith.subf %45, %52 : vector<16x32xf32>
      %54 = arith.mulf %53, %53 : vector<16x32xf32>
      %cst_16 = arith.constant dense<0.000000e+00> : vector<16xf32>
      %55 = vector.multi_reduction <add>, %54, %cst_16 [1] : vector<16x32xf32> to vector<16xf32>
      %56 = vector.shape_cast %55 : vector<16xf32> to vector<16x1xf32>
      %cst_17 = arith.constant 3.200000e+01 : f32
      %57 = vector.broadcast %cst_17 : f32 to vector<16x1xf32>
      %58 = arith.divf %56, %57 : vector<16x1xf32>
      %59 = vector.broadcast %51 : vector<16x1xf32> to vector<16x32xf32>
      %60 = arith.subf %45, %59 : vector<16x32xf32>
      %cst_18 = arith.constant 9.99999974E-6 : f32
      %61 = vector.broadcast %cst_18 : f32 to vector<16x1xf32>
      %62 = arith.addf %58, %61 : vector<16x1xf32>
      %63 = math.rsqrt %62 : vector<16x1xf32>
      %64 = vector.broadcast %63 : vector<16x1xf32> to vector<16x32xf32>
      %65 = arith.mulf %60, %64 : vector<16x32xf32>
      %66 = vector.broadcast %46 : vector<1x32xf32> to vector<16x32xf32>
      %67 = arith.mulf %65, %66 : vector<16x32xf32>
      %68 = vector.broadcast %47 : vector<1x32xf32> to vector<16x32xf32>
      %69 = arith.addf %67, %68 : vector<16x32xf32>
      %cst_19 = arith.constant 0.000000e+00 : f32
      %70 = vector.broadcast %cst_19 : f32 to vector<16x32xf32>
      %71 = arith.maximumf %69, %70 : vector<16x32xf32>
      %72 = vector.extract_strided_slice %17 {offsets = [0, 64], sizes = [16, 32], strides = [1, 1]} : vector<16x96xf32> to vector<16x32xf32>
      %73 = vector.extract_strided_slice %14 {offsets = [1, 64], sizes = [1, 32], strides = [1, 1]} : vector<3x96xf32> to vector<1x32xf32>
      %74 = vector.extract_strided_slice %14 {offsets = [2, 64], sizes = [1, 32], strides = [1, 1]} : vector<3x96xf32> to vector<1x32xf32>
      %cst_20 = arith.constant dense<0.000000e+00> : vector<16xf32>
      %75 = vector.multi_reduction <add>, %72, %cst_20 [1] : vector<16x32xf32> to vector<16xf32>
      %76 = vector.shape_cast %75 : vector<16xf32> to vector<16x1xf32>
      %cst_21 = arith.constant 3.200000e+01 : f32
      %77 = vector.broadcast %cst_21 : f32 to vector<16x1xf32>
      %78 = arith.divf %76, %77 : vector<16x1xf32>
      %79 = vector.broadcast %78 : vector<16x1xf32> to vector<16x32xf32>
      %80 = arith.subf %72, %79 : vector<16x32xf32>
      %81 = arith.mulf %80, %80 : vector<16x32xf32>
      %cst_22 = arith.constant dense<0.000000e+00> : vector<16xf32>
      %82 = vector.multi_reduction <add>, %81, %cst_22 [1] : vector<16x32xf32> to vector<16xf32>
      %83 = vector.shape_cast %82 : vector<16xf32> to vector<16x1xf32>
      %cst_23 = arith.constant 3.200000e+01 : f32
      %84 = vector.broadcast %cst_23 : f32 to vector<16x1xf32>
      %85 = arith.divf %83, %84 : vector<16x1xf32>
      %86 = vector.broadcast %78 : vector<16x1xf32> to vector<16x32xf32>
      %87 = arith.subf %72, %86 : vector<16x32xf32>
      %cst_24 = arith.constant 9.99999974E-6 : f32
      %88 = vector.broadcast %cst_24 : f32 to vector<16x1xf32>
      %89 = arith.addf %85, %88 : vector<16x1xf32>
      %90 = math.rsqrt %89 : vector<16x1xf32>
      %91 = vector.broadcast %90 : vector<16x1xf32> to vector<16x32xf32>
      %92 = arith.mulf %87, %91 : vector<16x32xf32>
      %93 = vector.broadcast %73 : vector<1x32xf32> to vector<16x32xf32>
      %94 = arith.mulf %92, %93 : vector<16x32xf32>
      %95 = vector.broadcast %74 : vector<1x32xf32> to vector<16x32xf32>
      %96 = arith.addf %94, %95 : vector<16x32xf32>
      %cst_25 = arith.constant 0.000000e+00 : f32
      %97 = vector.broadcast %cst_25 : f32 to vector<16x32xf32>
      %98 = arith.maximumf %96, %97 : vector<16x32xf32>
      %c0_26 = arith.constant 0 : index
      %c0_27 = arith.constant 0 : index
      %99 = vector.load %arg10[%c0_26, %c0_27] : memref<32x68xf32, #tpu.memory_space<vmem>>, vector<32x68xf32>
      %c0_28 = arith.constant 0 : index
      %c0_29 = arith.constant 0 : index
      %100 = vector.load %arg11[%c0_28, %c0_29] : memref<1x68xf32, #tpu.memory_space<vmem>>, vector<1x68xf32>
      %101 = vector.extract_strided_slice %99 {offsets = [0, 0], sizes = [32, 32], strides = [1, 1]} : vector<32x68xf32> to vector<32x32xf32>
      %cst_30 = arith.constant dense<0.000000e+00> : vector<16x32xf32>
      %102 = tpu.matmul %44, %101, %cst_30 {dimension_numbers = #tpu.dot_dimension_numbers<[1], [0], [0], [1], [0, 0, 1, 1], [], []>} : vector<16x32xf32>, vector<32x32xf32>, vector<16x32xf32> -> vector<16x32xf32>
      %103 = vector.extract_strided_slice %100 {offsets = [0, 0], sizes = [1, 32], strides = [1, 1]} : vector<1x68xf32> to vector<1x32xf32>
      %104 = vector.broadcast %103 : vector<1x32xf32> to vector<16x32xf32>
      %105 = arith.addf %102, %104 : vector<16x32xf32>
      %106 = vector.extract_strided_slice %99 {offsets = [0, 32], sizes = [32, 32], strides = [1, 1]} : vector<32x68xf32> to vector<32x32xf32>
      %cst_31 = arith.constant dense<0.000000e+00> : vector<16x32xf32>
      %107 = tpu.matmul %71, %106, %cst_31 {dimension_numbers = #tpu.dot_dimension_numbers<[1], [0], [0], [1], [0, 0, 1, 1], [], []>} : vector<16x32xf32>, vector<32x32xf32>, vector<16x32xf32> -> vector<16x32xf32>
      %108 = vector.extract_strided_slice %100 {offsets = [0, 32], sizes = [1, 32], strides = [1, 1]} : vector<1x68xf32> to vector<1x32xf32>
      %109 = vector.broadcast %108 : vector<1x32xf32> to vector<16x32xf32>
      %110 = arith.addf %107, %109 : vector<16x32xf32>
      %111 = vector.extract_strided_slice %99 {offsets = [0, 64], sizes = [32, 4], strides = [1, 1]} : vector<32x68xf32> to vector<32x4xf32>
      %cst_32 = arith.constant dense<0.000000e+00> : vector<16x4xf32>
      %112 = tpu.matmul %98, %111, %cst_32 {dimension_numbers = #tpu.dot_dimension_numbers<[1], [0], [0], [1], [0, 0, 1, 1], [], []>} : vector<16x32xf32>, vector<32x4xf32>, vector<16x4xf32> -> vector<16x4xf32>
      %113 = vector.extract_strided_slice %100 {offsets = [0, 64], sizes = [1, 4], strides = [1, 1]} : vector<1x68xf32> to vector<1x4xf32>
      %114 = vector.broadcast %113 : vector<1x4xf32> to vector<16x4xf32>
      %115 = arith.addf %112, %114 : vector<16x4xf32>
      %116 = vector.extract_strided_slice %11 {offsets = [0, 80], sizes = [16, 8], strides = [1, 1]} : vector<16x96xf32> to vector<16x8xf32>
      %c0_33 = arith.constant 0 : index
      %c0_34 = arith.constant 0 : index
      %c0_35 = arith.constant 0 : index
      %117 = vector.load %arg7[%c0_33, %c0_34, %c0_35] : memref<1x1x16xi32, #tpu.memory_space<vmem>>, vector<1x1x16xi32>
      %118 = vector.shape_cast %117 : vector<1x1x16xi32> to vector<1x16xi32>
      %119 = tpu.iota {dimensions = array<i32: 0>} : vector<8x16xi32>
      %c8_i32 = arith.constant 8 : i32
      %120 = arith.muli %arg0, %c8_i32 : i32
      %121 = vector.broadcast %120 : i32 to vector<8x16xi32>
      %122 = arith.addi %119, %121 : vector<8x16xi32>
      %123 = vector.broadcast %118 : vector<1x16xi32> to vector<8x16xi32>
      %124 = arith.cmpi eq, %122, %123 : vector<8x16xi32>
      %c0_36 = arith.constant 0 : index
      %c0_37 = arith.constant 0 : index
      %125 = vector.load %arg18[%c0_36, %c0_37] : memref<8x32xf32, #tpu.memory_space<vmem>>, vector<8x32xf32>
      %c0_38 = arith.constant 0 : index
      %c0_39 = arith.constant 0 : index
      %126 = vector.load %arg19[%c0_38, %c0_39] : memref<8x1xf32, #tpu.memory_space<vmem>>, vector<8x1xf32>
      %127 = vector.extract_strided_slice %125 {offsets = [0, 0], sizes = [8, 8], strides = [1, 1]} : vector<8x32xf32> to vector<8x8xf32>
      %128 = vector.extract_strided_slice %105 {offsets = [0, 0], sizes = [16, 8], strides = [1, 1]} : vector<16x32xf32> to vector<16x8xf32>
      %cst_40 = arith.constant dense<0.000000e+00> : vector<8x16xf32>
      %129 = tpu.matmul %127, %128, %cst_40 {dimension_numbers = #tpu.dot_dimension_numbers<[1], [1], [0], [0], [0, 0, 1, 0], [], []>} : vector<8x8xf32>, vector<16x8xf32>, vector<8x16xf32> -> vector<8x16xf32>
      %cst_41 = arith.constant -1.000000e+30 : f32
      %130 = vector.broadcast %cst_41 : f32 to vector<8x16xf32>
      %131 = arith.select %124, %129, %130 : vector<8x16xi1>, vector<8x16xf32>
      %cst_42 = arith.constant dense<0xFF800000> : vector<8xf32>
      %132 = vector.multi_reduction <maximumf>, %131, %cst_42 [1] : vector<8x16xf32> to vector<8xf32>
      %133 = vector.shape_cast %132 : vector<8xf32> to vector<8x1xf32>
      %134 = arith.maximumf %126, %133 : vector<8x1xf32>
      %135 = vector.extract_strided_slice %125 {offsets = [0, 8], sizes = [8, 8], strides = [1, 1]} : vector<8x32xf32> to vector<8x8xf32>
      %136 = vector.extract_strided_slice %105 {offsets = [0, 8], sizes = [16, 8], strides = [1, 1]} : vector<16x32xf32> to vector<16x8xf32>
      %cst_43 = arith.constant dense<0.000000e+00> : vector<8x16xf32>
      %137 = tpu.matmul %135, %136, %cst_43 {dimension_numbers = #tpu.dot_dimension_numbers<[1], [1], [0], [0], [0, 0, 1, 0], [], []>} : vector<8x8xf32>, vector<16x8xf32>, vector<8x16xf32> -> vector<8x16xf32>
      %cst_44 = arith.constant -1.000000e+30 : f32
      %138 = vector.broadcast %cst_44 : f32 to vector<8x16xf32>
      %139 = arith.select %124, %137, %138 : vector<8x16xi1>, vector<8x16xf32>
      %cst_45 = arith.constant dense<0xFF800000> : vector<8xf32>
      %140 = vector.multi_reduction <maximumf>, %139, %cst_45 [1] : vector<8x16xf32> to vector<8xf32>
      %141 = vector.shape_cast %140 : vector<8xf32> to vector<8x1xf32>
      %142 = arith.maximumf %134, %141 : vector<8x1xf32>
      %143 = vector.extract_strided_slice %125 {offsets = [0, 16], sizes = [8, 8], strides = [1, 1]} : vector<8x32xf32> to vector<8x8xf32>
      %144 = vector.extract_strided_slice %105 {offsets = [0, 16], sizes = [16, 8], strides = [1, 1]} : vector<16x32xf32> to vector<16x8xf32>
      %cst_46 = arith.constant dense<0.000000e+00> : vector<8x16xf32>
      %145 = tpu.matmul %143, %144, %cst_46 {dimension_numbers = #tpu.dot_dimension_numbers<[1], [1], [0], [0], [0, 0, 1, 0], [], []>} : vector<8x8xf32>, vector<16x8xf32>, vector<8x16xf32> -> vector<8x16xf32>
      %cst_47 = arith.constant -1.000000e+30 : f32
      %146 = vector.broadcast %cst_47 : f32 to vector<8x16xf32>
      %147 = arith.select %124, %145, %146 : vector<8x16xi1>, vector<8x16xf32>
      %cst_48 = arith.constant dense<0xFF800000> : vector<8xf32>
      %148 = vector.multi_reduction <maximumf>, %147, %cst_48 [1] : vector<8x16xf32> to vector<8xf32>
      %149 = vector.shape_cast %148 : vector<8xf32> to vector<8x1xf32>
      %150 = arith.maximumf %142, %149 : vector<8x1xf32>
      %151 = vector.extract_strided_slice %125 {offsets = [0, 24], sizes = [8, 8], strides = [1, 1]} : vector<8x32xf32> to vector<8x8xf32>
      %152 = vector.extract_strided_slice %105 {offsets = [0, 24], sizes = [16, 8], strides = [1, 1]} : vector<16x32xf32> to vector<16x8xf32>
      %cst_49 = arith.constant dense<0.000000e+00> : vector<8x16xf32>
      %153 = tpu.matmul %151, %152, %cst_49 {dimension_numbers = #tpu.dot_dimension_numbers<[1], [1], [0], [0], [0, 0, 1, 0], [], []>} : vector<8x8xf32>, vector<16x8xf32>, vector<8x16xf32> -> vector<8x16xf32>
      %cst_50 = arith.constant -1.000000e+30 : f32
      %154 = vector.broadcast %cst_50 : f32 to vector<8x16xf32>
      %155 = arith.select %124, %153, %154 : vector<8x16xi1>, vector<8x16xf32>
      %cst_51 = arith.constant dense<0xFF800000> : vector<8xf32>
      %156 = vector.multi_reduction <maximumf>, %155, %cst_51 [1] : vector<8x16xf32> to vector<8xf32>
      %157 = vector.shape_cast %156 : vector<8xf32> to vector<8x1xf32>
      %158 = arith.maximumf %150, %157 : vector<8x1xf32>
      %159 = arith.subf %126, %158 : vector<8x1xf32>
      %160 = math.exp %159 : vector<8x1xf32>
      %161 = vector.broadcast %158 : vector<8x1xf32> to vector<8x16xf32>
      %162 = arith.subf %131, %161 : vector<8x16xf32>
      %163 = math.exp %162 : vector<8x16xf32>
      %cst_52 = arith.constant 0.000000e+00 : f32
      %164 = vector.broadcast %cst_52 : f32 to vector<8x16xf32>
      %165 = arith.select %124, %163, %164 : vector<8x16xi1>, vector<8x16xf32>
      %cst_53 = arith.constant dense<0.000000e+00> : vector<8xf32>
      %166 = vector.multi_reduction <add>, %165, %cst_53 [1] : vector<8x16xf32> to vector<8xf32>
      %167 = vector.shape_cast %166 : vector<8xf32> to vector<8x1xf32>
      %168 = arith.truncf %165 : vector<8x16xf32> to vector<8x16xbf16>
      %169 = vector.extract_strided_slice %110 {offsets = [0, 0], sizes = [16, 8], strides = [1, 1]} : vector<16x32xf32> to vector<16x8xf32>
      %170 = arith.truncf %169 : vector<16x8xf32> to vector<16x8xbf16>
      %cst_54 = arith.constant dense<0.000000e+00> : vector<8x8xf32>
      %171 = tpu.matmul %168, %170, %cst_54 {dimension_numbers = #tpu.dot_dimension_numbers<[1], [0], [0], [1], [0, 0, 1, 1], [], []>} : vector<8x16xbf16>, vector<16x8xbf16>, vector<8x8xf32> -> vector<8x8xf32>
      %172 = vector.extract_strided_slice %115 {offsets = [0, 0], sizes = [16, 1], strides = [1, 1]} : vector<16x4xf32> to vector<16x1xf32>
      %173 = vector.broadcast %172 : vector<16x1xf32> to vector<16x8xf32>
      %174 = arith.mulf %173, %116 : vector<16x8xf32>
      %175 = arith.truncf %174 : vector<16x8xf32> to vector<16x8xbf16>
      %cst_55 = arith.constant dense<0.000000e+00> : vector<8x8xf32>
      %176 = tpu.matmul %168, %175, %cst_55 {dimension_numbers = #tpu.dot_dimension_numbers<[1], [0], [0], [1], [0, 0, 1, 1], [], []>} : vector<8x16xbf16>, vector<16x8xbf16>, vector<8x8xf32> -> vector<8x8xf32>
      %177 = vector.broadcast %158 : vector<8x1xf32> to vector<8x16xf32>
      %178 = arith.subf %139, %177 : vector<8x16xf32>
      %179 = math.exp %178 : vector<8x16xf32>
      %cst_56 = arith.constant 0.000000e+00 : f32
      %180 = vector.broadcast %cst_56 : f32 to vector<8x16xf32>
      %181 = arith.select %124, %179, %180 : vector<8x16xi1>, vector<8x16xf32>
      %cst_57 = arith.constant dense<0.000000e+00> : vector<8xf32>
      %182 = vector.multi_reduction <add>, %181, %cst_57 [1] : vector<8x16xf32> to vector<8xf32>
      %183 = vector.shape_cast %182 : vector<8xf32> to vector<8x1xf32>
      %184 = arith.truncf %181 : vector<8x16xf32> to vector<8x16xbf16>
      %185 = vector.extract_strided_slice %110 {offsets = [0, 8], sizes = [16, 8], strides = [1, 1]} : vector<16x32xf32> to vector<16x8xf32>
      %186 = arith.truncf %185 : vector<16x8xf32> to vector<16x8xbf16>
      %cst_58 = arith.constant dense<0.000000e+00> : vector<8x8xf32>
      %187 = tpu.matmul %184, %186, %cst_58 {dimension_numbers = #tpu.dot_dimension_numbers<[1], [0], [0], [1], [0, 0, 1, 1], [], []>} : vector<8x16xbf16>, vector<16x8xbf16>, vector<8x8xf32> -> vector<8x8xf32>
      %188 = vector.extract_strided_slice %115 {offsets = [0, 1], sizes = [16, 1], strides = [1, 1]} : vector<16x4xf32> to vector<16x1xf32>
      %189 = vector.broadcast %188 : vector<16x1xf32> to vector<16x8xf32>
      %190 = arith.mulf %189, %116 : vector<16x8xf32>
      %191 = arith.truncf %190 : vector<16x8xf32> to vector<16x8xbf16>
      %cst_59 = arith.constant dense<0.000000e+00> : vector<8x8xf32>
      %192 = tpu.matmul %184, %191, %cst_59 {dimension_numbers = #tpu.dot_dimension_numbers<[1], [0], [0], [1], [0, 0, 1, 1], [], []>} : vector<8x16xbf16>, vector<16x8xbf16>, vector<8x8xf32> -> vector<8x8xf32>
      %193 = vector.broadcast %158 : vector<8x1xf32> to vector<8x16xf32>
      %194 = arith.subf %147, %193 : vector<8x16xf32>
      %195 = math.exp %194 : vector<8x16xf32>
      %cst_60 = arith.constant 0.000000e+00 : f32
      %196 = vector.broadcast %cst_60 : f32 to vector<8x16xf32>
      %197 = arith.select %124, %195, %196 : vector<8x16xi1>, vector<8x16xf32>
      %cst_61 = arith.constant dense<0.000000e+00> : vector<8xf32>
      %198 = vector.multi_reduction <add>, %197, %cst_61 [1] : vector<8x16xf32> to vector<8xf32>
      %199 = vector.shape_cast %198 : vector<8xf32> to vector<8x1xf32>
      %200 = arith.truncf %197 : vector<8x16xf32> to vector<8x16xbf16>
      %201 = vector.extract_strided_slice %110 {offsets = [0, 16], sizes = [16, 8], strides = [1, 1]} : vector<16x32xf32> to vector<16x8xf32>
      %202 = arith.truncf %201 : vector<16x8xf32> to vector<16x8xbf16>
      %cst_62 = arith.constant dense<0.000000e+00> : vector<8x8xf32>
      %203 = tpu.matmul %200, %202, %cst_62 {dimension_numbers = #tpu.dot_dimension_numbers<[1], [0], [0], [1], [0, 0, 1, 1], [], []>} : vector<8x16xbf16>, vector<16x8xbf16>, vector<8x8xf32> -> vector<8x8xf32>
      %204 = vector.extract_strided_slice %115 {offsets = [0, 2], sizes = [16, 1], strides = [1, 1]} : vector<16x4xf32> to vector<16x1xf32>
      %205 = vector.broadcast %204 : vector<16x1xf32> to vector<16x8xf32>
      %206 = arith.mulf %205, %116 : vector<16x8xf32>
      %207 = arith.truncf %206 : vector<16x8xf32> to vector<16x8xbf16>
      %cst_63 = arith.constant dense<0.000000e+00> : vector<8x8xf32>
      %208 = tpu.matmul %200, %207, %cst_63 {dimension_numbers = #tpu.dot_dimension_numbers<[1], [0], [0], [1], [0, 0, 1, 1], [], []>} : vector<8x16xbf16>, vector<16x8xbf16>, vector<8x8xf32> -> vector<8x8xf32>
      %209 = vector.broadcast %158 : vector<8x1xf32> to vector<8x16xf32>
      %210 = arith.subf %155, %209 : vector<8x16xf32>
      %211 = math.exp %210 : vector<8x16xf32>
      %cst_64 = arith.constant 0.000000e+00 : f32
      %212 = vector.broadcast %cst_64 : f32 to vector<8x16xf32>
      %213 = arith.select %124, %211, %212 : vector<8x16xi1>, vector<8x16xf32>
      %cst_65 = arith.constant dense<0.000000e+00> : vector<8xf32>
      %214 = vector.multi_reduction <add>, %213, %cst_65 [1] : vector<8x16xf32> to vector<8xf32>
      %215 = vector.shape_cast %214 : vector<8xf32> to vector<8x1xf32>
      %216 = arith.truncf %213 : vector<8x16xf32> to vector<8x16xbf16>
      %217 = vector.extract_strided_slice %110 {offsets = [0, 24], sizes = [16, 8], strides = [1, 1]} : vector<16x32xf32> to vector<16x8xf32>
      %218 = arith.truncf %217 : vector<16x8xf32> to vector<16x8xbf16>
      %cst_66 = arith.constant dense<0.000000e+00> : vector<8x8xf32>
      %219 = tpu.matmul %216, %218, %cst_66 {dimension_numbers = #tpu.dot_dimension_numbers<[1], [0], [0], [1], [0, 0, 1, 1], [], []>} : vector<8x16xbf16>, vector<16x8xbf16>, vector<8x8xf32> -> vector<8x8xf32>
      %220 = vector.extract_strided_slice %115 {offsets = [0, 3], sizes = [16, 1], strides = [1, 1]} : vector<16x4xf32> to vector<16x1xf32>
      %221 = vector.broadcast %220 : vector<16x1xf32> to vector<16x8xf32>
      %222 = arith.mulf %221, %116 : vector<16x8xf32>
      %223 = arith.truncf %222 : vector<16x8xf32> to vector<16x8xbf16>
      %cst_67 = arith.constant dense<0.000000e+00> : vector<8x8xf32>
      %224 = tpu.matmul %216, %223, %cst_67 {dimension_numbers = #tpu.dot_dimension_numbers<[1], [0], [0], [1], [0, 0, 1, 1], [], []>} : vector<8x16xbf16>, vector<16x8xbf16>, vector<8x8xf32> -> vector<8x8xf32>
      %c0_68 = arith.constant 0 : index
      %c0_69 = arith.constant 0 : index
      %225 = vector.load %arg19[%c0_68, %c0_69] : memref<8x1xf32, #tpu.memory_space<vmem>>, vector<8x1xf32>
      tpu.vector_store %arg19[%c0_68, %c0_69], %158 {strides = array<i32>} : memref<8x1xf32, #tpu.memory_space<vmem>>, vector<8x1xf32>,
      %c0_70 = arith.constant 0 : index
      %c0_71 = arith.constant 0 : index
      %226 = vector.load %arg20[%c0_70, %c0_71] : memref<8x4xf32, #tpu.memory_space<vmem>>, vector<8x4xf32>
      %227 = vector.broadcast %160 : vector<8x1xf32> to vector<8x4xf32>
      %228 = arith.mulf %226, %227 : vector<8x4xf32>
      %229 = tpu.concatenate %167, %183, %199, %215 in 1 : vector<8x1xf32>, vector<8x1xf32>, vector<8x1xf32>, vector<8x1xf32> -> vector<8x4xf32>
      %230 = arith.addf %228, %229 : vector<8x4xf32>
      %c0_72 = arith.constant 0 : index
      %c0_73 = arith.constant 0 : index
      %231 = vector.load %arg20[%c0_72, %c0_73] : memref<8x4xf32, #tpu.memory_space<vmem>>, vector<8x4xf32>
      tpu.vector_store %arg20[%c0_72, %c0_73], %230 {strides = array<i32>} : memref<8x4xf32, #tpu.memory_space<vmem>>, vector<8x4xf32>,
      %c0_74 = arith.constant 0 : index
      %c0_75 = arith.constant 0 : index
      %232 = vector.load %arg21[%c0_74, %c0_75] : memref<8x32xf32, #tpu.memory_space<vmem>>, vector<8x32xf32>
      %233 = vector.broadcast %160 : vector<8x1xf32> to vector<8x32xf32>
      %234 = arith.mulf %232, %233 : vector<8x32xf32>
      %235 = tpu.concatenate %171, %187, %203, %219 in 1 : vector<8x8xf32>, vector<8x8xf32>, vector<8x8xf32>, vector<8x8xf32> -> vector<8x32xf32>
      %236 = arith.addf %234, %235 : vector<8x32xf32>
      %c0_76 = arith.constant 0 : index
      %c0_77 = arith.constant 0 : index
      %237 = vector.load %arg21[%c0_76, %c0_77] : memref<8x32xf32, #tpu.memory_space<vmem>>, vector<8x32xf32>
      tpu.vector_store %arg21[%c0_76, %c0_77], %236 {strides = array<i32>} : memref<8x32xf32, #tpu.memory_space<vmem>>, vector<8x32xf32>,
      %c0_78 = arith.constant 0 : index
      %c0_79 = arith.constant 0 : index
      %238 = vector.load %arg22[%c0_78, %c0_79] : memref<8x32xf32, #tpu.memory_space<vmem>>, vector<8x32xf32>
      %239 = vector.broadcast %160 : vector<8x1xf32> to vector<8x32xf32>
      %240 = arith.mulf %238, %239 : vector<8x32xf32>
      %241 = tpu.concatenate %176, %192, %208, %224 in 1 : vector<8x8xf32>, vector<8x8xf32>, vector<8x8xf32>, vector<8x8xf32> -> vector<8x32xf32>
      %242 = arith.addf %240, %241 : vector<8x32xf32>
      %c0_80 = arith.constant 0 : index
      %c0_81 = arith.constant 0 : index
      %243 = vector.load %arg22[%c0_80, %c0_81] : memref<8x32xf32, #tpu.memory_space<vmem>>, vector<8x32xf32>
      tpu.vector_store %arg22[%c0_80, %c0_81], %242 {strides = array<i32>} : memref<8x32xf32, #tpu.memory_space<vmem>>, vector<8x32xf32>,
    } else {
    }
    %c1_i32 = arith.constant 1 : i32
    %8 = arith.cmpi eq, %arg1, %c1_i32 : i32
    %9 = arith.extui %8 : i1 to i32
    %c0_i32_2 = arith.constant 0 : i32
    %10 = arith.cmpi ne, %9, %c0_i32_2 : i32
    scf.if %10 {
      %c0 = arith.constant 0 : index
      %c0_3 = arith.constant 0 : index
      %11 = vector.load %arg20[%c0, %c0_3] : memref<8x4xf32, #tpu.memory_space<vmem>>, vector<8x4xf32>
      %cst = arith.constant 0.000000e+00 : f32
      %12 = vector.broadcast %cst : f32 to vector<8x4xf32>
      %13 = arith.cmpf ogt, %11, %12 : vector<8x4xf32>
      %cst_4 = arith.constant 1.000000e+00 : f32
      %14 = vector.broadcast %cst_4 : f32 to vector<8x4xf32>
      %15 = arith.select %13, %11, %14 : vector<8x4xi1>, vector<8x4xf32>
      %16 = tpu.reciprocal %15 {approx = true} : vector<8x4xf32> -> vector<8x4xf32>
      %c0_5 = arith.constant 0 : index
      %c0_6 = arith.constant 0 : index
      %17 = vector.load %arg21[%c0_5, %c0_6] : memref<8x32xf32, #tpu.memory_space<vmem>>, vector<8x32xf32>
      %c0_7 = arith.constant 0 : index
      %c0_8 = arith.constant 0 : index
      %18 = vector.load %arg22[%c0_7, %c0_8] : memref<8x32xf32, #tpu.memory_space<vmem>>, vector<8x32xf32>
      %cst_9 = arith.constant 0.000000e+00 : f32
      %19 = vector.broadcast %cst_9 : f32 to vector<8x8xf32>
      %20 = vector.extract_strided_slice %16 {offsets = [0, 0], sizes = [8, 1], strides = [1, 1]} : vector<8x4xf32> to vector<8x1xf32>
      %21 = vector.extract_strided_slice %17 {offsets = [0, 0], sizes = [8, 8], strides = [1, 1]} : vector<8x32xf32> to vector<8x8xf32>
      %22 = vector.broadcast %20 : vector<8x1xf32> to vector<8x8xf32>
      %23 = arith.mulf %21, %22 : vector<8x8xf32>
      %24 = vector.extract_strided_slice %18 {offsets = [0, 0], sizes = [8, 8], strides = [1, 1]} : vector<8x32xf32> to vector<8x8xf32>
      %25 = vector.broadcast %20 : vector<8x1xf32> to vector<8x8xf32>
      %26 = arith.mulf %24, %25 : vector<8x8xf32>
      %27 = arith.addf %19, %26 : vector<8x8xf32>
      %28 = vector.extract_strided_slice %16 {offsets = [0, 1], sizes = [8, 1], strides = [1, 1]} : vector<8x4xf32> to vector<8x1xf32>
      %29 = vector.extract_strided_slice %17 {offsets = [0, 8], sizes = [8, 8], strides = [1, 1]} : vector<8x32xf32> to vector<8x8xf32>
      %30 = vector.broadcast %28 : vector<8x1xf32> to vector<8x8xf32>
      %31 = arith.mulf %29, %30 : vector<8x8xf32>
      %32 = vector.extract_strided_slice %18 {offsets = [0, 8], sizes = [8, 8], strides = [1, 1]} : vector<8x32xf32> to vector<8x8xf32>
      %33 = vector.broadcast %28 : vector<8x1xf32> to vector<8x8xf32>
      %34 = arith.mulf %32, %33 : vector<8x8xf32>
      %35 = arith.addf %27, %34 : vector<8x8xf32>
      %36 = vector.extract_strided_slice %16 {offsets = [0, 2], sizes = [8, 1], strides = [1, 1]} : vector<8x4xf32> to vector<8x1xf32>
      %37 = vector.extract_strided_slice %17 {offsets = [0, 16], sizes = [8, 8], strides = [1, 1]} : vector<8x32xf32> to vector<8x8xf32>
      %38 = vector.broadcast %36 : vector<8x1xf32> to vector<8x8xf32>
      %39 = arith.mulf %37, %38 : vector<8x8xf32>
      %40 = vector.extract_strided_slice %18 {offsets = [0, 16], sizes = [8, 8], strides = [1, 1]} : vector<8x32xf32> to vector<8x8xf32>
      %41 = vector.broadcast %36 : vector<8x1xf32> to vector<8x8xf32>
      %42 = arith.mulf %40, %41 : vector<8x8xf32>
      %43 = arith.addf %35, %42 : vector<8x8xf32>
      %44 = vector.extract_strided_slice %16 {offsets = [0, 3], sizes = [8, 1], strides = [1, 1]} : vector<8x4xf32> to vector<8x1xf32>
      %45 = vector.extract_strided_slice %17 {offsets = [0, 24], sizes = [8, 8], strides = [1, 1]} : vector<8x32xf32> to vector<8x8xf32>
      %46 = vector.broadcast %44 : vector<8x1xf32> to vector<8x8xf32>
      %47 = arith.mulf %45, %46 : vector<8x8xf32>
      %48 = vector.extract_strided_slice %18 {offsets = [0, 24], sizes = [8, 8], strides = [1, 1]} : vector<8x32xf32> to vector<8x8xf32>
      %49 = vector.broadcast %44 : vector<8x1xf32> to vector<8x8xf32>
      %50 = arith.mulf %48, %49 : vector<8x8xf32>
      %51 = arith.addf %43, %50 : vector<8x8xf32>
      %52 = tpu.concatenate %23, %31, %39, %47 in 1 : vector<8x8xf32>, vector<8x8xf32>, vector<8x8xf32>, vector<8x8xf32> -> vector<8x32xf32>
      %c0_10 = arith.constant 0 : index
      %c0_11 = arith.constant 0 : index
      %53 = vector.load %arg4[%c0_10, %c0_11] : memref<8x32xf32, #tpu.memory_space<vmem>>, vector<8x32xf32>
      %c0_12 = arith.constant 0 : index
      %c0_13 = arith.constant 0 : index
      %54 = vector.load %arg14[%c0_12, %c0_13] : memref<64x32xf32, #tpu.memory_space<vmem>>, vector<64x32xf32>
      %c0_14 = arith.constant 0 : index
      %c0_15 = arith.constant 0 : index
      %55 = vector.load %arg16[%c0_14, %c0_15] : memref<4x32xf32, #tpu.memory_space<vmem>>, vector<4x32xf32>
      %56 = vector.extract_strided_slice %54 {offsets = [0, 0], sizes = [32, 32], strides = [1, 1]} : vector<64x32xf32> to vector<32x32xf32>
      %cst_16 = arith.constant dense<0.000000e+00> : vector<8x32xf32>
      %57 = tpu.matmul %52, %56, %cst_16 {dimension_numbers = #tpu.dot_dimension_numbers<[1], [0], [0], [1], [0, 0, 1, 1], [], []>} : vector<8x32xf32>, vector<32x32xf32>, vector<8x32xf32> -> vector<8x32xf32>
      %c0_17 = arith.constant 0 : index
      %c0_18 = arith.constant 0 : index
      %58 = vector.load %arg5[%c0_17, %c0_18] : memref<8x32xf32, #tpu.memory_space<vmem>>, vector<8x32xf32>
      %59 = vector.extract_strided_slice %54 {offsets = [32, 0], sizes = [32, 32], strides = [1, 1]} : vector<64x32xf32> to vector<32x32xf32>
      %cst_19 = arith.constant dense<0.000000e+00> : vector<8x32xf32>
      %60 = tpu.matmul %58, %59, %cst_19 {dimension_numbers = #tpu.dot_dimension_numbers<[1], [0], [0], [1], [0, 0, 1, 1], [], []>} : vector<8x32xf32>, vector<32x32xf32>, vector<8x32xf32> -> vector<8x32xf32>
      %61 = arith.addf %57, %60 : vector<8x32xf32>
      %62 = vector.extract_strided_slice %55 {offsets = [0, 0], sizes = [1, 32], strides = [1, 1]} : vector<4x32xf32> to vector<1x32xf32>
      %63 = vector.broadcast %62 : vector<1x32xf32> to vector<8x32xf32>
      %64 = arith.addf %61, %63 : vector<8x32xf32>
      %65 = vector.extract_strided_slice %55 {offsets = [1, 0], sizes = [1, 32], strides = [1, 1]} : vector<4x32xf32> to vector<1x32xf32>
      %66 = vector.extract_strided_slice %55 {offsets = [2, 0], sizes = [1, 32], strides = [1, 1]} : vector<4x32xf32> to vector<1x32xf32>
      %cst_20 = arith.constant dense<0.000000e+00> : vector<8xf32>
      %67 = vector.multi_reduction <add>, %64, %cst_20 [1] : vector<8x32xf32> to vector<8xf32>
      %68 = vector.shape_cast %67 : vector<8xf32> to vector<8x1xf32>
      %cst_21 = arith.constant 3.200000e+01 : f32
      %69 = vector.broadcast %cst_21 : f32 to vector<8x1xf32>
      %70 = arith.divf %68, %69 : vector<8x1xf32>
      %71 = vector.broadcast %70 : vector<8x1xf32> to vector<8x32xf32>
      %72 = arith.subf %64, %71 : vector<8x32xf32>
      %73 = arith.mulf %72, %72 : vector<8x32xf32>
      %cst_22 = arith.constant dense<0.000000e+00> : vector<8xf32>
      %74 = vector.multi_reduction <add>, %73, %cst_22 [1] : vector<8x32xf32> to vector<8xf32>
      %75 = vector.shape_cast %74 : vector<8xf32> to vector<8x1xf32>
      %cst_23 = arith.constant 3.200000e+01 : f32
      %76 = vector.broadcast %cst_23 : f32 to vector<8x1xf32>
      %77 = arith.divf %75, %76 : vector<8x1xf32>
      %78 = vector.broadcast %70 : vector<8x1xf32> to vector<8x32xf32>
      %79 = arith.subf %64, %78 : vector<8x32xf32>
      %cst_24 = arith.constant 9.99999974E-6 : f32
      %80 = vector.broadcast %cst_24 : f32 to vector<8x1xf32>
      %81 = arith.addf %77, %80 : vector<8x1xf32>
      %82 = math.rsqrt %81 : vector<8x1xf32>
      %83 = vector.broadcast %82 : vector<8x1xf32> to vector<8x32xf32>
      %84 = arith.mulf %79, %83 : vector<8x32xf32>
      %85 = vector.broadcast %65 : vector<1x32xf32> to vector<8x32xf32>
      %86 = arith.mulf %84, %85 : vector<8x32xf32>
      %87 = vector.broadcast %66 : vector<1x32xf32> to vector<8x32xf32>
      %88 = arith.addf %86, %87 : vector<8x32xf32>
      %cst_25 = arith.constant 0.000000e+00 : f32
      %89 = vector.broadcast %cst_25 : f32 to vector<8x32xf32>
      %90 = arith.maximumf %88, %89 : vector<8x32xf32>
      %c0_26 = arith.constant 0 : index
      %c0_27 = arith.constant 0 : index
      %91 = vector.load %arg15[%c0_26, %c0_27] : memref<32x32xf32, #tpu.memory_space<vmem>>, vector<32x32xf32>
      %cst_28 = arith.constant dense<0.000000e+00> : vector<8x32xf32>
      %92 = tpu.matmul %90, %91, %cst_28 {dimension_numbers = #tpu.dot_dimension_numbers<[1], [0], [0], [1], [0, 0, 1, 1], [], []>} : vector<8x32xf32>, vector<32x32xf32>, vector<8x32xf32> -> vector<8x32xf32>
      %93 = vector.extract_strided_slice %55 {offsets = [3, 0], sizes = [1, 32], strides = [1, 1]} : vector<4x32xf32> to vector<1x32xf32>
      %94 = vector.broadcast %93 : vector<1x32xf32> to vector<8x32xf32>
      %95 = arith.addf %92, %94 : vector<8x32xf32>
      %96 = arith.addf %95, %53 : vector<8x32xf32>
      %cst_29 = arith.constant 0.000000e+00 : f32
      %97 = vector.broadcast %cst_29 : f32 to vector<8x88xf32>
      %98 = tpu.concatenate %96, %51, %97 in 1 : vector<8x32xf32>, vector<8x8xf32>, vector<8x88xf32> -> vector<8x128xf32>
      %c0_30 = arith.constant 0 : index
      %c0_31 = arith.constant 0 : index
      %99 = vector.load %arg17[%c0_30, %c0_31] : memref<8x128xf32, #tpu.memory_space<vmem>>, vector<8x128xf32>
      tpu.vector_store %arg17[%c0_30, %c0_31], %98 {strides = array<i32>} : memref<8x128xf32, #tpu.memory_space<vmem>>, vector<8x128xf32>,
    } else {
    }
    return
  }
  func.func @transform_0(%arg0: i32, %arg1: i32, %arg2: memref<3xi32, #tpu.memory_space<smem>>, %arg3: memref<3xi32, #tpu.memory_space<smem>>) -> (i32, i32) {
    %c0_i32 = arith.constant 0 : i32
    %c0_i32_0 = arith.constant 0 : i32
    return %arg0, %c0_i32 : i32, i32
  }
  func.func @transform_1(%arg0: i32, %arg1: i32, %arg2: memref<3xi32, #tpu.memory_space<smem>>, %arg3: memref<3xi32, #tpu.memory_space<smem>>) -> (i32, i32) {
    %c0_i32 = arith.constant 0 : i32
    %c0_i32_0 = arith.constant 0 : i32
    return %arg0, %c0_i32 : i32, i32
  }
  func.func @transform_2(%arg0: i32, %arg1: i32, %arg2: memref<3xi32, #tpu.memory_space<smem>>, %arg3: memref<3xi32, #tpu.memory_space<smem>>) -> (i32, i32) {
    %0 = arith.index_cast %arg0 : i32 to index
    %1 = memref.load %arg3[%0] : memref<3xi32, #tpu.memory_space<smem>>
    %c1_i32 = arith.constant 1 : i32
    %2 = arith.subi %1, %c1_i32 : i32
    %c0_i32 = arith.constant 0 : i32
    %3 = arith.maxsi %2, %c0_i32 : i32
    %4 = arith.minsi %arg1, %3 : i32
    %5 = arith.index_cast %arg0 : i32 to index
    %6 = memref.load %arg2[%5] : memref<3xi32, #tpu.memory_space<smem>>
    %7 = arith.addi %6, %4 : i32
    %c0_i32_0 = arith.constant 0 : i32
    %c0_i32_1 = arith.constant 0 : i32
    return %7, %c0_i32_0 : i32, i32
  }
  func.func @transform_3(%arg0: i32, %arg1: i32, %arg2: memref<3xi32, #tpu.memory_space<smem>>, %arg3: memref<3xi32, #tpu.memory_space<smem>>) -> (i32, i32, i32) {
    %0 = arith.index_cast %arg0 : i32 to index
    %1 = memref.load %arg3[%0] : memref<3xi32, #tpu.memory_space<smem>>
    %c1_i32 = arith.constant 1 : i32
    %2 = arith.subi %1, %c1_i32 : i32
    %c0_i32 = arith.constant 0 : i32
    %3 = arith.maxsi %2, %c0_i32 : i32
    %4 = arith.minsi %arg1, %3 : i32
    %5 = arith.index_cast %arg0 : i32 to index
    %6 = memref.load %arg2[%5] : memref<3xi32, #tpu.memory_space<smem>>
    %7 = arith.addi %6, %4 : i32
    %c0_i32_0 = arith.constant 0 : i32
    %c0_i32_1 = arith.constant 0 : i32
    %c0_i32_2 = arith.constant 0 : i32
    return %7, %c0_i32_0, %c0_i32_1 : i32, i32, i32
  }
  func.func @transform_4(%arg0: i32, %arg1: i32, %arg2: memref<3xi32, #tpu.memory_space<smem>>, %arg3: memref<3xi32, #tpu.memory_space<smem>>) -> (i32, i32) {
    %c0_i32 = arith.constant 0 : i32
    %c0_i32_0 = arith.constant 0 : i32
    %c0_i32_1 = arith.constant 0 : i32
    return %c0_i32, %c0_i32_0 : i32, i32
  }
  func.func @transform_5(%arg0: i32, %arg1: i32, %arg2: memref<3xi32, #tpu.memory_space<smem>>, %arg3: memref<3xi32, #tpu.memory_space<smem>>) -> (i32, i32) {
    %c0_i32 = arith.constant 0 : i32
    %c0_i32_0 = arith.constant 0 : i32
    %c0_i32_1 = arith.constant 0 : i32
    return %c0_i32, %c0_i32_0 : i32, i32
  }
  func.func @transform_6(%arg0: i32, %arg1: i32, %arg2: memref<3xi32, #tpu.memory_space<smem>>, %arg3: memref<3xi32, #tpu.memory_space<smem>>) -> (i32, i32) {
    %c0_i32 = arith.constant 0 : i32
    %c0_i32_0 = arith.constant 0 : i32
    %c0_i32_1 = arith.constant 0 : i32
    return %c0_i32, %c0_i32_0 : i32, i32
  }
  func.func @transform_7(%arg0: i32, %arg1: i32, %arg2: memref<3xi32, #tpu.memory_space<smem>>, %arg3: memref<3xi32, #tpu.memory_space<smem>>) -> (i32, i32) {
    %c0_i32 = arith.constant 0 : i32
    %c0_i32_0 = arith.constant 0 : i32
    %c0_i32_1 = arith.constant 0 : i32
    return %c0_i32, %c0_i32_0 : i32, i32
  }
  func.func @transform_8(%arg0: i32, %arg1: i32, %arg2: memref<3xi32, #tpu.memory_space<smem>>, %arg3: memref<3xi32, #tpu.memory_space<smem>>) -> (i32, i32) {
    %c0_i32 = arith.constant 0 : i32
    %c0_i32_0 = arith.constant 0 : i32
    %c0_i32_1 = arith.constant 0 : i32
    return %c0_i32, %c0_i32_0 : i32, i32
  }
  func.func @transform_9(%arg0: i32, %arg1: i32, %arg2: memref<3xi32, #tpu.memory_space<smem>>, %arg3: memref<3xi32, #tpu.memory_space<smem>>) -> (i32, i32) {
    %c0_i32 = arith.constant 0 : i32
    %c0_i32_0 = arith.constant 0 : i32
    %c0_i32_1 = arith.constant 0 : i32
    return %c0_i32, %c0_i32_0 : i32, i32
  }
  func.func @transform_10(%arg0: i32, %arg1: i32, %arg2: memref<3xi32, #tpu.memory_space<smem>>, %arg3: memref<3xi32, #tpu.memory_space<smem>>) -> (i32, i32) {
    %c0_i32 = arith.constant 0 : i32
    %c0_i32_0 = arith.constant 0 : i32
    %c0_i32_1 = arith.constant 0 : i32
    return %c0_i32, %c0_i32_0 : i32, i32
  }
  func.func @transform_11(%arg0: i32, %arg1: i32, %arg2: memref<3xi32, #tpu.memory_space<smem>>, %arg3: memref<3xi32, #tpu.memory_space<smem>>) -> (i32, i32) {
    %c0_i32 = arith.constant 0 : i32
    %c0_i32_0 = arith.constant 0 : i32
    %c0_i32_1 = arith.constant 0 : i32
    return %c0_i32, %c0_i32_0 : i32, i32
  }
  func.func @transform_12(%arg0: i32, %arg1: i32, %arg2: memref<3xi32, #tpu.memory_space<smem>>, %arg3: memref<3xi32, #tpu.memory_space<smem>>) -> (i32, i32) {
    %c0_i32 = arith.constant 0 : i32
    %c0_i32_0 = arith.constant 0 : i32
    %c0_i32_1 = arith.constant 0 : i32
    return %c0_i32, %c0_i32_0 : i32, i32
  }
  func.func @transform_13(%arg0: i32, %arg1: i32, %arg2: memref<3xi32, #tpu.memory_space<smem>>, %arg3: memref<3xi32, #tpu.memory_space<smem>>) -> (i32, i32) {
    %c0_i32 = arith.constant 0 : i32
    %c0_i32_0 = arith.constant 0 : i32
    return %arg0, %c0_i32 : i32, i32
  }
}

</mosaic_0001>

<llo_original>
// kernel: _lambda_.1
$region0: #{_lambda_.1}
  #allocation0 [shape = 'u32[]', space=smem, size = 0x4, offset = 0x4, fixed_abs, tag = 'smem constant byte address 0x4 - core index']
  #allocation1 [shape = 'u32[144,128]{1,0:T(1,128)}', space=vmem, size = 0x12000, scoped, tag = 'internal scratch']
  #allocation2 [shape = 'f32[8,32]{1,0:T(8,128)}', space=vmem, size = 0x1000, scoped, tag = 'scratch operand']
  #allocation3 [shape = 'f32[8,1]{1,0:T(8,128)}', space=vmem, size = 0x1000, scoped, tag = 'scratch operand']
  #allocation4 [shape = 'f32[8,4]{1,0:T(8,128)}', space=vmem, size = 0x1000, scoped, tag = 'scratch operand']
  #allocation5 [shape = 'f32[8,32]{1,0:T(8,128)}', space=vmem, size = 0x1000, scoped, tag = 'scratch operand']
  #allocation6 [shape = 'f32[8,32]{1,0:T(8,128)}', space=vmem, size = 0x1000, scoped, tag = 'scratch operand']
  #allocation7 [shape = 's32[1]{0}', space=sflag, size = 0x4, scoped, tag = 'scoped memory for _lambda_.1']
  #allocation8 [shape = 'u8[512]{0}', space=smem, size = 0x200, scoped, tag = 'prefetched SMEM operand 0']
  #allocation9 [shape = 'u8[512]{0}', space=smem, size = 0x200, scoped, tag = 'prefetched SMEM operand 1']
  %s0 = inlined_call_operand.vmem [shape: s32[3], index: 0, kind: input, shape index: {}]
  %s1 = inlined_call_operand.vmem [shape: s32[3], index: 1, kind: input, shape index: {}]
  %s2 = inlined_call_operand.vmem [shape: f32[24,32], index: 2, kind: input, shape index: {}]
  %s3 = inlined_call_operand.vmem [shape: f32[24,32], index: 3, kind: input, shape index: {}]
  %s4 = inlined_call_operand.vmem [shape: f32[48,96], index: 4, kind: input, shape index: {}]
  %s5 = inlined_call_operand.vmem [shape: s32[3,1,16], index: 5, kind: input, shape index: {}]
  %s6 = inlined_call_operand.vmem [shape: f32[96,96], index: 6, kind: input, shape index: {}]
  %s7 = inlined_call_operand.vmem [shape: f32[3,96], index: 7, kind: input, shape index: {}]
  %s8 = inlined_call_operand.vmem [shape: f32[32,68], index: 8, kind: input, shape index: {}]
  %s9 = inlined_call_operand.vmem [shape: f32[1,68], index: 9, kind: input, shape index: {}]
  %s10 = inlined_call_operand.vmem [shape: f32[32,64], index: 10, kind: input, shape index: {}]
  %s11 = inlined_call_operand.vmem [shape: f32[4,32], index: 11, kind: input, shape index: {}]
  %s12 = inlined_call_operand.vmem [shape: f32[64,32], index: 12, kind: input, shape index: {}]
  %s13 = inlined_call_operand.vmem [shape: f32[32,32], index: 13, kind: input, shape index: {}]
  %s14 = inlined_call_operand.vmem [shape: f32[4,32], index: 14, kind: input, shape index: {}]
  %s15 = inlined_call_operand.vmem [shape: f32[24,128], index: 15, kind: output, shape index: {}]
  %s16 = sld [smem:[#allocation0]]
  $region97: #{_lambda_.1} parent=0
    _
  %s18 = ssub.s32 1, %s16
  %s19 = scalar_select 0, %s18, %s16
  %s20 = sshll.u32 %s0, 4
  %s21 = int_to_ptr.vmem [resolvable:$true] %s20
  %23 = dma.vmem_to_smem %s21, 16, [#allocation8], [#allocation7]
  %s24 = sshll.u32 %s1, 4
  %s25 = int_to_ptr.vmem [resolvable:$true] %s24
  %27 = dma.vmem_to_smem %s25, 16, [#allocation9], [#allocation7]
  %28 = dma.done [#allocation7], 32
  %29 = sfence
  loop: start=0, step=1, limit=8
  $region2: #{_lambda_.1} parent=0 // loop_pre_header
    _
  $region3: #{_lambda_.1} parent=0 // loop_header
    %s31 = sphi 0, %s35
    %p32 = scmp.ge.s32.totalorder %s31, 8
    %s38 = sphi 0, %s50
    %s39 = sphi 0, %s46
    %s40 = sphi 0, %s38
    %s41 = sphi 0, %s39
    %s42 = sphi 0, %s40
    %s43 = sphi 0, %s41
    %s53 = sphi 0, %s55
    %s56 = sphi 0, %s53
    %s57 = sphi 0, %s56
    %s73 = sphi 0, %s57
    %s79 = sphi 0, %s81
    %s82 = sphi 0, %s79
    %s83 = sphi 0, %s82
    %s99 = sphi 0, %s83
    %s121 = sphi 0, %s123
    %s124 = sphi 0, %s121
    %s125 = sphi 0, %s124
    %s141 = sphi 0, %s125
    %s163 = sphi 0, %s165
    %s166 = sphi 0, %s163
    %s167 = sphi 0, %s166
    %s183 = sphi 0, %s167
    %s187 = sphi 0, %s187
    %s189 = sphi 0, %s187
    %s190 = sphi 0, %s189
    %s204 = sphi 0, %s190
    %s208 = sphi 0, %s208
    %s210 = sphi 0, %s208
    %s211 = sphi 0, %s210
    %s225 = sphi 0, %s211
    %s229 = sphi 0, %s229
    %s231 = sphi 0, %s229
    %s232 = sphi 0, %s231
    %s246 = sphi 0, %s232
    %s250 = sphi 0, %s250
    %s252 = sphi 0, %s250
    %s253 = sphi 0, %s252
    %s267 = sphi 0, %s253
    %s271 = sphi 0, %s271
    %s273 = sphi 0, %s271
    %s274 = sphi 0, %s273
    %s288 = sphi 0, %s274
    %s292 = sphi 0, %s292
    %s294 = sphi 0, %s292
    %s295 = sphi 0, %s294
    %s309 = sphi 0, %s295
    %s313 = sphi 0, %s313
    %s315 = sphi 0, %s313
    %s316 = sphi 0, %s315
    %s330 = sphi 0, %s316
    %s334 = sphi 0, %s334
    %s336 = sphi 0, %s334
    %s337 = sphi 0, %s336
    %s351 = sphi 0, %s337
    %s355 = sphi 0, %s355
    %s357 = sphi 0, %s355
    %s358 = sphi 0, %s357
    %s372 = sphi 0, %s358
    %s378 = sphi 0, %s380
    %s381 = sphi 0, %s378
    %s382 = sphi 0, %s381
    %s398 = sphi 0, %s382
  $region4: #{_lambda_.1} parent=0 // loop_header_branch
    %34 = sbr.rel (%p32) target = $region8
  $region5: #{_lambda_.1} parent=0 // loop_body
    %s36 = ssub.s32 %s31, 1
    %s37 = ssub.s32 %s31, 2
    %s44 = sadd.s32 1, %s39
    %p45 = scmp.ge.s32.totalorder %s44, 2
    %s46 = scalar_select %p45, 0, %s44
    %s47 = sadd.s32 1, %s38
    %s48 = scalar_select %p45, %s47, %s38
    %p49 = scmp.ge.s32.totalorder %s48, 3
    %s50 = scalar_select %p49, 0, %s48
    %s51 = ssub.s32 %s38, %s50
    %p52 = scmp.eq.s32.totalorder %s51, 0
    %s54 = sadd.s32 %s53, 1
    %s55 = scalar_select %p52, %s53, %s54
    %p58 = pneg %p52
    %p59 = scmp.eq.s32.totalorder %s31, 5
    %p60 = por %p58, %p59
    %p61 = scmp.ne.s32.totalorder %s53, %s56
    %p62 = scmp.eq.s32.totalorder %s31, 0
    %p63 = por %p61, %p62
    %p64 = scmp.ne.s32.totalorder %s53, %s56
    %p65 = scmp.eq.s32.totalorder %s36, 5
    %p66 = por %p64, %p65
    %p67 = scmp.ne.s32.totalorder %s56, %s57
    %p68 = scmp.eq.s32.totalorder %s36, 0
    %p69 = por %p67, %p68
    %p70 = scmp.ne.s32.totalorder %s56, %s57
    %p71 = scmp.eq.s32.totalorder %s37, 5
    %p72 = por %p70, %p71
    %p74 = scmp.ne.s32.totalorder %s57, %s73
    %p75 = scmp.eq.s32.totalorder %s37, 0
    %p76 = por %p74, %p75
    %s77 = ssub.s32 %s38, %s50
    %p78 = scmp.eq.s32.totalorder %s77, 0
    %s80 = sadd.s32 %s79, 1
    %s81 = scalar_select %p78, %s79, %s80
    %p84 = pneg %p78
    %p85 = scmp.eq.s32.totalorder %s31, 5
    %p86 = por %p84, %p85
    %p87 = scmp.ne.s32.totalorder %s79, %s82
    %p88 = scmp.eq.s32.totalorder %s31, 0
    %p89 = por %p87, %p88
    %p90 = scmp.ne.s32.totalorder %s79, %s82
    %p91 = scmp.eq.s32.totalorder %s36, 5
    %p92 = por %p90, %p91
    %p93 = scmp.ne.s32.totalorder %s82, %s83
    %p94 = scmp.eq.s32.totalorder %s36, 0
    %p95 = por %p93, %p94
    %p96 = scmp.ne.s32.totalorder %s82, %s83
    %p97 = scmp.eq.s32.totalorder %s37, 5
    %p98 = por %p96, %p97
    %p100 = scmp.ne.s32.totalorder %s83, %s99
    %p101 = scmp.eq.s32.totalorder %s37, 0
    %p102 = por %p100, %p101
    %s103 = sld [smem:[#allocation9 + %s38]]
    %s104 = ssub.s32 %s103, 1
    %p105 = scmp.gt.s32.totalorder %s104, 0
    %s106 = scalar_select %p105, %s104, 0
    %p107 = scmp.lt.s32.totalorder %s39, %s106
    %s108 = scalar_select %p107, %s39, %s106
    %s109 = sld [smem:[#allocation8 + %s38]]
    %s110 = sadd.s32 %s109, %s108
    %s111 = sld [smem:[#allocation9 + %s50]]
    %s112 = ssub.s32 %s111, 1
    %p113 = scmp.gt.s32.totalorder %s112, 0
    %s114 = scalar_select %p113, %s112, 0
    %p115 = scmp.lt.s32.totalorder %s46, %s114
    %s116 = scalar_select %p115, %s46, %s114
    %s117 = sld [smem:[#allocation8 + %s50]]
    %s118 = sadd.s32 %s117, %s116
    %s119 = ssub.s32 %s110, %s118
    %p120 = scmp.eq.s32.totalorder %s119, 0
    %s122 = sadd.s32 %s121, 1
    %s123 = scalar_select %p120, %s121, %s122
    %p126 = pneg %p120
    %p127 = scmp.eq.s32.totalorder %s31, 5
    %p128 = por %p126, %p127
    %p129 = scmp.ne.s32.totalorder %s121, %s124
    %p130 = scmp.eq.s32.totalorder %s31, 0
    %p131 = por %p129, %p130
    %p132 = scmp.ne.s32.totalorder %s121, %s124
    %p133 = scmp.eq.s32.totalorder %s36, 5
    %p134 = por %p132, %p133
    %p135 = scmp.ne.s32.totalorder %s124, %s125
    %p136 = scmp.eq.s32.totalorder %s36, 0
    %p137 = por %p135, %p136
    %p138 = scmp.ne.s32.totalorder %s124, %s125
    %p139 = scmp.eq.s32.totalorder %s37, 5
    %p140 = por %p138, %p139
    %p142 = scmp.ne.s32.totalorder %s125, %s141
    %p143 = scmp.eq.s32.totalorder %s37, 0
    %p144 = por %p142, %p143
    %s145 = sld [smem:[#allocation9 + %s38]]
    %s146 = ssub.s32 %s145, 1
    %p147 = scmp.gt.s32.totalorder %s146, 0
    %s148 = scalar_select %p147, %s146, 0
    %p149 = scmp.lt.s32.totalorder %s39, %s148
    %s150 = scalar_select %p149, %s39, %s148
    %s151 = sld [smem:[#allocation8 + %s38]]
    %s152 = sadd.s32 %s151, %s150
    %s153 = sld [smem:[#allocation9 + %s50]]
    %s154 = ssub.s32 %s153, 1
    %p155 = scmp.gt.s32.totalorder %s154, 0
    %s156 = scalar_select %p155, %s154, 0
    %p157 = scmp.lt.s32.totalorder %s46, %s156
    %s158 = scalar_select %p157, %s46, %s156
    %s159 = sld [smem:[#allocation8 + %s50]]
    %s160 = sadd.s32 %s159, %s158
    %s161 = ssub.s32 %s152, %s160
    %p162 = scmp.eq.s32.totalorder %s161, 0
    %s164 = sadd.s32 %s163, 1
    %s165 = scalar_select %p162, %s163, %s164
    %p168 = pneg %p162
    %p169 = scmp.eq.s32.totalorder %s31, 5
    %p170 = por %p168, %p169
    %p171 = scmp.ne.s32.totalorder %s163, %s166
    %p172 = scmp.eq.s32.totalorder %s31, 0
    %p173 = por %p171, %p172
    %p174 = scmp.ne.s32.totalorder %s163, %s166
    %p175 = scmp.eq.s32.totalorder %s36, 5
    %p176 = por %p174, %p175
    %p177 = scmp.ne.s32.totalorder %s166, %s167
    %p178 = scmp.eq.s32.totalorder %s36, 0
    %p179 = por %p177, %p178
    %p180 = scmp.ne.s32.totalorder %s166, %s167
    %p181 = scmp.eq.s32.totalorder %s37, 5
    %p182 = por %p180, %p181
    %p184 = scmp.ne.s32.totalorder %s167, %s183
    %p185 = scmp.eq.s32.totalorder %s37, 0
    %p186 = por %p184, %p185
    %s188 = sadd.s32 %s187, 1
    %p191 = scmp.eq.s32.totalorder %s31, 5
    %p192 = scmp.ne.s32.totalorder %s187, %s189
    %p193 = scmp.eq.s32.totalorder %s31, 0
    %p194 = por %p192, %p193
    %p195 = scmp.ne.s32.totalorder %s187, %s189
    %p196 = scmp.eq.s32.totalorder %s36, 5
    %p197 = por %p195, %p196
    %p198 = scmp.ne.s32.totalorder %s189, %s190
    %p199 = scmp.eq.s32.totalorder %s36, 0
    %p200 = por %p198, %p199
    %p201 = scmp.ne.s32.totalorder %s189, %s190
    %p202 = scmp.eq.s32.totalorder %s37, 5
    %p203 = por %p201, %p202
    %p205 = scmp.ne.s32.totalorder %s190, %s204
    %p206 = scmp.eq.s32.totalorder %s37, 0
    %p207 = por %p205, %p206
    %s209 = sadd.s32 %s208, 1
    %p212 = scmp.eq.s32.totalorder %s31, 5
    %p213 = scmp.ne.s32.totalorder %s208, %s210
    %p214 = scmp.eq.s32.totalorder %s31, 0
    %p215 = por %p213, %p214
    %p216 = scmp.ne.s32.totalorder %s208, %s210
    %p217 = scmp.eq.s32.totalorder %s36, 5
    %p218 = por %p216, %p217
    %p219 = scmp.ne.s32.totalorder %s210, %s211
    %p220 = scmp.eq.s32.totalorder %s36, 0
    %p221 = por %p219, %p220
    %p222 = scmp.ne.s32.totalorder %s210, %s211
    %p223 = scmp.eq.s32.totalorder %s37, 5
    %p224 = por %p222, %p223
    %p226 = scmp.ne.s32.totalorder %s211, %s225
    %p227 = scmp.eq.s32.totalorder %s37, 0
    %p228 = por %p226, %p227
    %s230 = sadd.s32 %s229, 1
    %p233 = scmp.eq.s32.totalorder %s31, 5
    %p234 = scmp.ne.s32.totalorder %s229, %s231
    %p235 = scmp.eq.s32.totalorder %s31, 0
    %p236 = por %p234, %p235
    %p237 = scmp.ne.s32.totalorder %s229, %s231
    %p238 = scmp.eq.s32.totalorder %s36, 5
    %p239 = por %p237, %p238
    %p240 = scmp.ne.s32.totalorder %s231, %s232
    %p241 = scmp.eq.s32.totalorder %s36, 0
    %p242 = por %p240, %p241
    %p243 = scmp.ne.s32.totalorder %s231, %s232
    %p244 = scmp.eq.s32.totalorder %s37, 5
    %p245 = por %p243, %p244
    %p247 = scmp.ne.s32.totalorder %s232, %s246
    %p248 = scmp.eq.s32.totalorder %s37, 0
    %p249 = por %p247, %p248
    %s251 = sadd.s32 %s250, 1
    %p254 = scmp.eq.s32.totalorder %s31, 5
    %p255 = scmp.ne.s32.totalorder %s250, %s252
    %p256 = scmp.eq.s32.totalorder %s31, 0
    %p257 = por %p255, %p256
    %p258 = scmp.ne.s32.totalorder %s250, %s252
    %p259 = scmp.eq.s32.totalorder %s36, 5
    %p260 = por %p258, %p259
    %p261 = scmp.ne.s32.totalorder %s252, %s253
    %p262 = scmp.eq.s32.totalorder %s36, 0
    %p263 = por %p261, %p262
    %p264 = scmp.ne.s32.totalorder %s252, %s253
    %p265 = scmp.eq.s32.totalorder %s37, 5
    %p266 = por %p264, %p265
    %p268 = scmp.ne.s32.totalorder %s253, %s267
    %p269 = scmp.eq.s32.totalorder %s37, 0
    %p270 = por %p268, %p269
    %s272 = sadd.s32 %s271, 1
    %p275 = scmp.eq.s32.totalorder %s31, 5
    %p276 = scmp.ne.s32.totalorder %s271, %s273
    %p277 = scmp.eq.s32.totalorder %s31, 0
    %p278 = por %p276, %p277
    %p279 = scmp.ne.s32.totalorder %s271, %s273
    %p280 = scmp.eq.s32.totalorder %s36, 5
    %p281 = por %p279, %p280
    %p282 = scmp.ne.s32.totalorder %s273, %s274
    %p283 = scmp.eq.s32.totalorder %s36, 0
    %p284 = por %p282, %p283
    %p285 = scmp.ne.s32.totalorder %s273, %s274
    %p286 = scmp.eq.s32.totalorder %s37, 5
    %p287 = por %p285, %p286
    %p289 = scmp.ne.s32.totalorder %s274, %s288
    %p290 = scmp.eq.s32.totalorder %s37, 0
    %p291 = por %p289, %p290
    %s293 = sadd.s32 %s292, 1
    %p296 = scmp.eq.s32.totalorder %s31, 5
    %p297 = scmp.ne.s32.totalorder %s292, %s294
    %p298 = scmp.eq.s32.totalorder %s31, 0
    %p299 = por %p297, %p298
    %p300 = scmp.ne.s32.totalorder %s292, %s294
    %p301 = scmp.eq.s32.totalorder %s36, 5
    %p302 = por %p300, %p301
    %p303 = scmp.ne.s32.totalorder %s294, %s295
    %p304 = scmp.eq.s32.totalorder %s36, 0
    %p305 = por %p303, %p304
    %p306 = scmp.ne.s32.totalorder %s294, %s295
    %p307 = scmp.eq.s32.totalorder %s37, 5
    %p308 = por %p306, %p307
    %p310 = scmp.ne.s32.totalorder %s295, %s309
    %p311 = scmp.eq.s32.totalorder %s37, 0
    %p312 = por %p310, %p311
    %s314 = sadd.s32 %s313, 1
    %p317 = scmp.eq.s32.totalorder %s31, 5
    %p318 = scmp.ne.s32.totalorder %s313, %s315
    %p319 = scmp.eq.s32.totalorder %s31, 0
    %p320 = por %p318, %p319
    %p321 = scmp.ne.s32.totalorder %s313, %s315
    %p322 = scmp.eq.s32.totalorder %s36, 5
    %p323 = por %p321, %p322
    %p324 = scmp.ne.s32.totalorder %s315, %s316
    %p325 = scmp.eq.s32.totalorder %s36, 0
    %p326 = por %p324, %p325
    %p327 = scmp.ne.s32.totalorder %s315, %s316
    %p328 = scmp.eq.s32.totalorder %s37, 5
    %p329 = por %p327, %p328
    %p331 = scmp.ne.s32.totalorder %s316, %s330
    %p332 = scmp.eq.s32.totalorder %s37, 0
    %p333 = por %p331, %p332
    %s335 = sadd.s32 %s334, 1
    %p338 = scmp.eq.s32.totalorder %s31, 5
    %p339 = scmp.ne.s32.totalorder %s334, %s336
    %p340 = scmp.eq.s32.totalorder %s31, 0
    %p341 = por %p339, %p340
    %p342 = scmp.ne.s32.totalorder %s334, %s336
    %p343 = scmp.eq.s32.totalorder %s36, 5
    %p344 = por %p342, %p343
    %p345 = scmp.ne.s32.totalorder %s336, %s337
    %p346 = scmp.eq.s32.totalorder %s36, 0
    %p347 = por %p345, %p346
    %p348 = scmp.ne.s32.totalorder %s336, %s337
    %p349 = scmp.eq.s32.totalorder %s37, 5
    %p350 = por %p348, %p349
    %p352 = scmp.ne.s32.totalorder %s337, %s351
    %p353 = scmp.eq.s32.totalorder %s37, 0
    %p354 = por %p352, %p353
    %s356 = sadd.s32 %s355, 1
    %p359 = scmp.eq.s32.totalorder %s31, 5
    %p360 = scmp.ne.s32.totalorder %s355, %s357
    %p361 = scmp.eq.s32.totalorder %s31, 0
    %p362 = por %p360, %p361
    %p363 = scmp.ne.s32.totalorder %s355, %s357
    %p364 = scmp.eq.s32.totalorder %s36, 5
    %p365 = por %p363, %p364
    %p366 = scmp.ne.s32.totalorder %s357, %s358
    %p367 = scmp.eq.s32.totalorder %s36, 0
    %p368 = por %p366, %p367
    %p369 = scmp.ne.s32.totalorder %s357, %s358
    %p370 = scmp.eq.s32.totalorder %s37, 5
    %p371 = por %p369, %p370
    %p373 = scmp.ne.s32.totalorder %s358, %s372
    %p374 = scmp.eq.s32.totalorder %s37, 0
    %p375 = por %p373, %p374
    %s376 = ssub.s32 %s38, %s50
    %p377 = scmp.eq.s32.totalorder %s376, 0
    %s379 = sadd.s32 %s378, 1
    %s380 = scalar_select %p377, %s378, %s379
    %p383 = pneg %p377
    %p384 = scmp.eq.s32.totalorder %s31, 5
    %p385 = por %p383, %p384
    %p386 = scmp.ne.s32.totalorder %s378, %s381
    %p387 = scmp.eq.s32.totalorder %s31, 0
    %p388 = por %p386, %p387
    %p389 = scmp.ne.s32.totalorder %s378, %s381
    %p390 = scmp.eq.s32.totalorder %s36, 5
    %p391 = por %p389, %p390
    %p392 = scmp.ne.s32.totalorder %s381, %s382
    %p393 = scmp.eq.s32.totalorder %s36, 0
    %p394 = por %p392, %p393
    %p395 = scmp.ne.s32.totalorder %s381, %s382
    %p396 = scmp.eq.s32.totalorder %s37, 5
    %p397 = por %p395, %p396
    %p399 = scmp.ne.s32.totalorder %s382, %s398
    %p400 = scmp.eq.s32.totalorder %s37, 0
    %p401 = por %p399, %p400
    %p402 = scmp.le.s32.totalorder 1, %s31
    %p403 = scmp.lt.s32.totalorder %s31, 7
    %p404 = pnand %p402, %p403
    %p405 = pneg %p404
    // Predicated region
    $region9: #{_lambda_.1} parent=5 // pred_check
      _
    $region10: #{_lambda_.1} parent=5 // pred_check_branch
      %407 = sbr.rel (%p404) target = $region12
    $region11: #{_lambda_.1} parent=5 // pred_region
      %s408 = ssub.s32 %s31, 1
      // Predicated region
      $region13: #{_lambda_.1} parent=11 // pred_check
        %p409 = pneg %p200
      $region14: #{_lambda_.1} parent=11 // pred_check_branch
        %411 = sbr.rel (%p409) target = $region16
      $region15: #{_lambda_.1} parent=11 // pred_region
        _
      $region16: #{_lambda_.1} parent=11 // pred_fallthru
        _
      // Predicated region
      $region17: #{_lambda_.1} parent=11 // pred_check
        %p412 = pneg %p221
      $region18: #{_lambda_.1} parent=11 // pred_check_branch
        %414 = sbr.rel (%p412) target = $region20
      $region19: #{_lambda_.1} parent=11 // pred_region
        _
      $region20: #{_lambda_.1} parent=11 // pred_fallthru
        _
      // Predicated region
      $region21: #{_lambda_.1} parent=11 // pred_check
        %p415 = pneg %p242
      $region22: #{_lambda_.1} parent=11 // pred_check_branch
        %417 = sbr.rel (%p415) target = $region24
      $region23: #{_lambda_.1} parent=11 // pred_region
        _
      $region24: #{_lambda_.1} parent=11 // pred_fallthru
        _
      // Predicated region
      $region25: #{_lambda_.1} parent=11 // pred_check
        %p418 = pneg %p263
      $region26: #{_lambda_.1} parent=11 // pred_check_branch
        %420 = sbr.rel (%p418) target = $region28
      $region27: #{_lambda_.1} parent=11 // pred_region
        _
      $region28: #{_lambda_.1} parent=11 // pred_fallthru
        _
      // Predicated region
      $region29: #{_lambda_.1} parent=11 // pred_check
        %p421 = pneg %p284
      $region30: #{_lambda_.1} parent=11 // pred_check_branch
        %423 = sbr.rel (%p421) target = $region32
      $region31: #{_lambda_.1} parent=11 // pred_region
        _
      $region32: #{_lambda_.1} parent=11 // pred_fallthru
        _
      // Predicated region
      $region33: #{_lambda_.1} parent=11 // pred_check
        %p424 = pneg %p305
      $region34: #{_lambda_.1} parent=11 // pred_check_branch
        %426 = sbr.rel (%p424) target = $region36
      $region35: #{_lambda_.1} parent=11 // pred_region
        _
      $region36: #{_lambda_.1} parent=11 // pred_fallthru
        _
      // Predicated region
      $region37: #{_lambda_.1} parent=11 // pred_check
        %p427 = pneg %p326
      $region38: #{_lambda_.1} parent=11 // pred_check_branch
        %429 = sbr.rel (%p427) target = $region40
      $region39: #{_lambda_.1} parent=11 // pred_region
        _
      $region40: #{_lambda_.1} parent=11 // pred_fallthru
        _
      // Predicated region
      $region41: #{_lambda_.1} parent=11 // pred_check
        %p430 = pneg %p347
      $region42: #{_lambda_.1} parent=11 // pred_check_branch
        %432 = sbr.rel (%p430) target = $region44
      $region43: #{_lambda_.1} parent=11 // pred_region
        _
      $region44: #{_lambda_.1} parent=11 // pred_fallthru
        _
      // Predicated region
      $region45: #{_lambda_.1} parent=11 // pred_check
        %p433 = pneg %p368
      $region46: #{_lambda_.1} parent=11 // pred_check_branch
        %435 = sbr.rel (%p433) target = $region48
      $region47: #{_lambda_.1} parent=11 // pred_region
        _
      $region48: #{_lambda_.1} parent=11 // pred_fallthru
        _
    $region12: #{_lambda_.1} parent=5 // pred_fallthru
      _
    %p436 = scmp.lt.s32.totalorder %s31, 6
    // Predicated region
    $region49: #{_lambda_.1} parent=5 // pred_check
      %p437 = pneg %p436
    $region50: #{_lambda_.1} parent=5 // pred_check_branch
      %439 = sbr.rel (%p437) target = $region52
    $region51: #{_lambda_.1} parent=5 // pred_region
      // Predicated region
      $region53: #{_lambda_.1} parent=51 // pred_check
        %p440 = pneg %p63
      $region54: #{_lambda_.1} parent=51 // pred_check_branch
        %442 = sbr.rel (%p440) target = $region56
      $region55: #{_lambda_.1} parent=51 // pred_region
        %p443 = scmp.lt.s32.totalorder %s38, 2
        %s444 = scalar_select %p443, %s38, 2
        %s445 = smul.addr %s444, 8
        %s446 = scalar_lea.vmem %s2, %s445
      $region56: #{_lambda_.1} parent=51 // pred_fallthru
        _
      // Predicated region
      $region57: #{_lambda_.1} parent=51 // pred_check
        %p447 = pneg %p89
      $region58: #{_lambda_.1} parent=51 // pred_check_branch
        %449 = sbr.rel (%p447) target = $region60
      $region59: #{_lambda_.1} parent=51 // pred_region
        %p450 = scmp.lt.s32.totalorder %s38, 2
        %s451 = scalar_select %p450, %s38, 2
        %s452 = smul.addr %s451, 8
        %s453 = scalar_lea.vmem %s3, %s452
      $region60: #{_lambda_.1} parent=51 // pred_fallthru
        _
      // Predicated region
      $region61: #{_lambda_.1} parent=51 // pred_check
        %p454 = pneg %p131
      $region62: #{_lambda_.1} parent=51 // pred_check_branch
        %456 = sbr.rel (%p454) target = $region64
      $region63: #{_lambda_.1} parent=51 // pred_region
        %s457 = sld [smem:[#allocation9 + %s38]]
        %s458 = ssub.s32 %s457, 1
        %p459 = scmp.gt.s32.totalorder %s458, 0
        %s460 = scalar_select %p459, %s458, 0
        %p461 = scmp.lt.s32.totalorder %s39, %s460
        %s462 = scalar_select %p461, %s39, %s460
        %s463 = sld [smem:[#allocation8 + %s38]]
        %s464 = sadd.s32 %s463, %s462
        %s465 = smul.u32 2, %s464
        %p466 = scmp.lt.s32.totalorder %s465, 5
        %s467 = scalar_select %p466, %s465, 5
        %s468 = smul.addr %s467, 8
        %s469 = scalar_lea.vmem %s4, %s468
        %s470 = sld [smem:[#allocation9 + %s38]]
        %s471 = ssub.s32 %s470, 1
        %p472 = scmp.gt.s32.totalorder %s471, 0
        %s473 = scalar_select %p472, %s471, 0
        %p474 = scmp.lt.s32.totalorder %s39, %s473
        %s475 = scalar_select %p474, %s39, %s473
        %s476 = sld [smem:[#allocation8 + %s38]]
        %s477 = sadd.s32 %s476, %s475
        %s478 = smul.u32 2, %s477
      $region64: #{_lambda_.1} parent=51 // pred_fallthru
        _
      // Predicated region
      $region65: #{_lambda_.1} parent=51 // pred_check
        %p479 = pneg %p173
      $region66: #{_lambda_.1} parent=51 // pred_check_branch
        %481 = sbr.rel (%p479) target = $region68
      $region67: #{_lambda_.1} parent=51 // pred_region
        %s482 = sld [smem:[#allocation9 + %s38]]
        %s483 = ssub.s32 %s482, 1
        %p484 = scmp.gt.s32.totalorder %s483, 0
        %s485 = scalar_select %p484, %s483, 0
        %p486 = scmp.lt.s32.totalorder %s39, %s485
        %s487 = scalar_select %p486, %s39, %s485
        %s488 = sld [smem:[#allocation8 + %s38]]
        %s489 = sadd.s32 %s488, %s487
        %p490 = scmp.lt.s32.totalorder %s489, 2
        %s491 = scalar_select %p490, %s489, 2
        %s492 = scalar_lea.vmem %s5, %s491
        %s493 = sld [smem:[#allocation9 + %s38]]
        %s494 = ssub.s32 %s493, 1
        %p495 = scmp.gt.s32.totalorder %s494, 0
        %s496 = scalar_select %p495, %s494, 0
        %p497 = scmp.lt.s32.totalorder %s39, %s496
        %s498 = scalar_select %p497, %s39, %s496
        %s499 = sld [smem:[#allocation8 + %s38]]
        %s500 = sadd.s32 %s499, %s498
      $region68: #{_lambda_.1} parent=51 // pred_fallthru
        _
    $region52: #{_lambda_.1} parent=5 // pred_fallthru
      _
    %p501 = scmp.le.s32.totalorder 1, %s31
    %p502 = scmp.lt.s32.totalorder %s31, 7
    %p503 = pnand %p501, %p502
    %p504 = pneg %p503
    // Predicated region
    $region69: #{_lambda_.1} parent=5 // pred_check
      _
    $region70: #{_lambda_.1} parent=5 // pred_check_branch
      %506 = sbr.rel (%p503) target = $region72
    $region71: #{_lambda_.1} parent=5 // pred_region
      %s507 = ssub.s32 %s31, 1
      %p508 = scmp.lt.s32.totalorder %s40, 2
      %s509 = scalar_select %p508, %s40, 2
      %s510 = smul.addr %s509, 8
      %s511 = scalar_lea.vmem %s2, %s510
      %p512 = pneg %p69
      %p513 = pneg %p66
      %p514 = scmp.lt.s32.totalorder %s40, 2
      %s515 = scalar_select %p514, %s40, 2
      %s516 = smul.addr %s515, 8
      %s517 = scalar_lea.vmem %s3, %s516
      %p518 = pneg %p95
      %p519 = pneg %p92
      %s520 = sld [smem:[#allocation9 + %s40]]
      %s521 = ssub.s32 %s520, 1
      %p522 = scmp.gt.s32.totalorder %s521, 0
      %s523 = scalar_select %p522, %s521, 0
      %p524 = scmp.lt.s32.totalorder %s41, %s523
      %s525 = scalar_select %p524, %s41, %s523
      %s526 = sld [smem:[#allocation8 + %s40]]
      %s527 = sadd.s32 %s526, %s525
      %s528 = smul.u32 2, %s527
      %p529 = scmp.lt.s32.totalorder %s528, 5
      %s530 = scalar_select %p529, %s528, 5
      %s531 = smul.addr %s530, 8
      %s532 = scalar_lea.vmem %s4, %s531
      %p533 = pneg %p137
      %p534 = pneg %p134
      %s535 = sld [smem:[#allocation9 + %s40]]
      %s536 = ssub.s32 %s535, 1
      %p537 = scmp.gt.s32.totalorder %s536, 0
      %s538 = scalar_select %p537, %s536, 0
      %p539 = scmp.lt.s32.totalorder %s41, %s538
      %s540 = scalar_select %p539, %s41, %s538
      %s541 = sld [smem:[#allocation8 + %s40]]
      %s542 = sadd.s32 %s541, %s540
      %p543 = scmp.lt.s32.totalorder %s542, 2
      %s544 = scalar_select %p543, %s542, 2
      %s545 = scalar_lea.vmem %s5, %s544
      %p546 = pneg %p179
      %p547 = pneg %p176
      %p548 = pneg %p200
      %p549 = pneg %p197
      %p550 = pneg %p221
      %p551 = pneg %p218
      %p552 = pneg %p242
      %p553 = pneg %p239
      %p554 = pneg %p263
      %p555 = pneg %p260
      %p556 = pneg %p284
      %p557 = pneg %p281
      %p558 = pneg %p305
      %p559 = pneg %p302
      %p560 = pneg %p326
      %p561 = pneg %p323
      %p562 = pneg %p347
      %p563 = pneg %p344
      %p564 = pneg %p368
      %p565 = pneg %p365
      %p566 = pneg %p394
      %p567 = pneg %p391
      %p568 = scmp.lt.s32.totalorder %s40, 2
      %s569 = scalar_select %p568, %s40, 2
      %s570 = smul.addr %s569, 8
      %s571 = scalar_lea.vmem %s15, %s570
      %p572 = scmp.lt.s32.totalorder %s40, 2
      %s573 = scalar_select %p572, %s40, 2
      %s574 = smul.addr %s573, 8
      %s575 = scalar_lea.vmem %s2, %s574
      %p576 = scmp.lt.s32.totalorder %s40, 2
      %s577 = scalar_select %p576, %s40, 2
      %s578 = smul.addr %s577, 8
      %s579 = scalar_lea.vmem %s3, %s578
      %s580 = sld [smem:[#allocation9 + %s40]]
      %s581 = ssub.s32 %s580, 1
      %p582 = scmp.gt.s32.totalorder %s581, 0
      %s583 = scalar_select %p582, %s581, 0
      %p584 = scmp.lt.s32.totalorder %s41, %s583
      %s585 = scalar_select %p584, %s41, %s583
      %s586 = sld [smem:[#allocation8 + %s40]]
      %s587 = sadd.s32 %s586, %s585
      %s588 = smul.u32 2, %s587
      %p589 = scmp.lt.s32.totalorder %s588, 5
      %s590 = scalar_select %p589, %s588, 5
      %s591 = smul.addr %s590, 8
      %s592 = scalar_lea.vmem %s4, %s591
      %s593 = sld [smem:[#allocation9 + %s40]]
      %s594 = ssub.s32 %s593, 1
      %p595 = scmp.gt.s32.totalorder %s594, 0
      %s596 = scalar_select %p595, %s594, 0
      %p597 = scmp.lt.s32.totalorder %s41, %s596
      %s598 = scalar_select %p597, %s41, %s596
      %s599 = sld [smem:[#allocation8 + %s40]]
      %s600 = sadd.s32 %s599, %s598
      %s601 = smul.u32 2, %s600
      %s602 = sld [smem:[#allocation9 + %s40]]
      %s603 = ssub.s32 %s602, 1
      %p604 = scmp.gt.s32.totalorder %s603, 0
      %s605 = scalar_select %p604, %s603, 0
      %p606 = scmp.lt.s32.totalorder %s41, %s605
      %s607 = scalar_select %p606, %s41, %s605
      %s608 = sld [smem:[#allocation8 + %s40]]
      %s609 = sadd.s32 %s608, %s607
      %p610 = scmp.lt.s32.totalorder %s609, 2
      %s611 = scalar_select %p610, %s609, 2
      %s612 = scalar_lea.vmem %s5, %s611
      %s613 = sld [smem:[#allocation9 + %s40]]
      %s614 = ssub.s32 %s613, 1
      %p615 = scmp.gt.s32.totalorder %s614, 0
      %s616 = scalar_select %p615, %s614, 0
      %p617 = scmp.lt.s32.totalorder %s41, %s616
      %s618 = scalar_select %p617, %s41, %s616
      %s619 = sld [smem:[#allocation8 + %s40]]
      %s620 = sadd.s32 %s619, %s618
      %p621 = scmp.lt.s32.totalorder %s40, 2
      %s622 = scalar_select %p621, %s40, 2
      %s623 = smul.addr %s622, 8
      %s624 = scalar_lea.vmem %s15, %s623
      %p626 = scmp.eq.s32.totalorder %s41, 0
      // Predicated region
      $region73: #{_lambda_.1} parent=71 // pred_check
        %p627 = pneg %p626
      $region74: #{_lambda_.1} parent=71 // pred_check_branch
        %629 = sbr.rel (%p627) target = $region76
      $region75: #{_lambda_.1} parent=71 // pred_region
        %v630 = vld [vmem:[%s10] sm:$0xff]
        %v631 = vld [vmem:[%s10 + $0x8] sm:$0xff]
        %v632 = vld [vmem:[%s10 + $0x10] sm:$0xff]
        %v633 = vld [vmem:[%s10 + $0x18] sm:$0xff]
        %v634 = vld [vmem:[%s11] sm:$0xf]
        %v635 = vld [vmem:[%s575] sm:$0xff]
        %v636 = vlaneseq
        %v637 = vshrl.u32 %v636, 7
        %v638 = vsub.s32 0, %v637
        %v639 = vrot.slane %v634, %v638
        %vm640 = vcmask 261120
        %v642 = vsel %vm640, %v635, 0
        %644 = vmatprep.subr.mxu0 0.0
        %645 = vmatpush1.msra.mxu0 %v630
        %646 = vmatprep.subr.mxu0 0.0
        %647 = vmatpush1.msra.mxu0 %v631
        %648 = vmatprep.subr.mxu0 0.0
        %649 = vmatpush1.msra.mxu0 %v632
        %650 = vmatprep.subr.mxu0 0.0
        %651 = vmatpush1.msra.mxu0 %v633
        %652 = vmatprep.subr.mxu0 0.0
        %653 = vmatpush1.msra.mxu0 0.0
        %654 = vmatprep.subr.mxu0 0.0
        %655 = vmatpush1.msra.mxu0 0.0
        %656 = vmatprep.subr.mxu0 0.0
        %657 = vmatpush1.msra.mxu0 0.0
        %658 = vmatprep.subr.mxu0 0.0
        %659 = vmatpush1.msra.mxu0 0.0
        %660 = vmatprep.subr.mxu0 0.0
        %661 = vmatpush1.msra.mxu0 0.0
        %662 = vmatprep.subr.mxu0 0.0
        %663 = vmatpush1.msra.mxu0 0.0
        %664 = vmatprep.subr.mxu0 0.0
        %665 = vmatpush1.msra.mxu0 0.0
        %666 = vmatprep.subr.mxu0 0.0
        %667 = vmatpush1.msra.mxu0 0.0
        %668 = vmatprep.subr.mxu0 0.0
        %669 = vmatpush1.msra.mxu0 0.0
        %670 = vmatprep.subr.mxu0 0.0
        %671 = vmatpush1.msra.mxu0 0.0
        %672 = vmatprep.subr.mxu0 0.0
        %673 = vmatpush1.msra.mxu0 0.0
        %674 = vmatprep.subr.mxu0 0.0
        %675 = vmatpush1.msra.mxu0 0.0
        %676 = vmatprep.subr.mxu0 0.0
        %677 = vmatpush1.msra.mxu0 0.0
        %678 = vmatprep.subr.mxu0 0.0
        %679 = vmatpush1.msra.mxu0 0.0
        %680 = vmatprep.subr.mxu0 0.0
        %681 = vmatpush1.msra.mxu0 0.0
        %682 = vmatprep.subr.mxu0 0.0
        %683 = vmatpush1.msra.mxu0 0.0
        %684 = vmatprep.subr.mxu0 0.0
        %685 = vmatpush1.msra.mxu0 0.0
        %686 = vmatprep.subr.mxu0 0.0
        %687 = vmatpush1.msra.mxu0 0.0
        %688 = vmatprep.subr.mxu0 0.0
        %689 = vmatpush1.msra.mxu0 0.0
        %690 = vmatprep.subr.mxu0 0.0
        %691 = vmatpush1.msra.mxu0 0.0
        %692 = vmatprep.subr.mxu0 0.0
        %693 = vmatpush1.msra.mxu0 0.0
        %694 = vmatprep.subr.mxu0 0.0
        %695 = vmatpush1.msra.mxu0 0.0
        %696 = vmatprep.subr.mxu0 0.0
        %697 = vmatpush1.msra.mxu0 0.0
        %698 = vmatprep.subr.mxu0 0.0
        %699 = vmatpush1.msra.mxu0 0.0
        %700 = vmatprep.subr.mxu0 0.0
        %701 = vmatpush1.msra.mxu0 0.0
        %702 = vmatprep.subr.mxu0 0.0
        %703 = vmatpush1.msra.mxu0 0.0
        %704 = vmatprep.subr.mxu0 0.0
        %705 = vmatpush1.msra.mxu0 0.0
        %706 = vmatprep.subr.mxu0 0.0
        %707 = vmatpush1.msra.mxu0 0.0
        %708 = vmatprep.mubr.f32.mxu0 0.0
        %709 = vmatmul.mubr.f32.gmra.mrb[0].mxu0 %v642
        %v710 = vpop.f32.mrb[0].mxu0
        %v711 = vadd.f32 %v639, %v710
        %v712 = vpop.f32.mrb[0].mxu0
        %713 = vdwg.mxu0
        %v714 = vsel %vm640, %v711, 0.0
        %715 = vadd.xlane.f32.xlu0 %v714
        %v716 = vpop.xlane.xlu0 %715
        %v717 = vrcp.pop 32.0
        %v718 = vmul.f32 %v716, %v717
        %v719 = vsub.f32 %v711, %v718
        %v720 = vmul.f32 %v719, %v719
        %v721 = vsel %vm640, %v720, 0.0
        %722 = vadd.xlane.f32.xlu0 %v721
        %v723 = vpop.xlane.xlu0 %722
        %v724 = vmul.f32 %v723, %v717
        %v725 = vadd.f32 %v724, 1e-05
        %v726 = vrsqrt.pop %v725
        %v727 = vmul.f32 %v719, %v726
        %v728 = vlaneseq
        %v729 = vshrl.u32 %v728, 7
        %v730 = vsub.s32 1, %v729
        %v731 = vrot.slane %v634, %v730
        %v732 = vmul.f32 %v727, %v731
        %v733 = vlaneseq
        %v734 = vshrl.u32 %v733, 7
        %v735 = vsub.s32 2, %v734
        %v736 = vrot.slane %v634, %v735
        %v737 = vadd.f32 %v732, %v736
        %v738 = vmax.f32 %v737, 0.0
        %v739 = vlaneseq
        %v740 = vshrl.u32 %v739, 7
        %v741 = vsub.s32 3, %v740
        %v742 = vrot.slane %v634, %v741
        %747 = vrot.lane.b32.xlu0 %v630, 96
        %v748 = vpop.permute.xlu0 %747
        %749 = vrot.lane.b32.xlu0 %v631, 96
        %v750 = vpop.permute.xlu0 %749
        %751 = vrot.lane.b32.xlu0 %v632, 96
        %v752 = vpop.permute.xlu0 %751
        %753 = vrot.lane.b32.xlu0 %v633, 96
        %v754 = vpop.permute.xlu0 %753
        %v760 = vsel %vm640, %v738, 0
        %762 = vmatprep.subr.mxu0 0.0
        %763 = vmatpush1.msra.mxu0 %v748
        %764 = vmatprep.subr.mxu0 0.0
        %765 = vmatpush1.msra.mxu0 %v750
        %766 = vmatprep.subr.mxu0 0.0
        %767 = vmatpush1.msra.mxu0 %v752
        %768 = vmatprep.subr.mxu0 0.0
        %769 = vmatpush1.msra.mxu0 %v754
        %770 = vmatprep.subr.mxu0 0.0
        %771 = vmatpush1.msra.mxu0 0.0
        %772 = vmatprep.subr.mxu0 0.0
        %773 = vmatpush1.msra.mxu0 0.0
        %774 = vmatprep.subr.mxu0 0.0
        %775 = vmatpush1.msra.mxu0 0.0
        %776 = vmatprep.subr.mxu0 0.0
        %777 = vmatpush1.msra.mxu0 0.0
        %778 = vmatprep.subr.mxu0 0.0
        %779 = vmatpush1.msra.mxu0 0.0
        %780 = vmatprep.subr.mxu0 0.0
        %781 = vmatpush1.msra.mxu0 0.0
        %782 = vmatprep.subr.mxu0 0.0
        %783 = vmatpush1.msra.mxu0 0.0
        %784 = vmatprep.subr.mxu0 0.0
        %785 = vmatpush1.msra.mxu0 0.0
        %786 = vmatprep.subr.mxu0 0.0
        %787 = vmatpush1.msra.mxu0 0.0
        %788 = vmatprep.subr.mxu0 0.0
        %789 = vmatpush1.msra.mxu0 0.0
        %790 = vmatprep.subr.mxu0 0.0
        %791 = vmatpush1.msra.mxu0 0.0
        %792 = vmatprep.subr.mxu0 0.0
        %793 = vmatpush1.msra.mxu0 0.0
        %794 = vmatprep.subr.mxu0 0.0
        %795 = vmatpush1.msra.mxu0 0.0
        %796 = vmatprep.subr.mxu0 0.0
        %797 = vmatpush1.msra.mxu0 0.0
        %798 = vmatprep.subr.mxu0 0.0
        %799 = vmatpush1.msra.mxu0 0.0
        %800 = vmatprep.subr.mxu0 0.0
        %801 = vmatpush1.msra.mxu0 0.0
        %802 = vmatprep.subr.mxu0 0.0
        %803 = vmatpush1.msra.mxu0 0.0
        %804 = vmatprep.subr.mxu0 0.0
        %805 = vmatpush1.msra.mxu0 0.0
        %806 = vmatprep.subr.mxu0 0.0
        %807 = vmatpush1.msra.mxu0 0.0
        %808 = vmatprep.subr.mxu0 0.0
        %809 = vmatpush1.msra.mxu0 0.0
        %810 = vmatprep.subr.mxu0 0.0
        %811 = vmatpush1.msra.mxu0 0.0
        %812 = vmatprep.subr.mxu0 0.0
        %813 = vmatpush1.msra.mxu0 0.0
        %814 = vmatprep.subr.mxu0 0.0
        %815 = vmatpush1.msra.mxu0 0.0
        %816 = vmatprep.subr.mxu0 0.0
        %817 = vmatpush1.msra.mxu0 0.0
        %818 = vmatprep.subr.mxu0 0.0
        %819 = vmatpush1.msra.mxu0 0.0
        %820 = vmatprep.subr.mxu0 0.0
        %821 = vmatpush1.msra.mxu0 0.0
        %822 = vmatprep.subr.mxu0 0.0
        %823 = vmatpush1.msra.mxu0 0.0
        %824 = vmatprep.subr.mxu0 0.0
        %825 = vmatpush1.msra.mxu0 0.0
        %826 = vmatprep.mubr.f32.mxu0 0.0
        %827 = vmatmul.mubr.f32.gmra.mrb[0].mxu0 %v760
        %v828 = vpop.f32.mrb[0].mxu0
        %v829 = vadd.f32 %v742, %v828
        %v830 = vpop.f32.mrb[0].mxu0
        %831 = vdwg.mxu0
        %832 = vst.msk [vmem:[#allocation2] sm:$0xff] %vm640, %v829
        %vm833 = vcmask 7168
        %834 = vst.msk [vmem:[#allocation3] sm:$0xff] %vm833, -1e+30
        %vm835 = vcmask 31744
        %836 = vst.msk [vmem:[#allocation4] sm:$0xff] %vm835, 0.0
        %837 = vst.msk [vmem:[#allocation5] sm:$0xff] %vm640, 0.0
        %838 = vst.msk [vmem:[#allocation6] sm:$0xff] %vm640, 0.0
      $region76: #{_lambda_.1} parent=71 // pred_fallthru
        _
      %s839 = sld [smem:[#allocation9 + %s40]]
      %p840 = scmp.lt.s32.totalorder %s41, %s839
      // Predicated region
      $region77: #{_lambda_.1} parent=71 // pred_check
        %p841 = pneg %p840
      $region78: #{_lambda_.1} parent=71 // pred_check_branch
        %843 = sbr.rel (%p841) target = $region80
      $region79: #{_lambda_.1} parent=71 // pred_region
        %v844 = vld [vmem:[%s592] sm:$0xff]
        %v845 = vld [vmem:[%s592 + $0x8] sm:$0xff]
        %v846 = vld [vmem:[%s6] sm:$0xff]
        %v847 = vld [vmem:[%s6 + $0x8] sm:$0xff]
        %v848 = vld [vmem:[%s6 + $0x10] sm:$0xff]
        %v849 = vld [vmem:[%s6 + $0x18] sm:$0xff]
        %v850 = vld [vmem:[%s6 + $0x20] sm:$0xff]
        %v851 = vld [vmem:[%s6 + $0x28] sm:$0xff]
        %v852 = vld [vmem:[%s6 + $0x30] sm:$0xff]
        %v853 = vld [vmem:[%s6 + $0x38] sm:$0xff]
        %v854 = vld [vmem:[%s6 + $0x40] sm:$0xff]
        %v855 = vld [vmem:[%s6 + $0x48] sm:$0xff]
        %v856 = vld [vmem:[%s6 + $0x50] sm:$0xff]
        %v857 = vld [vmem:[%s6 + $0x58] sm:$0xff]
        %v858 = vld [vmem:[%s7] sm:$0x7]
        %v859 = vlaneseq
        %v860 = vshrl.u32 %v859, 7
        %v861 = vsub.s32 0, %v860
        %v862 = vrot.slane %v858, %v861
        %vm863 = vcmask 785408
        %v865 = vsel %vm863, %v844, 0
        %v868 = vsel %vm863, %v845, 0
        %870 = vmatprep.subr.mxu0 0.0
        %871 = vmatpush1.msra.mxu0 %v846
        %872 = vmatprep.subr.mxu0 0.0
        %873 = vmatpush1.msra.mxu0 %v847
        %874 = vmatprep.subr.mxu0 0.0
        %875 = vmatpush1.msra.mxu0 %v848
        %876 = vmatprep.subr.mxu0 0.0
        %877 = vmatpush1.msra.mxu0 %v849
        %878 = vmatprep.subr.mxu0 0.0
        %879 = vmatpush1.msra.mxu0 %v850
        %880 = vmatprep.subr.mxu0 0.0
        %881 = vmatpush1.msra.mxu0 %v851
        %882 = vmatprep.subr.mxu0 0.0
        %883 = vmatpush1.msra.mxu0 %v852
        %884 = vmatprep.subr.mxu0 0.0
        %885 = vmatpush1.msra.mxu0 %v853
        %886 = vmatprep.subr.mxu0 0.0
        %887 = vmatpush1.msra.mxu0 %v854
        %888 = vmatprep.subr.mxu0 0.0
        %889 = vmatpush1.msra.mxu0 %v855
        %890 = vmatprep.subr.mxu0 0.0
        %891 = vmatpush1.msra.mxu0 %v856
        %892 = vmatprep.subr.mxu0 0.0
        %893 = vmatpush1.msra.mxu0 %v857
        %894 = vmatprep.subr.mxu0 0.0
        %895 = vmatpush1.msra.mxu0 0.0
        %896 = vmatprep.subr.mxu0 0.0
        %897 = vmatpush1.msra.mxu0 0.0
        %898 = vmatprep.subr.mxu0 0.0
        %899 = vmatpush1.msra.mxu0 0.0
        %900 = vmatprep.subr.mxu0 0.0
        %901 = vmatpush1.msra.mxu0 0.0
        %902 = vmatprep.subr.mxu0 0.0
        %903 = vmatpush1.msra.mxu0 0.0
        %904 = vmatprep.subr.mxu0 0.0
        %905 = vmatpush1.msra.mxu0 0.0
        %906 = vmatprep.subr.mxu0 0.0
        %907 = vmatpush1.msra.mxu0 0.0
        %908 = vmatprep.subr.mxu0 0.0
        %909 = vmatpush1.msra.mxu0 0.0
        %910 = vmatprep.subr.mxu0 0.0
        %911 = vmatpush1.msra.mxu0 0.0
        %912 = vmatprep.subr.mxu0 0.0
        %913 = vmatpush1.msra.mxu0 0.0
        %914 = vmatprep.subr.mxu0 0.0
        %915 = vmatpush1.msra.mxu0 0.0
        %916 = vmatprep.subr.mxu0 0.0
        %917 = vmatpush1.msra.mxu0 0.0
        %918 = vmatprep.subr.mxu0 0.0
        %919 = vmatpush1.msra.mxu0 0.0
        %920 = vmatprep.subr.mxu0 0.0
        %921 = vmatpush1.msra.mxu0 0.0
        %922 = vmatprep.subr.mxu0 0.0
        %923 = vmatpush1.msra.mxu0 0.0
        %924 = vmatprep.subr.mxu0 0.0
        %925 = vmatpush1.msra.mxu0 0.0
        %926 = vmatprep.subr.mxu0 0.0
        %927 = vmatpush1.msra.mxu0 0.0
        %928 = vmatprep.subr.mxu0 0.0
        %929 = vmatpush1.msra.mxu0 0.0
        %930 = vmatprep.subr.mxu0 0.0
        %931 = vmatpush1.msra.mxu0 0.0
        %932 = vmatprep.subr.mxu0 0.0
        %933 = vmatpush1.msra.mxu0 0.0
        %934 = vmatprep.mubr.f32.mxu0 0.0
        %935 = vmatmul.mubr.f32.gmra.mrb[0].mxu0 %v865
        %v936 = vpop.f32.mrb[0].mxu0
        %v937 = vadd.f32 %v862, %v936
        %v938 = vpop.f32.mrb[0].mxu0
        %939 = vmatprep.mubr.f32.mxu0 0.0
        %940 = vmatmul.mubr.f32.gmra.mrb[0].mxu0 %v868
        %v941 = vpop.f32.mrb[0].mxu0
        %v942 = vadd.f32 %v862, %v941
        %v943 = vpop.f32.mrb[0].mxu0
        %944 = vdwg.mxu0
        %vm945 = vcmask 261120
        %v946 = vsel %vm945, %v937, 0.0
        %947 = vadd.xlane.f32.xlu0 %v946
        %v948 = vpop.xlane.xlu0 %947
        %v949 = vsel %vm945, %v942, 0.0
        %950 = vadd.xlane.f32.xlu0 %v949
        %v951 = vpop.xlane.xlu0 %950
        %v952 = vrcp.pop 32.0
        %v953 = vmul.f32 %v948, %v952
        %v954 = vmul.f32 %v951, %v952
        %v955 = vsub.f32 %v937, %v953
        %v956 = vsub.f32 %v942, %v954
        %v957 = vmul.f32 %v955, %v955
        %v958 = vmul.f32 %v956, %v956
        %v959 = vsel %vm945, %v957, 0.0
        %960 = vadd.xlane.f32.xlu0 %v959
        %v961 = vpop.xlane.xlu0 %960
        %v962 = vsel %vm945, %v958, 0.0
        %963 = vadd.xlane.f32.xlu0 %v962
        %v964 = vpop.xlane.xlu0 %963
        %v965 = vmul.f32 %v961, %v952
        %v966 = vmul.f32 %v964, %v952
        %v967 = vadd.f32 %v965, 1e-05
        %v968 = vadd.f32 %v966, 1e-05
        %v969 = vrsqrt.pop %v967
        %v970 = vrsqrt.pop %v968
        %v971 = vmul.f32 %v955, %v969
        %v972 = vmul.f32 %v956, %v970
        %v973 = vlaneseq
        %v974 = vshrl.u32 %v973, 7
        %v975 = vsub.s32 1, %v974
        %v976 = vrot.slane %v858, %v975
        %v977 = vmul.f32 %v971, %v976
        %v978 = vmul.f32 %v972, %v976
        %v979 = vlaneseq
        %v980 = vshrl.u32 %v979, 7
        %v981 = vsub.s32 2, %v980
        %v982 = vrot.slane %v858, %v981
        %v983 = vadd.f32 %v977, %v982
        %v984 = vadd.f32 %v978, %v982
        %v985 = vmax.f32 %v983, 0.0
        %v986 = vmax.f32 %v984, 0.0
        %989 = vrot.lane.b32.xlu0 %v937, 96
        %v990 = vpop.permute.xlu0 %989
        %991 = vrot.lane.b32.xlu0 %v942, 96
        %v992 = vpop.permute.xlu0 %991
        %v995 = vsel %vm945, %v990, 0.0
        %996 = vadd.xlane.f32.xlu0 %v995
        %v997 = vpop.xlane.xlu0 %996
        %v998 = vsel %vm945, %v992, 0.0
        %999 = vadd.xlane.f32.xlu0 %v998
        %v1000 = vpop.xlane.xlu0 %999
        %v1001 = vmul.f32 %v997, %v952
        %v1002 = vmul.f32 %v1000, %v952
        %v1003 = vsub.f32 %v937, %v1001
        %v1004 = vsub.f32 %v942, %v1002
        %v1005 = vmul.f32 %v1003, %v1003
        %v1006 = vmul.f32 %v1004, %v1004
        %1009 = vrot.lane.b32.xlu0 %v1005, 96
        %v1010 = vpop.permute.xlu0 %1009
        %1011 = vrot.lane.b32.xlu0 %v1006, 96
        %v1012 = vpop.permute.xlu0 %1011
        %v1015 = vsel %vm945, %v1010, 0.0
        %1016 = vadd.xlane.f32.xlu0 %v1015
        %v1017 = vpop.xlane.xlu0 %1016
        %v1018 = vsel %vm945, %v1012, 0.0
        %1019 = vadd.xlane.f32.xlu0 %v1018
        %v1020 = vpop.xlane.xlu0 %1019
        %v1021 = vmul.f32 %v1017, %v952
        %v1022 = vmul.f32 %v1020, %v952
        %v1023 = vadd.f32 %v1021, 1e-05
        %v1024 = vadd.f32 %v1022, 1e-05
        %v1025 = vrsqrt.pop %v1023
        %v1026 = vrsqrt.pop %v1024
        %v1027 = vmul.f32 %v1003, %v1025
        %v1028 = vmul.f32 %v1004, %v1026
        %v1029 = vmul.f32 %v1027, %v976
        %v1030 = vmul.f32 %v1028, %v976
        %v1031 = vadd.f32 %v1029, %v982
        %v1032 = vadd.f32 %v1030, %v982
        %v1033 = vmax.f32 %v1031, 0.0
        %v1034 = vmax.f32 %v1032, 0.0
        %1035 = vrot.lane.b32.xlu0 %v937, 64
        %v1036 = vpop.permute.xlu0 %1035
        %1037 = vrot.lane.b32.xlu0 %v942, 64
        %v1038 = vpop.permute.xlu0 %1037
        %v1041 = vsel %vm945, %v1036, 0.0
        %1042 = vadd.xlane.f32.xlu0 %v1041
        %v1043 = vpop.xlane.xlu0 %1042
        %v1044 = vsel %vm945, %v1038, 0.0
        %1045 = vadd.xlane.f32.xlu0 %v1044
        %v1046 = vpop.xlane.xlu0 %1045
        %v1047 = vmul.f32 %v1043, %v952
        %v1048 = vmul.f32 %v1046, %v952
        %v1049 = vsub.f32 %v937, %v1047
        %v1050 = vsub.f32 %v942, %v1048
        %v1051 = vmul.f32 %v1049, %v1049
        %v1052 = vmul.f32 %v1050, %v1050
        %1055 = vrot.lane.b32.xlu0 %v1051, 64
        %v1056 = vpop.permute.xlu0 %1055
        %1057 = vrot.lane.b32.xlu0 %v1052, 64
        %v1058 = vpop.permute.xlu0 %1057
        %v1061 = vsel %vm945, %v1056, 0.0
        %1062 = vadd.xlane.f32.xlu0 %v1061
        %v1063 = vpop.xlane.xlu0 %1062
        %v1064 = vsel %vm945, %v1058, 0.0
        %1065 = vadd.xlane.f32.xlu0 %v1064
        %v1066 = vpop.xlane.xlu0 %1065
        %v1067 = vmul.f32 %v1063, %v952
        %v1068 = vmul.f32 %v1066, %v952
        %v1069 = vadd.f32 %v1067, 1e-05
        %v1070 = vadd.f32 %v1068, 1e-05
        %v1071 = vrsqrt.pop %v1069
        %v1072 = vrsqrt.pop %v1070
        %v1073 = vmul.f32 %v1049, %v1071
        %v1074 = vmul.f32 %v1050, %v1072
        %v1075 = vmul.f32 %v1073, %v976
        %v1076 = vmul.f32 %v1074, %v976
        %v1077 = vadd.f32 %v1075, %v982
        %v1078 = vadd.f32 %v1076, %v982
        %v1079 = vmax.f32 %v1077, 0.0
        %v1080 = vmax.f32 %v1078, 0.0
        %v1081 = vld [vmem:[%s8] sm:$0xff]
        %v1082 = vld [vmem:[%s8 + $0x8] sm:$0xff]
        %v1083 = vld [vmem:[%s8 + $0x10] sm:$0xff]
        %v1084 = vld [vmem:[%s8 + $0x18] sm:$0xff]
        %v1085 = vld [vmem:[%s9] sm:$0x1]
        %v1087 = vlaneseq
        %v1088 = vshrl.u32 %v1087, 7
        %v1089 = vsub.s32 0, %v1088
        %v1090 = vrot.slane %v1085, %v1089
        %v1093 = vsel %vm945, %v985, 0
        %v1096 = vsel %vm945, %v986, 0
        %1098 = vmatprep.subr.mxu0 0.0
        %1099 = vmatpush1.msra.mxu0 %v1081
        %1100 = vmatprep.subr.mxu0 0.0
        %1101 = vmatpush1.msra.mxu0 %v1082
        %1102 = vmatprep.subr.mxu0 0.0
        %1103 = vmatpush1.msra.mxu0 %v1083
        %1104 = vmatprep.subr.mxu0 0.0
        %1105 = vmatpush1.msra.mxu0 %v1084
        %1106 = vmatprep.subr.mxu0 0.0
        %1107 = vmatpush1.msra.mxu0 0.0
        %1108 = vmatprep.subr.mxu0 0.0
        %1109 = vmatpush1.msra.mxu0 0.0
        %1110 = vmatprep.subr.mxu0 0.0
        %1111 = vmatpush1.msra.mxu0 0.0
        %1112 = vmatprep.subr.mxu0 0.0
        %1113 = vmatpush1.msra.mxu0 0.0
        %1114 = vmatprep.subr.mxu0 0.0
        %1115 = vmatpush1.msra.mxu0 0.0
        %1116 = vmatprep.subr.mxu0 0.0
        %1117 = vmatpush1.msra.mxu0 0.0
        %1118 = vmatprep.subr.mxu0 0.0
        %1119 = vmatpush1.msra.mxu0 0.0
        %1120 = vmatprep.subr.mxu0 0.0
        %1121 = vmatpush1.msra.mxu0 0.0
        %1122 = vmatprep.subr.mxu0 0.0
        %1123 = vmatpush1.msra.mxu0 0.0
        %1124 = vmatprep.subr.mxu0 0.0
        %1125 = vmatpush1.msra.mxu0 0.0
        %1126 = vmatprep.subr.mxu0 0.0
        %1127 = vmatpush1.msra.mxu0 0.0
        %1128 = vmatprep.subr.mxu0 0.0
        %1129 = vmatpush1.msra.mxu0 0.0
        %1130 = vmatprep.subr.mxu0 0.0
        %1131 = vmatpush1.msra.mxu0 0.0
        %1132 = vmatprep.subr.mxu0 0.0
        %1133 = vmatpush1.msra.mxu0 0.0
        %1134 = vmatprep.subr.mxu0 0.0
        %1135 = vmatpush1.msra.mxu0 0.0
        %1136 = vmatprep.subr.mxu0 0.0
        %1137 = vmatpush1.msra.mxu0 0.0
        %1138 = vmatprep.subr.mxu0 0.0
        %1139 = vmatpush1.msra.mxu0 0.0
        %1140 = vmatprep.subr.mxu0 0.0
        %1141 = vmatpush1.msra.mxu0 0.0
        %1142 = vmatprep.subr.mxu0 0.0
        %1143 = vmatpush1.msra.mxu0 0.0
        %1144 = vmatprep.subr.mxu0 0.0
        %1145 = vmatpush1.msra.mxu0 0.0
        %1146 = vmatprep.subr.mxu0 0.0
        %1147 = vmatpush1.msra.mxu0 0.0
        %1148 = vmatprep.subr.mxu0 0.0
        %1149 = vmatpush1.msra.mxu0 0.0
        %1150 = vmatprep.subr.mxu0 0.0
        %1151 = vmatpush1.msra.mxu0 0.0
        %1152 = vmatprep.subr.mxu0 0.0
        %1153 = vmatpush1.msra.mxu0 0.0
        %1154 = vmatprep.subr.mxu0 0.0
        %1155 = vmatpush1.msra.mxu0 0.0
        %1156 = vmatprep.subr.mxu0 0.0
        %1157 = vmatpush1.msra.mxu0 0.0
        %1158 = vmatprep.subr.mxu0 0.0
        %1159 = vmatpush1.msra.mxu0 0.0
        %1160 = vmatprep.subr.mxu0 0.0
        %1161 = vmatpush1.msra.mxu0 0.0
        %1162 = vmatprep.mubr.f32.mxu0 0.0
        %1163 = vmatmul.mubr.f32.gmra.mrb[0].mxu0 %v1093
        %v1164 = vpop.f32.mrb[0].mxu0
        %v1165 = vadd.f32 %v1090, %v1164
        %v1166 = vpop.f32.mrb[0].mxu0
        %1167 = vmatprep.mubr.f32.mxu0 0.0
        %1168 = vmatmul.mubr.f32.gmra.mrb[0].mxu0 %v1096
        %v1169 = vpop.f32.mrb[0].mxu0
        %v1170 = vadd.f32 %v1090, %v1169
        %v1171 = vpop.f32.mrb[0].mxu0
        %1172 = vdwg.mxu0
        %1175 = vrot.lane.b32.xlu0 %v1033, 96
        %v1176 = vpop.permute.xlu0 %1175
        %1177 = vrot.lane.b32.xlu0 %v1034, 96
        %v1178 = vpop.permute.xlu0 %1177
        %1183 = vrot.lane.b32.xlu0 %v1081, 96
        %v1184 = vpop.permute.xlu0 %1183
        %1185 = vrot.lane.b32.xlu0 %v1082, 96
        %v1186 = vpop.permute.xlu0 %1185
        %1187 = vrot.lane.b32.xlu0 %v1083, 96
        %v1188 = vpop.permute.xlu0 %1187
        %1189 = vrot.lane.b32.xlu0 %v1084, 96
        %v1190 = vpop.permute.xlu0 %1189
        %1195 = vrot.lane.b32.xlu0 %v1090, 96
        %v1196 = vpop.permute.xlu0 %1195
        %v1198 = vsel %vm945, %v1176, 0
        %v1200 = vsel %vm945, %v1178, 0
        %1202 = vmatprep.subr.mxu0 0.0
        %1203 = vmatpush1.msra.mxu0 %v1184
        %1204 = vmatprep.subr.mxu0 0.0
        %1205 = vmatpush1.msra.mxu0 %v1186
        %1206 = vmatprep.subr.mxu0 0.0
        %1207 = vmatpush1.msra.mxu0 %v1188
        %1208 = vmatprep.subr.mxu0 0.0
        %1209 = vmatpush1.msra.mxu0 %v1190
        %1210 = vmatprep.subr.mxu0 0.0
        %1211 = vmatpush1.msra.mxu0 0.0
        %1212 = vmatprep.subr.mxu0 0.0
        %1213 = vmatpush1.msra.mxu0 0.0
        %1214 = vmatprep.subr.mxu0 0.0
        %1215 = vmatpush1.msra.mxu0 0.0
        %1216 = vmatprep.subr.mxu0 0.0
        %1217 = vmatpush1.msra.mxu0 0.0
        %1218 = vmatprep.subr.mxu0 0.0
        %1219 = vmatpush1.msra.mxu0 0.0
        %1220 = vmatprep.subr.mxu0 0.0
        %1221 = vmatpush1.msra.mxu0 0.0
        %1222 = vmatprep.subr.mxu0 0.0
        %1223 = vmatpush1.msra.mxu0 0.0
        %1224 = vmatprep.subr.mxu0 0.0
        %1225 = vmatpush1.msra.mxu0 0.0
        %1226 = vmatprep.subr.mxu0 0.0
        %1227 = vmatpush1.msra.mxu0 0.0
        %1228 = vmatprep.subr.mxu0 0.0
        %1229 = vmatpush1.msra.mxu0 0.0
        %1230 = vmatprep.subr.mxu0 0.0
        %1231 = vmatpush1.msra.mxu0 0.0
        %1232 = vmatprep.subr.mxu0 0.0
        %1233 = vmatpush1.msra.mxu0 0.0
        %1234 = vmatprep.subr.mxu0 0.0
        %1235 = vmatpush1.msra.mxu0 0.0
        %1236 = vmatprep.subr.mxu0 0.0
        %1237 = vmatpush1.msra.mxu0 0.0
        %1238 = vmatprep.subr.mxu0 0.0
        %1239 = vmatpush1.msra.mxu0 0.0
        %1240 = vmatprep.subr.mxu0 0.0
        %1241 = vmatpush1.msra.mxu0 0.0
        %1242 = vmatprep.subr.mxu0 0.0
        %1243 = vmatpush1.msra.mxu0 0.0
        %1244 = vmatprep.subr.mxu0 0.0
        %1245 = vmatpush1.msra.mxu0 0.0
        %1246 = vmatprep.subr.mxu0 0.0
        %1247 = vmatpush1.msra.mxu0 0.0
        %1248 = vmatprep.subr.mxu0 0.0
        %1249 = vmatpush1.msra.mxu0 0.0
        %1250 = vmatprep.subr.mxu0 0.0
        %1251 = vmatpush1.msra.mxu0 0.0
        %1252 = vmatprep.subr.mxu0 0.0
        %1253 = vmatpush1.msra.mxu0 0.0
        %1254 = vmatprep.subr.mxu0 0.0
        %1255 = vmatpush1.msra.mxu0 0.0
        %1256 = vmatprep.subr.mxu0 0.0
        %1257 = vmatpush1.msra.mxu0 0.0
        %1258 = vmatprep.subr.mxu0 0.0
        %1259 = vmatpush1.msra.mxu0 0.0
        %1260 = vmatprep.subr.mxu0 0.0
        %1261 = vmatpush1.msra.mxu0 0.0
        %1262 = vmatprep.subr.mxu0 0.0
        %1263 = vmatpush1.msra.mxu0 0.0
        %1264 = vmatprep.subr.mxu0 0.0
        %1265 = vmatpush1.msra.mxu0 0.0
        %1266 = vmatprep.mubr.f32.mxu0 0.0
        %1267 = vmatmul.mubr.f32.gmra.mrb[0].mxu0 %v1198
        %v1268 = vpop.f32.mrb[0].mxu0
        %v1269 = vadd.f32 %v1196, %v1268
        %v1270 = vpop.f32.mrb[0].mxu0
        %1271 = vmatprep.mubr.f32.mxu0 0.0
        %1272 = vmatmul.mubr.f32.gmra.mrb[0].mxu0 %v1200
        %v1273 = vpop.f32.mrb[0].mxu0
        %v1274 = vadd.f32 %v1196, %v1273
        %v1275 = vpop.f32.mrb[0].mxu0
        %1276 = vdwg.mxu0
        %1279 = vrot.lane.b32.xlu0 %v1079, 64
        %v1280 = vpop.permute.xlu0 %1279
        %1281 = vrot.lane.b32.xlu0 %v1080, 64
        %v1282 = vpop.permute.xlu0 %1281
        %1283 = vrot.lane.b32.xlu0 %v1081, 64
        %v1284 = vpop.permute.xlu0 %1283
        %1285 = vrot.lane.b32.xlu0 %v1082, 64
        %v1286 = vpop.permute.xlu0 %1285
        %1287 = vrot.lane.b32.xlu0 %v1083, 64
        %v1288 = vpop.permute.xlu0 %1287
        %1289 = vrot.lane.b32.xlu0 %v1084, 64
        %v1290 = vpop.permute.xlu0 %1289
        %1295 = vrot.lane.b32.xlu0 %v1090, 64
        %v1296 = vpop.permute.xlu0 %1295
        %v1298 = vsel %vm945, %v1280, 0
        %v1300 = vsel %vm945, %v1282, 0
        %1302 = vmatprep.subr.mxu0 0.0
        %1303 = vmatpush1.msra.mxu0 %v1284
        %1304 = vmatprep.subr.mxu0 0.0
        %1305 = vmatpush1.msra.mxu0 %v1286
        %1306 = vmatprep.subr.mxu0 0.0
        %1307 = vmatpush1.msra.mxu0 %v1288
        %1308 = vmatprep.subr.mxu0 0.0
        %1309 = vmatpush1.msra.mxu0 %v1290
        %1310 = vmatprep.subr.mxu0 0.0
        %1311 = vmatpush1.msra.mxu0 0.0
        %1312 = vmatprep.subr.mxu0 0.0
        %1313 = vmatpush1.msra.mxu0 0.0
        %1314 = vmatprep.subr.mxu0 0.0
        %1315 = vmatpush1.msra.mxu0 0.0
        %1316 = vmatprep.subr.mxu0 0.0
        %1317 = vmatpush1.msra.mxu0 0.0
        %1318 = vmatprep.subr.mxu0 0.0
        %1319 = vmatpush1.msra.mxu0 0.0
        %1320 = vmatprep.subr.mxu0 0.0
        %1321 = vmatpush1.msra.mxu0 0.0
        %1322 = vmatprep.subr.mxu0 0.0
        %1323 = vmatpush1.msra.mxu0 0.0
        %1324 = vmatprep.subr.mxu0 0.0
        %1325 = vmatpush1.msra.mxu0 0.0
        %1326 = vmatprep.subr.mxu0 0.0
        %1327 = vmatpush1.msra.mxu0 0.0
        %1328 = vmatprep.subr.mxu0 0.0
        %1329 = vmatpush1.msra.mxu0 0.0
        %1330 = vmatprep.subr.mxu0 0.0
        %1331 = vmatpush1.msra.mxu0 0.0
        %1332 = vmatprep.subr.mxu0 0.0
        %1333 = vmatpush1.msra.mxu0 0.0
        %1334 = vmatprep.subr.mxu0 0.0
        %1335 = vmatpush1.msra.mxu0 0.0
        %1336 = vmatprep.subr.mxu0 0.0
        %1337 = vmatpush1.msra.mxu0 0.0
        %1338 = vmatprep.subr.mxu0 0.0
        %1339 = vmatpush1.msra.mxu0 0.0
        %1340 = vmatprep.subr.mxu0 0.0
        %1341 = vmatpush1.msra.mxu0 0.0
        %1342 = vmatprep.subr.mxu0 0.0
        %1343 = vmatpush1.msra.mxu0 0.0
        %1344 = vmatprep.subr.mxu0 0.0
        %1345 = vmatpush1.msra.mxu0 0.0
        %1346 = vmatprep.subr.mxu0 0.0
        %1347 = vmatpush1.msra.mxu0 0.0
        %1348 = vmatprep.subr.mxu0 0.0
        %1349 = vmatpush1.msra.mxu0 0.0
        %1350 = vmatprep.subr.mxu0 0.0
        %1351 = vmatpush1.msra.mxu0 0.0
        %1352 = vmatprep.subr.mxu0 0.0
        %1353 = vmatpush1.msra.mxu0 0.0
        %1354 = vmatprep.subr.mxu0 0.0
        %1355 = vmatpush1.msra.mxu0 0.0
        %1356 = vmatprep.subr.mxu0 0.0
        %1357 = vmatpush1.msra.mxu0 0.0
        %1358 = vmatprep.subr.mxu0 0.0
        %1359 = vmatpush1.msra.mxu0 0.0
        %1360 = vmatprep.subr.mxu0 0.0
        %1361 = vmatpush1.msra.mxu0 0.0
        %1362 = vmatprep.subr.mxu0 0.0
        %1363 = vmatpush1.msra.mxu0 0.0
        %1364 = vmatprep.subr.mxu0 0.0
        %1365 = vmatpush1.msra.mxu0 0.0
        %1366 = vmatprep.mubr.f32.mxu0 0.0
        %1367 = vmatmul.mubr.f32.gmra.mrb[0].mxu0 %v1298
        %v1368 = vpop.f32.mrb[0].mxu0
        %v1369 = vadd.f32 %v1296, %v1368
        %v1370 = vpop.f32.mrb[0].mxu0
        %1371 = vmatprep.mubr.f32.mxu0 0.0
        %1372 = vmatmul.mubr.f32.gmra.mrb[0].mxu0 %v1300
        %v1373 = vpop.f32.mrb[0].mxu0
        %v1374 = vadd.f32 %v1296, %v1373
        %v1375 = vpop.f32.mrb[0].mxu0
        %1376 = vdwg.mxu0
        %v1377 = vld [vmem:[%s612] sm:$0x1]
        %v1378 = vlaneseq
        %v1379 = vshrl.u32 %v1378, 7
        %s1380 = smul.u32 %s40, 8
        %v1381 = vstv %s1380
        %v1382 = vadd.s32 %v1379, %v1381
        %v1383 = vlaneseq
        %v1384 = vshrl.u32 %v1383, 7
        %v1385 = vsub.s32 0, %v1384
        %v1386 = vrot.slane %v1377, %v1385
        %vm1387 = vcmp.eq.s32.totalorder %v1382, %v1386
        %v1388 = vld [vmem:[#allocation2] sm:$0xff]
        %v1389 = vld [vmem:[#allocation3] sm:$0xff]
        %vm1390 = vcmask 64512
        %v1392 = vsel %vm1390, %v1388, 0
        %v1395 = vsel %vm1390, %v1165, 0
        %v1398 = vsel %vm1390, %v1170, 0
        %1400 = vmatprep.subr.mxu0 0.0
        %1401 = vmatpush1.xpose.msra.mxu0 %v1395
        %1402 = vmatprep.subr.mxu0 0.0
        %1403 = vmatpush1.xpose.msra.mxu0 %v1398
        %1404 = vmatprep.subr.mxu0 0.0
        %1405 = vmatpush1.xpose.msra.mxu0 0.0
        %1406 = vmatprep.subr.mxu0 0.0
        %1407 = vmatpush1.xpose.msra.mxu0 0.0
        %1408 = vmatprep.subr.mxu0 0.0
        %1409 = vmatpush1.xpose.msra.mxu0 0.0
        %1410 = vmatprep.subr.mxu0 0.0
        %1411 = vmatpush1.xpose.msra.mxu0 0.0
        %1412 = vmatprep.subr.mxu0 0.0
        %1413 = vmatpush1.xpose.msra.mxu0 0.0
        %1414 = vmatprep.subr.mxu0 0.0
        %1415 = vmatpush1.xpose.msra.mxu0 0.0
        %1416 = vmatprep.subr.mxu0 0.0
        %1417 = vmatpush1.xpose.msra.mxu0 0.0
        %1418 = vmatprep.subr.mxu0 0.0
        %1419 = vmatpush1.xpose.msra.mxu0 0.0
        %1420 = vmatprep.subr.mxu0 0.0
        %1421 = vmatpush1.xpose.msra.mxu0 0.0
        %1422 = vmatprep.subr.mxu0 0.0
        %1423 = vmatpush1.xpose.msra.mxu0 0.0
        %1424 = vmatprep.subr.mxu0 0.0
        %1425 = vmatpush1.xpose.msra.mxu0 0.0
        %1426 = vmatprep.subr.mxu0 0.0
        %1427 = vmatpush1.xpose.msra.mxu0 0.0
        %1428 = vmatprep.subr.mxu0 0.0
        %1429 = vmatpush1.xpose.msra.mxu0 0.0
        %1430 = vmatprep.subr.mxu0 0.0
        %1431 = vmatpush1.xpose.msra.mxu0 0.0
        %1432 = vmatprep.subr.mxu0 0.0
        %1433 = vmatpush1.xpose.msra.mxu0 0.0
        %1434 = vmatprep.subr.mxu0 0.0
        %1435 = vmatpush1.xpose.msra.mxu0 0.0
        %1436 = vmatprep.subr.mxu0 0.0
        %1437 = vmatpush1.xpose.msra.mxu0 0.0
        %1438 = vmatprep.subr.mxu0 0.0
        %1439 = vmatpush1.xpose.msra.mxu0 0.0
        %1440 = vmatprep.subr.mxu0 0.0
        %1441 = vmatpush1.xpose.msra.mxu0 0.0
        %1442 = vmatprep.subr.mxu0 0.0
        %1443 = vmatpush1.xpose.msra.mxu0 0.0
        %1444 = vmatprep.subr.mxu0 0.0
        %1445 = vmatpush1.xpose.msra.mxu0 0.0
        %1446 = vmatprep.subr.mxu0 0.0
        %1447 = vmatpush1.xpose.msra.mxu0 0.0
        %1448 = vmatprep.subr.mxu0 0.0
        %1449 = vmatpush1.xpose.msra.mxu0 0.0
        %1450 = vmatprep.subr.mxu0 0.0
        %1451 = vmatpush1.xpose.msra.mxu0 0.0
        %1452 = vmatprep.subr.mxu0 0.0
        %1453 = vmatpush1.xpose.msra.mxu0 0.0
        %1454 = vmatprep.subr.mxu0 0.0
        %1455 = vmatpush1.xpose.msra.mxu0 0.0
        %1456 = vmatprep.subr.mxu0 0.0
        %1457 = vmatpush1.xpose.msra.mxu0 0.0
        %1458 = vmatprep.subr.mxu0 0.0
        %1459 = vmatpush1.xpose.msra.mxu0 0.0
        %1460 = vmatprep.subr.mxu0 0.0
        %1461 = vmatpush1.xpose.msra.mxu0 0.0
        %1462 = vmatprep.subr.mxu0 0.0
        %1463 = vmatpush1.xpose.msra.mxu0 0.0
        %1464 = vmatprep.mubr.f32.mxu0 0.0
        %1465 = vmatmul.mubr.f32.gmra.mrb[0].mxu0 %v1392
        %v1466 = vpop.f32.mrb[0].mxu0
        %v1467 = vadd.f32 0.0, %v1466
        %v1468 = vpop.f32.mrb[0].mxu0
        %1469 = vdwg.mxu0
        %v1470 = vsel %vm1387, %v1467, -1e+30
        %vm1471 = vcmask 130048
        %v1472 = vsel %vm1471, %v1470, -inf
        %1473 = vmax.xlane.f32.xlu0 %v1472
        %v1474 = vpop.xlane.xlu0 %1473
        %v1475 = vmax.f32 %v1389, %v1474
        %1476 = vrot.lane.b32.xlu0 %v1388, 120
        %v1477 = vpop.permute.xlu0 %1476
        %1478 = vrot.lane.b32.xlu0 %v1165, 120
        %v1479 = vpop.permute.xlu0 %1478
        %1480 = vrot.lane.b32.xlu0 %v1170, 120
        %v1481 = vpop.permute.xlu0 %1480
        %v1482 = vsel %vm1390, %v1477, 0
        %v1484 = vsel %vm1390, %v1479, 0
        %v1486 = vsel %vm1390, %v1481, 0
        %1488 = vmatprep.subr.mxu0 0.0
        %1489 = vmatpush1.xpose.msra.mxu0 %v1484
        %1490 = vmatprep.subr.mxu0 0.0
        %1491 = vmatpush1.xpose.msra.mxu0 %v1486
        %1492 = vmatprep.subr.mxu0 0.0
        %1493 = vmatpush1.xpose.msra.mxu0 0.0
        %1494 = vmatprep.subr.mxu0 0.0
        %1495 = vmatpush1.xpose.msra.mxu0 0.0
        %1496 = vmatprep.subr.mxu0 0.0
        %1497 = vmatpush1.xpose.msra.mxu0 0.0
        %1498 = vmatprep.subr.mxu0 0.0
        %1499 = vmatpush1.xpose.msra.mxu0 0.0
        %1500 = vmatprep.subr.mxu0 0.0
        %1501 = vmatpush1.xpose.msra.mxu0 0.0
        %1502 = vmatprep.subr.mxu0 0.0
        %1503 = vmatpush1.xpose.msra.mxu0 0.0
        %1504 = vmatprep.subr.mxu0 0.0
        %1505 = vmatpush1.xpose.msra.mxu0 0.0
        %1506 = vmatprep.subr.mxu0 0.0
        %1507 = vmatpush1.xpose.msra.mxu0 0.0
        %1508 = vmatprep.subr.mxu0 0.0
        %1509 = vmatpush1.xpose.msra.mxu0 0.0
        %1510 = vmatprep.subr.mxu0 0.0
        %1511 = vmatpush1.xpose.msra.mxu0 0.0
        %1512 = vmatprep.subr.mxu0 0.0
        %1513 = vmatpush1.xpose.msra.mxu0 0.0
        %1514 = vmatprep.subr.mxu0 0.0
        %1515 = vmatpush1.xpose.msra.mxu0 0.0
        %1516 = vmatprep.subr.mxu0 0.0
        %1517 = vmatpush1.xpose.msra.mxu0 0.0
        %1518 = vmatprep.subr.mxu0 0.0
        %1519 = vmatpush1.xpose.msra.mxu0 0.0
        %1520 = vmatprep.subr.mxu0 0.0
        %1521 = vmatpush1.xpose.msra.mxu0 0.0
        %1522 = vmatprep.subr.mxu0 0.0
        %1523 = vmatpush1.xpose.msra.mxu0 0.0
        %1524 = vmatprep.subr.mxu0 0.0
        %1525 = vmatpush1.xpose.msra.mxu0 0.0
        %1526 = vmatprep.subr.mxu0 0.0
        %1527 = vmatpush1.xpose.msra.mxu0 0.0
        %1528 = vmatprep.subr.mxu0 0.0
        %1529 = vmatpush1.xpose.msra.mxu0 0.0
        %1530 = vmatprep.subr.mxu0 0.0
        %1531 = vmatpush1.xpose.msra.mxu0 0.0
        %1532 = vmatprep.subr.mxu0 0.0
        %1533 = vmatpush1.xpose.msra.mxu0 0.0
        %1534 = vmatprep.subr.mxu0 0.0
        %1535 = vmatpush1.xpose.msra.mxu0 0.0
        %1536 = vmatprep.subr.mxu0 0.0
        %1537 = vmatpush1.xpose.msra.mxu0 0.0
        %1538 = vmatprep.subr.mxu0 0.0
        %1539 = vmatpush1.xpose.msra.mxu0 0.0
        %1540 = vmatprep.subr.mxu0 0.0
        %1541 = vmatpush1.xpose.msra.mxu0 0.0
        %1542 = vmatprep.subr.mxu0 0.0
        %1543 = vmatpush1.xpose.msra.mxu0 0.0
        %1544 = vmatprep.subr.mxu0 0.0
        %1545 = vmatpush1.xpose.msra.mxu0 0.0
        %1546 = vmatprep.subr.mxu0 0.0
        %1547 = vmatpush1.xpose.msra.mxu0 0.0
        %1548 = vmatprep.subr.mxu0 0.0
        %1549 = vmatpush1.xpose.msra.mxu0 0.0
        %1550 = vmatprep.subr.mxu0 0.0
        %1551 = vmatpush1.xpose.msra.mxu0 0.0
        %1552 = vmatprep.mubr.f32.mxu0 0.0
        %1553 = vmatmul.mubr.f32.gmra.mrb[0].mxu0 %v1482
        %v1554 = vpop.f32.mrb[0].mxu0
        %v1555 = vadd.f32 0.0, %v1554
        %v1556 = vpop.f32.mrb[0].mxu0
        %1557 = vdwg.mxu0
        %v1558 = vsel %vm1387, %v1555, -1e+30
        %v1559 = vsel %vm1471, %v1558, -inf
        %1560 = vmax.xlane.f32.xlu0 %v1559
        %v1561 = vpop.xlane.xlu0 %1560
        %v1562 = vmax.f32 %v1475, %v1561
        %1563 = vrot.lane.b32.xlu0 %v1388, 112
        %v1564 = vpop.permute.xlu0 %1563
        %1565 = vrot.lane.b32.xlu0 %v1165, 112
        %v1566 = vpop.permute.xlu0 %1565
        %1567 = vrot.lane.b32.xlu0 %v1170, 112
        %v1568 = vpop.permute.xlu0 %1567
        %v1569 = vsel %vm1390, %v1564, 0
        %v1571 = vsel %vm1390, %v1566, 0
        %v1573 = vsel %vm1390, %v1568, 0
        %1575 = vmatprep.subr.mxu0 0.0
        %1576 = vmatpush1.xpose.msra.mxu0 %v1571
        %1577 = vmatprep.subr.mxu0 0.0
        %1578 = vmatpush1.xpose.msra.mxu0 %v1573
        %1579 = vmatprep.subr.mxu0 0.0
        %1580 = vmatpush1.xpose.msra.mxu0 0.0
        %1581 = vmatprep.subr.mxu0 0.0
        %1582 = vmatpush1.xpose.msra.mxu0 0.0
        %1583 = vmatprep.subr.mxu0 0.0
        %1584 = vmatpush1.xpose.msra.mxu0 0.0
        %1585 = vmatprep.subr.mxu0 0.0
        %1586 = vmatpush1.xpose.msra.mxu0 0.0
        %1587 = vmatprep.subr.mxu0 0.0
        %1588 = vmatpush1.xpose.msra.mxu0 0.0
        %1589 = vmatprep.subr.mxu0 0.0
        %1590 = vmatpush1.xpose.msra.mxu0 0.0
        %1591 = vmatprep.subr.mxu0 0.0
        %1592 = vmatpush1.xpose.msra.mxu0 0.0
        %1593 = vmatprep.subr.mxu0 0.0
        %1594 = vmatpush1.xpose.msra.mxu0 0.0
        %1595 = vmatprep.subr.mxu0 0.0
        %1596 = vmatpush1.xpose.msra.mxu0 0.0
        %1597 = vmatprep.subr.mxu0 0.0
        %1598 = vmatpush1.xpose.msra.mxu0 0.0
        %1599 = vmatprep.subr.mxu0 0.0
        %1600 = vmatpush1.xpose.msra.mxu0 0.0
        %1601 = vmatprep.subr.mxu0 0.0
        %1602 = vmatpush1.xpose.msra.mxu0 0.0
        %1603 = vmatprep.subr.mxu0 0.0
        %1604 = vmatpush1.xpose.msra.mxu0 0.0
        %1605 = vmatprep.subr.mxu0 0.0
        %1606 = vmatpush1.xpose.msra.mxu0 0.0
        %1607 = vmatprep.subr.mxu0 0.0
        %1608 = vmatpush1.xpose.msra.mxu0 0.0
        %1609 = vmatprep.subr.mxu0 0.0
        %1610 = vmatpush1.xpose.msra.mxu0 0.0
        %1611 = vmatprep.subr.mxu0 0.0
        %1612 = vmatpush1.xpose.msra.mxu0 0.0
        %1613 = vmatprep.subr.mxu0 0.0
        %1614 = vmatpush1.xpose.msra.mxu0 0.0
        %1615 = vmatprep.subr.mxu0 0.0
        %1616 = vmatpush1.xpose.msra.mxu0 0.0
        %1617 = vmatprep.subr.mxu0 0.0
        %1618 = vmatpush1.xpose.msra.mxu0 0.0
        %1619 = vmatprep.subr.mxu0 0.0
        %1620 = vmatpush1.xpose.msra.mxu0 0.0
        %1621 = vmatprep.subr.mxu0 0.0
        %1622 = vmatpush1.xpose.msra.mxu0 0.0
        %1623 = vmatprep.subr.mxu0 0.0
        %1624 = vmatpush1.xpose.msra.mxu0 0.0
        %1625 = vmatprep.subr.mxu0 0.0
        %1626 = vmatpush1.xpose.msra.mxu0 0.0
        %1627 = vmatprep.subr.mxu0 0.0
        %1628 = vmatpush1.xpose.msra.mxu0 0.0
        %1629 = vmatprep.subr.mxu0 0.0
        %1630 = vmatpush1.xpose.msra.mxu0 0.0
        %1631 = vmatprep.subr.mxu0 0.0
        %1632 = vmatpush1.xpose.msra.mxu0 0.0
        %1633 = vmatprep.subr.mxu0 0.0
        %1634 = vmatpush1.xpose.msra.mxu0 0.0
        %1635 = vmatprep.subr.mxu0 0.0
        %1636 = vmatpush1.xpose.msra.mxu0 0.0
        %1637 = vmatprep.subr.mxu0 0.0
        %1638 = vmatpush1.xpose.msra.mxu0 0.0
        %1639 = vmatprep.mubr.f32.mxu0 0.0
        %1640 = vmatmul.mubr.f32.gmra.mrb[0].mxu0 %v1569
        %v1641 = vpop.f32.mrb[0].mxu0
        %v1642 = vadd.f32 0.0, %v1641
        %v1643 = vpop.f32.mrb[0].mxu0
        %1644 = vdwg.mxu0
        %v1645 = vsel %vm1387, %v1642, -1e+30
        %v1646 = vsel %vm1471, %v1645, -inf
        %1647 = vmax.xlane.f32.xlu0 %v1646
        %v1648 = vpop.xlane.xlu0 %1647
        %v1649 = vmax.f32 %v1562, %v1648
        %1650 = vrot.lane.b32.xlu0 %v1388, 104
        %v1651 = vpop.permute.xlu0 %1650
        %1652 = vrot.lane.b32.xlu0 %v1165, 104
        %v1653 = vpop.permute.xlu0 %1652
        %1654 = vrot.lane.b32.xlu0 %v1170, 104
        %v1655 = vpop.permute.xlu0 %1654
        %v1656 = vsel %vm1390, %v1651, 0
        %v1658 = vsel %vm1390, %v1653, 0
        %v1660 = vsel %vm1390, %v1655, 0
        %1662 = vmatprep.subr.mxu0 0.0
        %1663 = vmatpush1.xpose.msra.mxu0 %v1658
        %1664 = vmatprep.subr.mxu0 0.0
        %1665 = vmatpush1.xpose.msra.mxu0 %v1660
        %1666 = vmatprep.subr.mxu0 0.0
        %1667 = vmatpush1.xpose.msra.mxu0 0.0
        %1668 = vmatprep.subr.mxu0 0.0
        %1669 = vmatpush1.xpose.msra.mxu0 0.0
        %1670 = vmatprep.subr.mxu0 0.0
        %1671 = vmatpush1.xpose.msra.mxu0 0.0
        %1672 = vmatprep.subr.mxu0 0.0
        %1673 = vmatpush1.xpose.msra.mxu0 0.0
        %1674 = vmatprep.subr.mxu0 0.0
        %1675 = vmatpush1.xpose.msra.mxu0 0.0
        %1676 = vmatprep.subr.mxu0 0.0
        %1677 = vmatpush1.xpose.msra.mxu0 0.0
        %1678 = vmatprep.subr.mxu0 0.0
        %1679 = vmatpush1.xpose.msra.mxu0 0.0
        %1680 = vmatprep.subr.mxu0 0.0
        %1681 = vmatpush1.xpose.msra.mxu0 0.0
        %1682 = vmatprep.subr.mxu0 0.0
        %1683 = vmatpush1.xpose.msra.mxu0 0.0
        %1684 = vmatprep.subr.mxu0 0.0
        %1685 = vmatpush1.xpose.msra.mxu0 0.0
        %1686 = vmatprep.subr.mxu0 0.0
        %1687 = vmatpush1.xpose.msra.mxu0 0.0
        %1688 = vmatprep.subr.mxu0 0.0
        %1689 = vmatpush1.xpose.msra.mxu0 0.0
        %1690 = vmatprep.subr.mxu0 0.0
        %1691 = vmatpush1.xpose.msra.mxu0 0.0
        %1692 = vmatprep.subr.mxu0 0.0
        %1693 = vmatpush1.xpose.msra.mxu0 0.0
        %1694 = vmatprep.subr.mxu0 0.0
        %1695 = vmatpush1.xpose.msra.mxu0 0.0
        %1696 = vmatprep.subr.mxu0 0.0
        %1697 = vmatpush1.xpose.msra.mxu0 0.0
        %1698 = vmatprep.subr.mxu0 0.0
        %1699 = vmatpush1.xpose.msra.mxu0 0.0
        %1700 = vmatprep.subr.mxu0 0.0
        %1701 = vmatpush1.xpose.msra.mxu0 0.0
        %1702 = vmatprep.subr.mxu0 0.0
        %1703 = vmatpush1.xpose.msra.mxu0 0.0
        %1704 = vmatprep.subr.mxu0 0.0
        %1705 = vmatpush1.xpose.msra.mxu0 0.0
        %1706 = vmatprep.subr.mxu0 0.0
        %1707 = vmatpush1.xpose.msra.mxu0 0.0
        %1708 = vmatprep.subr.mxu0 0.0
        %1709 = vmatpush1.xpose.msra.mxu0 0.0
        %1710 = vmatprep.subr.mxu0 0.0
        %1711 = vmatpush1.xpose.msra.mxu0 0.0
        %1712 = vmatprep.subr.mxu0 0.0
        %1713 = vmatpush1.xpose.msra.mxu0 0.0
        %1714 = vmatprep.subr.mxu0 0.0
        %1715 = vmatpush1.xpose.msra.mxu0 0.0
        %1716 = vmatprep.subr.mxu0 0.0
        %1717 = vmatpush1.xpose.msra.mxu0 0.0
        %1718 = vmatprep.subr.mxu0 0.0
        %1719 = vmatpush1.xpose.msra.mxu0 0.0
        %1720 = vmatprep.subr.mxu0 0.0
        %1721 = vmatpush1.xpose.msra.mxu0 0.0
        %1722 = vmatprep.subr.mxu0 0.0
        %1723 = vmatpush1.xpose.msra.mxu0 0.0
        %1724 = vmatprep.subr.mxu0 0.0
        %1725 = vmatpush1.xpose.msra.mxu0 0.0
        %1726 = vmatprep.mubr.f32.mxu0 0.0
        %1727 = vmatmul.mubr.f32.gmra.mrb[0].mxu0 %v1656
        %v1728 = vpop.f32.mrb[0].mxu0
        %v1729 = vadd.f32 0.0, %v1728
        %v1730 = vpop.f32.mrb[0].mxu0
        %1731 = vdwg.mxu0
        %v1732 = vsel %vm1387, %v1729, -1e+30
        %v1733 = vsel %vm1471, %v1732, -inf
        %1734 = vmax.xlane.f32.xlu0 %v1733
        %v1735 = vpop.xlane.xlu0 %1734
        %v1736 = vmax.f32 %v1649, %v1735
        %v1737 = vsub.f32 %v1389, %v1736
        %v1738 = vmul.f32 %v1737, 1.442695
        %v1739 = vpow.pop %v1738
        %1741 = vset.pattern.permute.xlu0 0
        %1742 = vperm.xlu0 %1741, %v1736
        %v1743 = vpop.permute.xlu0 %1742
        %v1745 = vsub.f32 %v1470, %v1743
        %v1746 = vmul.f32 %v1745, 1.442695
        %v1747 = vpow.pop %v1746
        %v1748 = vsel %vm1387, %v1747, 0.0
        %v1749 = vsel %vm1471, %v1748, 0.0
        %1750 = vadd.xlane.f32.xlu0 %v1749
        %v1751 = vpop.xlane.xlu0 %1750
        %v1752 = vpack.c.bf16 %v1748, %v1748
        %v1753 = vpack.c.bf16 %v1274, %v1269
        %v1755 = vsel %vm1471, %v1752, 0
        %1757 = vmatprep.subr.bf16.mxu0 0
        %1758 = vmatpush1.bf16.msra.mxu0 %v1753
        %1759 = vmatprep.subr.bf16.mxu0 0
        %1760 = vmatpush1.bf16.msra.mxu0 0
        %1761 = vmatprep.subr.bf16.mxu0 0
        %1762 = vmatpush1.bf16.msra.mxu0 0
        %1763 = vmatprep.subr.bf16.mxu0 0
        %1764 = vmatpush1.bf16.msra.mxu0 0
        %1765 = vmatprep.subr.bf16.mxu0 0
        %1766 = vmatpush1.bf16.msra.mxu0 0
        %1767 = vmatprep.subr.bf16.mxu0 0
        %1768 = vmatpush1.bf16.msra.mxu0 0
        %1769 = vmatprep.subr.bf16.mxu0 0
        %1770 = vmatpush1.bf16.msra.mxu0 0
        %1771 = vmatprep.subr.bf16.mxu0 0
        %1772 = vmatpush1.bf16.msra.mxu0 0
        %1773 = vmatprep.subr.bf16.mxu0 0
        %1774 = vmatpush1.bf16.msra.mxu0 0
        %1775 = vmatprep.subr.bf16.mxu0 0
        %1776 = vmatpush1.bf16.msra.mxu0 0
        %1777 = vmatprep.subr.bf16.mxu0 0
        %1778 = vmatpush1.bf16.msra.mxu0 0
        %1779 = vmatprep.subr.bf16.mxu0 0
        %1780 = vmatpush1.bf16.msra.mxu0 0
        %1781 = vmatprep.subr.bf16.mxu0 0
        %1782 = vmatpush1.bf16.msra.mxu0 0
        %1783 = vmatprep.subr.bf16.mxu0 0
        %1784 = vmatpush1.bf16.msra.mxu0 0
        %1785 = vmatprep.subr.bf16.mxu0 0
        %1786 = vmatpush1.bf16.msra.mxu0 0
        %1787 = vmatprep.subr.bf16.mxu0 0
        %1788 = vmatpush1.bf16.msra.mxu0 0
        %1789 = vmatprep.mubr.bf16.mxu0 0
        %1790 = vmatmul.mubr.bf16.gmra.mrb[0].mxu0 %v1755
        %v1791 = vpop.f32.mrb[0].mxu0
        %v1792 = vadd.f32 0.0, %v1791
        %v1793 = vpop.f32.mrb[0].mxu0
        %v1794 = vpop.f32.mrb[0].mxu0
        %v1795 = vpop.f32.mrb[0].mxu0
        %1796 = vdwg.mxu0
        %1798 = vset.pattern.permute.xlu0 0
        %1799 = vperm.xlu0 %1798, %v1369
        %v1800 = vpop.permute.xlu0 %1799
        %1803 = vset.pattern.permute.xlu0 0
        %1804 = vperm.xlu0 %1803, %v1374
        %v1805 = vpop.permute.xlu0 %1804
        %v1807 = vmul.f32 %v1800, %v844
        %v1808 = vmul.f32 %v1805, %v845
        %v1809 = vpack.c.bf16 %v1808, %v1807
        %1811 = vrot.lane.b32.xlu0 %v1809, 48
        %v1812 = vpop.permute.xlu0 %1811
        %1814 = vmatprep.subr.bf16.mxu0 0
        %1815 = vmatpush1.bf16.msra.mxu0 %v1812
        %1816 = vmatprep.subr.bf16.mxu0 0
        %1817 = vmatpush1.bf16.msra.mxu0 0
        %1818 = vmatprep.subr.bf16.mxu0 0
        %1819 = vmatpush1.bf16.msra.mxu0 0
        %1820 = vmatprep.subr.bf16.mxu0 0
        %1821 = vmatpush1.bf16.msra.mxu0 0
        %1822 = vmatprep.subr.bf16.mxu0 0
        %1823 = vmatpush1.bf16.msra.mxu0 0
        %1824 = vmatprep.subr.bf16.mxu0 0
        %1825 = vmatpush1.bf16.msra.mxu0 0
        %1826 = vmatprep.subr.bf16.mxu0 0
        %1827 = vmatpush1.bf16.msra.mxu0 0
        %1828 = vmatprep.subr.bf16.mxu0 0
        %1829 = vmatpush1.bf16.msra.mxu0 0
        %1830 = vmatprep.subr.bf16.mxu0 0
        %1831 = vmatpush1.bf16.msra.mxu0 0
        %1832 = vmatprep.subr.bf16.mxu0 0
        %1833 = vmatpush1.bf16.msra.mxu0 0
        %1834 = vmatprep.subr.bf16.mxu0 0
        %1835 = vmatpush1.bf16.msra.mxu0 0
        %1836 = vmatprep.subr.bf16.mxu0 0
        %1837 = vmatpush1.bf16.msra.mxu0 0
        %1838 = vmatprep.subr.bf16.mxu0 0
        %1839 = vmatpush1.bf16.msra.mxu0 0
        %1840 = vmatprep.subr.bf16.mxu0 0
        %1841 = vmatpush1.bf16.msra.mxu0 0
        %1842 = vmatprep.subr.bf16.mxu0 0
        %1843 = vmatpush1.bf16.msra.mxu0 0
        %1844 = vmatprep.subr.bf16.mxu0 0
        %1845 = vmatpush1.bf16.msra.mxu0 0
        %1846 = vmatprep.mubr.bf16.mxu0 0
        %1847 = vmatmul.mubr.bf16.gmra.mrb[0].mxu0 %v1755
        %v1848 = vpop.f32.mrb[0].mxu0
        %v1849 = vadd.f32 0.0, %v1848
        %v1850 = vpop.f32.mrb[0].mxu0
        %v1851 = vpop.f32.mrb[0].mxu0
        %v1852 = vpop.f32.mrb[0].mxu0
        %1853 = vdwg.mxu0
        %v1854 = vsub.f32 %v1558, %v1743
        %v1855 = vmul.f32 %v1854, 1.442695
        %v1856 = vpow.pop %v1855
        %v1857 = vsel %vm1387, %v1856, 0.0
        %v1858 = vsel %vm1471, %v1857, 0.0
        %1859 = vadd.xlane.f32.xlu0 %v1858
        %v1860 = vpop.xlane.xlu0 %1859
        %v1861 = vpack.c.bf16 %v1857, %v1857
        %1863 = vrot.lane.b32.xlu0 %v1753, 120
        %v1864 = vpop.permute.xlu0 %1863
        %v1867 = vsel %vm1471, %v1861, 0
        %1869 = vmatprep.subr.bf16.mxu0 0
        %1870 = vmatpush1.bf16.msra.mxu0 %v1864
        %1871 = vmatprep.subr.bf16.mxu0 0
        %1872 = vmatpush1.bf16.msra.mxu0 0
        %1873 = vmatprep.subr.bf16.mxu0 0
        %1874 = vmatpush1.bf16.msra.mxu0 0
        %1875 = vmatprep.subr.bf16.mxu0 0
        %1876 = vmatpush1.bf16.msra.mxu0 0
        %1877 = vmatprep.subr.bf16.mxu0 0
        %1878 = vmatpush1.bf16.msra.mxu0 0
        %1879 = vmatprep.subr.bf16.mxu0 0
        %1880 = vmatpush1.bf16.msra.mxu0 0
        %1881 = vmatprep.subr.bf16.mxu0 0
        %1882 = vmatpush1.bf16.msra.mxu0 0
        %1883 = vmatprep.subr.bf16.mxu0 0
        %1884 = vmatpush1.bf16.msra.mxu0 0
        %1885 = vmatprep.subr.bf16.mxu0 0
        %1886 = vmatpush1.bf16.msra.mxu0 0
        %1887 = vmatprep.subr.bf16.mxu0 0
        %1888 = vmatpush1.bf16.msra.mxu0 0
        %1889 = vmatprep.subr.bf16.mxu0 0
        %1890 = vmatpush1.bf16.msra.mxu0 0
        %1891 = vmatprep.subr.bf16.mxu0 0
        %1892 = vmatpush1.bf16.msra.mxu0 0
        %1893 = vmatprep.subr.bf16.mxu0 0
        %1894 = vmatpush1.bf16.msra.mxu0 0
        %1895 = vmatprep.subr.bf16.mxu0 0
        %1896 = vmatpush1.bf16.msra.mxu0 0
        %1897 = vmatprep.subr.bf16.mxu0 0
        %1898 = vmatpush1.bf16.msra.mxu0 0
        %1899 = vmatprep.subr.bf16.mxu0 0
        %1900 = vmatpush1.bf16.msra.mxu0 0
        %1901 = vmatprep.mubr.bf16.mxu0 0
        %1902 = vmatmul.mubr.bf16.gmra.mrb[0].mxu0 %v1867
        %v1903 = vpop.f32.mrb[0].mxu0
        %v1904 = vadd.f32 0.0, %v1903
        %v1905 = vpop.f32.mrb[0].mxu0
        %v1906 = vpop.f32.mrb[0].mxu0
        %v1907 = vpop.f32.mrb[0].mxu0
        %1908 = vdwg.mxu0
        %1909 = vset.pattern.permute.xlu0 1
        %1910 = vperm.xlu0 %1909, %v1369
        %v1911 = vpop.permute.xlu0 %1910
        %1913 = vset.pattern.permute.xlu0 1
        %1914 = vperm.xlu0 %1913, %v1374
        %v1915 = vpop.permute.xlu0 %1914
        %v1917 = vmul.f32 %v1911, %v844
        %v1918 = vmul.f32 %v1915, %v845
        %v1919 = vpack.c.bf16 %v1918, %v1917
        %1921 = vrot.lane.b32.xlu0 %v1919, 48
        %v1922 = vpop.permute.xlu0 %1921
        %1924 = vmatprep.subr.bf16.mxu0 0
        %1925 = vmatpush1.bf16.msra.mxu0 %v1922
        %1926 = vmatprep.subr.bf16.mxu0 0
        %1927 = vmatpush1.bf16.msra.mxu0 0
        %1928 = vmatprep.subr.bf16.mxu0 0
        %1929 = vmatpush1.bf16.msra.mxu0 0
        %1930 = vmatprep.subr.bf16.mxu0 0
        %1931 = vmatpush1.bf16.msra.mxu0 0
        %1932 = vmatprep.subr.bf16.mxu0 0
        %1933 = vmatpush1.bf16.msra.mxu0 0
        %1934 = vmatprep.subr.bf16.mxu0 0
        %1935 = vmatpush1.bf16.msra.mxu0 0
        %1936 = vmatprep.subr.bf16.mxu0 0
        %1937 = vmatpush1.bf16.msra.mxu0 0
        %1938 = vmatprep.subr.bf16.mxu0 0
        %1939 = vmatpush1.bf16.msra.mxu0 0
        %1940 = vmatprep.subr.bf16.mxu0 0
        %1941 = vmatpush1.bf16.msra.mxu0 0
        %1942 = vmatprep.subr.bf16.mxu0 0
        %1943 = vmatpush1.bf16.msra.mxu0 0
        %1944 = vmatprep.subr.bf16.mxu0 0
        %1945 = vmatpush1.bf16.msra.mxu0 0
        %1946 = vmatprep.subr.bf16.mxu0 0
        %1947 = vmatpush1.bf16.msra.mxu0 0
        %1948 = vmatprep.subr.bf16.mxu0 0
        %1949 = vmatpush1.bf16.msra.mxu0 0
        %1950 = vmatprep.subr.bf16.mxu0 0
        %1951 = vmatpush1.bf16.msra.mxu0 0
        %1952 = vmatprep.subr.bf16.mxu0 0
        %1953 = vmatpush1.bf16.msra.mxu0 0
        %1954 = vmatprep.subr.bf16.mxu0 0
        %1955 = vmatpush1.bf16.msra.mxu0 0
        %1956 = vmatprep.mubr.bf16.mxu0 0
        %1957 = vmatmul.mubr.bf16.gmra.mrb[0].mxu0 %v1867
        %v1958 = vpop.f32.mrb[0].mxu0
        %v1959 = vadd.f32 0.0, %v1958
        %v1960 = vpop.f32.mrb[0].mxu0
        %v1961 = vpop.f32.mrb[0].mxu0
        %v1962 = vpop.f32.mrb[0].mxu0
        %1963 = vdwg.mxu0
        %v1964 = vsub.f32 %v1645, %v1743
        %v1965 = vmul.f32 %v1964, 1.442695
        %v1966 = vpow.pop %v1965
        %v1967 = vsel %vm1387, %v1966, 0.0
        %v1968 = vsel %vm1471, %v1967, 0.0
        %1969 = vadd.xlane.f32.xlu0 %v1968
        %v1970 = vpop.xlane.xlu0 %1969
        %v1971 = vpack.c.bf16 %v1967, %v1967
        %1972 = vrot.lane.b32.xlu0 %v1753, 112
        %v1973 = vpop.permute.xlu0 %1972
        %v1976 = vsel %vm1471, %v1971, 0
        %1978 = vmatprep.subr.bf16.mxu0 0
        %1979 = vmatpush1.bf16.msra.mxu0 %v1973
        %1980 = vmatprep.subr.bf16.mxu0 0
        %1981 = vmatpush1.bf16.msra.mxu0 0
        %1982 = vmatprep.subr.bf16.mxu0 0
        %1983 = vmatpush1.bf16.msra.mxu0 0
        %1984 = vmatprep.subr.bf16.mxu0 0
        %1985 = vmatpush1.bf16.msra.mxu0 0
        %1986 = vmatprep.subr.bf16.mxu0 0
        %1987 = vmatpush1.bf16.msra.mxu0 0
        %1988 = vmatprep.subr.bf16.mxu0 0
        %1989 = vmatpush1.bf16.msra.mxu0 0
        %1990 = vmatprep.subr.bf16.mxu0 0
        %1991 = vmatpush1.bf16.msra.mxu0 0
        %1992 = vmatprep.subr.bf16.mxu0 0
        %1993 = vmatpush1.bf16.msra.mxu0 0
        %1994 = vmatprep.subr.bf16.mxu0 0
        %1995 = vmatpush1.bf16.msra.mxu0 0
        %1996 = vmatprep.subr.bf16.mxu0 0
        %1997 = vmatpush1.bf16.msra.mxu0 0
        %1998 = vmatprep.subr.bf16.mxu0 0
        %1999 = vmatpush1.bf16.msra.mxu0 0
        %2000 = vmatprep.subr.bf16.mxu0 0
        %2001 = vmatpush1.bf16.msra.mxu0 0
        %2002 = vmatprep.subr.bf16.mxu0 0
        %2003 = vmatpush1.bf16.msra.mxu0 0
        %2004 = vmatprep.subr.bf16.mxu0 0
        %2005 = vmatpush1.bf16.msra.mxu0 0
        %2006 = vmatprep.subr.bf16.mxu0 0
        %2007 = vmatpush1.bf16.msra.mxu0 0
        %2008 = vmatprep.subr.bf16.mxu0 0
        %2009 = vmatpush1.bf16.msra.mxu0 0
        %2010 = vmatprep.mubr.bf16.mxu0 0
        %2011 = vmatmul.mubr.bf16.gmra.mrb[0].mxu0 %v1976
        %v2012 = vpop.f32.mrb[0].mxu0
        %v2013 = vadd.f32 0.0, %v2012
        %v2014 = vpop.f32.mrb[0].mxu0
        %v2015 = vpop.f32.mrb[0].mxu0
        %v2016 = vpop.f32.mrb[0].mxu0
        %2017 = vdwg.mxu0
        %2018 = vset.pattern.permute.xlu0 2
        %2019 = vperm.xlu0 %2018, %v1369
        %v2020 = vpop.permute.xlu0 %2019
        %2022 = vset.pattern.permute.xlu0 2
        %2023 = vperm.xlu0 %2022, %v1374
        %v2024 = vpop.permute.xlu0 %2023
        %v2026 = vmul.f32 %v2020, %v844
        %v2027 = vmul.f32 %v2024, %v845
        %v2028 = vpack.c.bf16 %v2027, %v2026
        %2030 = vrot.lane.b32.xlu0 %v2028, 48
        %v2031 = vpop.permute.xlu0 %2030
        %2033 = vmatprep.subr.bf16.mxu0 0
        %2034 = vmatpush1.bf16.msra.mxu0 %v2031
        %2035 = vmatprep.subr.bf16.mxu0 0
        %2036 = vmatpush1.bf16.msra.mxu0 0
        %2037 = vmatprep.subr.bf16.mxu0 0
        %2038 = vmatpush1.bf16.msra.mxu0 0
        %2039 = vmatprep.subr.bf16.mxu0 0
        %2040 = vmatpush1.bf16.msra.mxu0 0
        %2041 = vmatprep.subr.bf16.mxu0 0
        %2042 = vmatpush1.bf16.msra.mxu0 0
        %2043 = vmatprep.subr.bf16.mxu0 0
        %2044 = vmatpush1.bf16.msra.mxu0 0
        %2045 = vmatprep.subr.bf16.mxu0 0
        %2046 = vmatpush1.bf16.msra.mxu0 0
        %2047 = vmatprep.subr.bf16.mxu0 0
        %2048 = vmatpush1.bf16.msra.mxu0 0
        %2049 = vmatprep.subr.bf16.mxu0 0
        %2050 = vmatpush1.bf16.msra.mxu0 0
        %2051 = vmatprep.subr.bf16.mxu0 0
        %2052 = vmatpush1.bf16.msra.mxu0 0
        %2053 = vmatprep.subr.bf16.mxu0 0
        %2054 = vmatpush1.bf16.msra.mxu0 0
        %2055 = vmatprep.subr.bf16.mxu0 0
        %2056 = vmatpush1.bf16.msra.mxu0 0
        %2057 = vmatprep.subr.bf16.mxu0 0
        %2058 = vmatpush1.bf16.msra.mxu0 0
        %2059 = vmatprep.subr.bf16.mxu0 0
        %2060 = vmatpush1.bf16.msra.mxu0 0
        %2061 = vmatprep.subr.bf16.mxu0 0
        %2062 = vmatpush1.bf16.msra.mxu0 0
        %2063 = vmatprep.subr.bf16.mxu0 0
        %2064 = vmatpush1.bf16.msra.mxu0 0
        %2065 = vmatprep.mubr.bf16.mxu0 0
        %2066 = vmatmul.mubr.bf16.gmra.mrb[0].mxu0 %v1976
        %v2067 = vpop.f32.mrb[0].mxu0
        %v2068 = vadd.f32 0.0, %v2067
        %v2069 = vpop.f32.mrb[0].mxu0
        %v2070 = vpop.f32.mrb[0].mxu0
        %v2071 = vpop.f32.mrb[0].mxu0
        %2072 = vdwg.mxu0
        %v2073 = vsub.f32 %v1732, %v1743
        %v2074 = vmul.f32 %v2073, 1.442695
        %v2075 = vpow.pop %v2074
        %v2076 = vsel %vm1387, %v2075, 0.0
        %v2077 = vsel %vm1471, %v2076, 0.0
        %2078 = vadd.xlane.f32.xlu0 %v2077
        %v2079 = vpop.xlane.xlu0 %2078
        %v2080 = vpack.c.bf16 %v2076, %v2076
        %2081 = vrot.lane.b32.xlu0 %v1753, 104
        %v2082 = vpop.permute.xlu0 %2081
        %v2085 = vsel %vm1471, %v2080, 0
        %2087 = vmatprep.subr.bf16.mxu0 0
        %2088 = vmatpush1.bf16.msra.mxu0 %v2082
        %2089 = vmatprep.subr.bf16.mxu0 0
        %2090 = vmatpush1.bf16.msra.mxu0 0
        %2091 = vmatprep.subr.bf16.mxu0 0
        %2092 = vmatpush1.bf16.msra.mxu0 0
        %2093 = vmatprep.subr.bf16.mxu0 0
        %2094 = vmatpush1.bf16.msra.mxu0 0
        %2095 = vmatprep.subr.bf16.mxu0 0
        %2096 = vmatpush1.bf16.msra.mxu0 0
        %2097 = vmatprep.subr.bf16.mxu0 0
        %2098 = vmatpush1.bf16.msra.mxu0 0
        %2099 = vmatprep.subr.bf16.mxu0 0
        %2100 = vmatpush1.bf16.msra.mxu0 0
        %2101 = vmatprep.subr.bf16.mxu0 0
        %2102 = vmatpush1.bf16.msra.mxu0 0
        %2103 = vmatprep.subr.bf16.mxu0 0
        %2104 = vmatpush1.bf16.msra.mxu0 0
        %2105 = vmatprep.subr.bf16.mxu0 0
        %2106 = vmatpush1.bf16.msra.mxu0 0
        %2107 = vmatprep.subr.bf16.mxu0 0
        %2108 = vmatpush1.bf16.msra.mxu0 0
        %2109 = vmatprep.subr.bf16.mxu0 0
        %2110 = vmatpush1.bf16.msra.mxu0 0
        %2111 = vmatprep.subr.bf16.mxu0 0
        %2112 = vmatpush1.bf16.msra.mxu0 0
        %2113 = vmatprep.subr.bf16.mxu0 0
        %2114 = vmatpush1.bf16.msra.mxu0 0
        %2115 = vmatprep.subr.bf16.mxu0 0
        %2116 = vmatpush1.bf16.msra.mxu0 0
        %2117 = vmatprep.subr.bf16.mxu0 0
        %2118 = vmatpush1.bf16.msra.mxu0 0
        %2119 = vmatprep.mubr.bf16.mxu0 0
        %2120 = vmatmul.mubr.bf16.gmra.mrb[0].mxu0 %v2085
        %v2121 = vpop.f32.mrb[0].mxu0
        %v2122 = vadd.f32 0.0, %v2121
        %v2123 = vpop.f32.mrb[0].mxu0
        %v2124 = vpop.f32.mrb[0].mxu0
        %v2125 = vpop.f32.mrb[0].mxu0
        %2126 = vdwg.mxu0
        %2127 = vset.pattern.permute.xlu0 3
        %2128 = vperm.xlu0 %2127, %v1369
        %v2129 = vpop.permute.xlu0 %2128
        %2131 = vset.pattern.permute.xlu0 3
        %2132 = vperm.xlu0 %2131, %v1374
        %v2133 = vpop.permute.xlu0 %2132
        %v2135 = vmul.f32 %v2129, %v844
        %v2136 = vmul.f32 %v2133, %v845
        %v2137 = vpack.c.bf16 %v2136, %v2135
        %2139 = vrot.lane.b32.xlu0 %v2137, 48
        %v2140 = vpop.permute.xlu0 %2139
        %2142 = vmatprep.subr.bf16.mxu0 0
        %2143 = vmatpush1.bf16.msra.mxu0 %v2140
        %2144 = vmatprep.subr.bf16.mxu0 0
        %2145 = vmatpush1.bf16.msra.mxu0 0
        %2146 = vmatprep.subr.bf16.mxu0 0
        %2147 = vmatpush1.bf16.msra.mxu0 0
        %2148 = vmatprep.subr.bf16.mxu0 0
        %2149 = vmatpush1.bf16.msra.mxu0 0
        %2150 = vmatprep.subr.bf16.mxu0 0
        %2151 = vmatpush1.bf16.msra.mxu0 0
        %2152 = vmatprep.subr.bf16.mxu0 0
        %2153 = vmatpush1.bf16.msra.mxu0 0
        %2154 = vmatprep.subr.bf16.mxu0 0
        %2155 = vmatpush1.bf16.msra.mxu0 0
        %2156 = vmatprep.subr.bf16.mxu0 0
        %2157 = vmatpush1.bf16.msra.mxu0 0
        %2158 = vmatprep.subr.bf16.mxu0 0
        %2159 = vmatpush1.bf16.msra.mxu0 0
        %2160 = vmatprep.subr.bf16.mxu0 0
        %2161 = vmatpush1.bf16.msra.mxu0 0
        %2162 = vmatprep.subr.bf16.mxu0 0
        %2163 = vmatpush1.bf16.msra.mxu0 0
        %2164 = vmatprep.subr.bf16.mxu0 0
        %2165 = vmatpush1.bf16.msra.mxu0 0
        %2166 = vmatprep.subr.bf16.mxu0 0
        %2167 = vmatpush1.bf16.msra.mxu0 0
        %2168 = vmatprep.subr.bf16.mxu0 0
        %2169 = vmatpush1.bf16.msra.mxu0 0
        %2170 = vmatprep.subr.bf16.mxu0 0
        %2171 = vmatpush1.bf16.msra.mxu0 0
        %2172 = vmatprep.subr.bf16.mxu0 0
        %2173 = vmatpush1.bf16.msra.mxu0 0
        %2174 = vmatprep.mubr.bf16.mxu0 0
        %2175 = vmatmul.mubr.bf16.gmra.mrb[0].mxu0 %v2085
        %v2176 = vpop.f32.mrb[0].mxu0
        %v2177 = vadd.f32 0.0, %v2176
        %v2178 = vpop.f32.mrb[0].mxu0
        %v2179 = vpop.f32.mrb[0].mxu0
        %v2180 = vpop.f32.mrb[0].mxu0
        %2181 = vdwg.mxu0
        %vm2182 = vcmask 7168
        %2183 = vst.msk [vmem:[#allocation3] sm:$0xff] %vm2182, %v1736
        %v2184 = vld [vmem:[#allocation4] sm:$0xff]
        %2186 = vset.pattern.permute.xlu0 0
        %2187 = vperm.xlu0 %2186, %v1739
        %v2188 = vpop.permute.xlu0 %2187
        %v2190 = vmul.f32 %v2184, %v2188
        %v2191 = vsel %vm2182, %v1751, %v1860
        %vm2192 = vcmask 15360
        %v2193 = vsel %vm2192, %v2191, %v1970
        %vm2194 = vcmask 23552
        %v2195 = vsel %vm2194, %v2193, %v2079
        %v2196 = vadd.f32 %v2190, %v2195
        %vm2197 = vcmask 31744
        %2198 = vst.msk [vmem:[#allocation4] sm:$0xff] %vm2197, %v2196
        %v2199 = vld [vmem:[#allocation5] sm:$0xff]
        %v2200 = vmul.f32 %v2199, %v2188
        %2202 = vrot.lane.b32.xlu0 %v1904, 8
        %v2203 = vpop.permute.xlu0 %2202
        %2206 = vrot.lane.b32.xlu0 %v2013, 16
        %v2207 = vpop.permute.xlu0 %2206
        %2210 = vrot.lane.b32.xlu0 %v2122, 24
        %v2211 = vpop.permute.xlu0 %2210
        %v2213 = vsel %vm1390, %v1792, %v2203
        %v2214 = vsel %vm1471, %v2213, %v2207
        %vm2215 = vcmask 195584
        %v2216 = vsel %vm2215, %v2214, %v2211
        %v2217 = vadd.f32 %v2200, %v2216
        %2218 = vst.msk [vmem:[#allocation5] sm:$0xff] %vm945, %v2217
        %v2219 = vld [vmem:[#allocation6] sm:$0xff]
        %v2220 = vmul.f32 %v2219, %v2188
        %2222 = vrot.lane.b32.xlu0 %v1959, 8
        %v2223 = vpop.permute.xlu0 %2222
        %2226 = vrot.lane.b32.xlu0 %v2068, 16
        %v2227 = vpop.permute.xlu0 %2226
        %2230 = vrot.lane.b32.xlu0 %v2177, 24
        %v2231 = vpop.permute.xlu0 %2230
        %v2233 = vsel %vm1390, %v1849, %v2223
        %v2234 = vsel %vm1471, %v2233, %v2227
        %v2235 = vsel %vm2215, %v2234, %v2231
        %v2236 = vadd.f32 %v2220, %v2235
        %2237 = vst.msk [vmem:[#allocation6] sm:$0xff] %vm945, %v2236
      $region80: #{_lambda_.1} parent=71 // pred_fallthru
        _
      %p2238 = scmp.eq.s32.totalorder %s41, 1
      // Predicated region
      $region81: #{_lambda_.1} parent=71 // pred_check
        %p2239 = pneg %p2238
      $region82: #{_lambda_.1} parent=71 // pred_check_branch
        %2241 = sbr.rel (%p2239) target = $region84
      $region83: #{_lambda_.1} parent=71 // pred_region
        %v2242 = vld [vmem:[#allocation4] sm:$0xff]
        %vm2243 = vcmp.gt.f32.partialorder %v2242, 0.0
        %v2244 = vsel %vm2243, %v2242, 1.0
        %v2245 = vrcp.pop %v2244
        %v2246 = vld [vmem:[#allocation5] sm:$0xff]
        %v2247 = vld [vmem:[#allocation6] sm:$0xff]
        %2249 = vset.pattern.permute.xlu0 0
        %2250 = vperm.xlu0 %2249, %v2245
        %v2251 = vpop.permute.xlu0 %2250
        %v2253 = vmul.f32 %v2246, %v2251
        %v2254 = vmul.f32 %v2247, %v2251
        %v2255 = vadd.f32 %v2254, 0.0
        %2256 = vset.pattern.permute.xlu0 1
        %2257 = vperm.xlu0 %2256, %v2245
        %v2258 = vpop.permute.xlu0 %2257
        %v2260 = vmul.f32 %v2246, %v2258
        %v2261 = vmul.f32 %v2247, %v2258
        %2263 = vrot.lane.b32.xlu0 %v2261, 120
        %v2264 = vpop.permute.xlu0 %2263
        %v2266 = vadd.f32 %v2255, %v2264
        %2267 = vset.pattern.permute.xlu0 2
        %2268 = vperm.xlu0 %2267, %v2245
        %v2269 = vpop.permute.xlu0 %2268
        %v2271 = vmul.f32 %v2246, %v2269
        %v2272 = vmul.f32 %v2247, %v2269
        %2274 = vrot.lane.b32.xlu0 %v2272, 112
        %v2275 = vpop.permute.xlu0 %2274
        %v2277 = vadd.f32 %v2266, %v2275
        %2278 = vset.pattern.permute.xlu0 3
        %2279 = vperm.xlu0 %2278, %v2245
        %v2280 = vpop.permute.xlu0 %2279
        %v2282 = vmul.f32 %v2246, %v2280
        %v2283 = vmul.f32 %v2247, %v2280
        %2285 = vrot.lane.b32.xlu0 %v2283, 104
        %v2286 = vpop.permute.xlu0 %2285
        %v2288 = vadd.f32 %v2277, %v2286
        %vm2289 = vcmask 64512
        %v2290 = vsel %vm2289, %v2253, %v2260
        %vm2291 = vcmask 130048
        %v2292 = vsel %vm2291, %v2290, %v2271
        %vm2293 = vcmask 195584
        %v2294 = vsel %vm2293, %v2292, %v2282
        %v2295 = vld [vmem:[%s575] sm:$0xff]
        %v2296 = vld [vmem:[%s12] sm:$0xff]
        %v2297 = vld [vmem:[%s12 + $0x8] sm:$0xff]
        %v2298 = vld [vmem:[%s12 + $0x10] sm:$0xff]
        %v2299 = vld [vmem:[%s12 + $0x18] sm:$0xff]
        %v2300 = vld [vmem:[%s12 + $0x20] sm:$0xff]
        %v2301 = vld [vmem:[%s12 + $0x28] sm:$0xff]
        %v2302 = vld [vmem:[%s12 + $0x30] sm:$0xff]
        %v2303 = vld [vmem:[%s12 + $0x38] sm:$0xff]
        %v2304 = vld [vmem:[%s14] sm:$0xf]
        %v2305 = vld [vmem:[%s579] sm:$0xff]
        %vm2306 = vcmask 261120
        %v2308 = vsel %vm2306, %v2305, 0
        %2310 = vmatprep.subr.mxu0 0.0
        %2311 = vmatpush1.msra.mxu0 %v2300
        %2312 = vmatprep.subr.mxu0 0.0
        %2313 = vmatpush1.msra.mxu0 %v2301
        %2314 = vmatprep.subr.mxu0 0.0
        %2315 = vmatpush1.msra.mxu0 %v2302
        %2316 = vmatprep.subr.mxu0 0.0
        %2317 = vmatpush1.msra.mxu0 %v2303
        %2318 = vmatprep.subr.mxu0 0.0
        %2319 = vmatpush1.msra.mxu0 0.0
        %2320 = vmatprep.subr.mxu0 0.0
        %2321 = vmatpush1.msra.mxu0 0.0
        %2322 = vmatprep.subr.mxu0 0.0
        %2323 = vmatpush1.msra.mxu0 0.0
        %2324 = vmatprep.subr.mxu0 0.0
        %2325 = vmatpush1.msra.mxu0 0.0
        %2326 = vmatprep.subr.mxu0 0.0
        %2327 = vmatpush1.msra.mxu0 0.0
        %2328 = vmatprep.subr.mxu0 0.0
        %2329 = vmatpush1.msra.mxu0 0.0
        %2330 = vmatprep.subr.mxu0 0.0
        %2331 = vmatpush1.msra.mxu0 0.0
        %2332 = vmatprep.subr.mxu0 0.0
        %2333 = vmatpush1.msra.mxu0 0.0
        %2334 = vmatprep.subr.mxu0 0.0
        %2335 = vmatpush1.msra.mxu0 0.0
        %2336 = vmatprep.subr.mxu0 0.0
        %2337 = vmatpush1.msra.mxu0 0.0
        %2338 = vmatprep.subr.mxu0 0.0
        %2339 = vmatpush1.msra.mxu0 0.0
        %2340 = vmatprep.subr.mxu0 0.0
        %2341 = vmatpush1.msra.mxu0 0.0
        %2342 = vmatprep.subr.mxu0 0.0
        %2343 = vmatpush1.msra.mxu0 0.0
        %2344 = vmatprep.subr.mxu0 0.0
        %2345 = vmatpush1.msra.mxu0 0.0
        %2346 = vmatprep.subr.mxu0 0.0
        %2347 = vmatpush1.msra.mxu0 0.0
        %2348 = vmatprep.subr.mxu0 0.0
        %2349 = vmatpush1.msra.mxu0 0.0
        %2350 = vmatprep.subr.mxu0 0.0
        %2351 = vmatpush1.msra.mxu0 0.0
        %2352 = vmatprep.subr.mxu0 0.0
        %2353 = vmatpush1.msra.mxu0 0.0
        %2354 = vmatprep.subr.mxu0 0.0
        %2355 = vmatpush1.msra.mxu0 0.0
        %2356 = vmatprep.subr.mxu0 0.0
        %2357 = vmatpush1.msra.mxu0 0.0
        %2358 = vmatprep.subr.mxu0 0.0
        %2359 = vmatpush1.msra.mxu0 0.0
        %2360 = vmatprep.subr.mxu0 0.0
        %2361 = vmatpush1.msra.mxu0 0.0
        %2362 = vmatprep.subr.mxu0 0.0
        %2363 = vmatpush1.msra.mxu0 0.0
        %2364 = vmatprep.subr.mxu0 0.0
        %2365 = vmatpush1.msra.mxu0 0.0
        %2366 = vmatprep.subr.mxu0 0.0
        %2367 = vmatpush1.msra.mxu0 0.0
        %2368 = vmatprep.subr.mxu0 0.0
        %2369 = vmatpush1.msra.mxu0 0.0
        %2370 = vmatprep.subr.mxu0 0.0
        %2371 = vmatpush1.msra.mxu0 0.0
        %2372 = vmatprep.subr.mxu0 0.0
        %2373 = vmatpush1.msra.mxu0 0.0
        %2374 = vmatprep.mubr.f32.mxu0 0.0
        %2375 = vmatmul.mubr.f32.gmra.mrb[0].mxu0 %v2308
        %v2376 = vpop.f32.mrb[0].mxu0
        %v2377 = vadd.f32 0.0, %v2376
        %v2378 = vpop.f32.mrb[0].mxu0
        %2379 = vdwg.mxu0
        %v2381 = vsel %vm2306, %v2294, 0
        %2383 = vmatprep.subr.mxu0 0.0
        %2384 = vmatpush1.msra.mxu0 %v2296
        %2385 = vmatprep.subr.mxu0 0.0
        %2386 = vmatpush1.msra.mxu0 %v2297
        %2387 = vmatprep.subr.mxu0 0.0
        %2388 = vmatpush1.msra.mxu0 %v2298
        %2389 = vmatprep.subr.mxu0 0.0
        %2390 = vmatpush1.msra.mxu0 %v2299
        %2391 = vmatprep.subr.mxu0 0.0
        %2392 = vmatpush1.msra.mxu0 0.0
        %2393 = vmatprep.subr.mxu0 0.0
        %2394 = vmatpush1.msra.mxu0 0.0
        %2395 = vmatprep.subr.mxu0 0.0
        %2396 = vmatpush1.msra.mxu0 0.0
        %2397 = vmatprep.subr.mxu0 0.0
        %2398 = vmatpush1.msra.mxu0 0.0
        %2399 = vmatprep.subr.mxu0 0.0
        %2400 = vmatpush1.msra.mxu0 0.0
        %2401 = vmatprep.subr.mxu0 0.0
        %2402 = vmatpush1.msra.mxu0 0.0
        %2403 = vmatprep.subr.mxu0 0.0
        %2404 = vmatpush1.msra.mxu0 0.0
        %2405 = vmatprep.subr.mxu0 0.0
        %2406 = vmatpush1.msra.mxu0 0.0
        %2407 = vmatprep.subr.mxu0 0.0
        %2408 = vmatpush1.msra.mxu0 0.0
        %2409 = vmatprep.subr.mxu0 0.0
        %2410 = vmatpush1.msra.mxu0 0.0
        %2411 = vmatprep.subr.mxu0 0.0
        %2412 = vmatpush1.msra.mxu0 0.0
        %2413 = vmatprep.subr.mxu0 0.0
        %2414 = vmatpush1.msra.mxu0 0.0
        %2415 = vmatprep.subr.mxu0 0.0
        %2416 = vmatpush1.msra.mxu0 0.0
        %2417 = vmatprep.subr.mxu0 0.0
        %2418 = vmatpush1.msra.mxu0 0.0
        %2419 = vmatprep.subr.mxu0 0.0
        %2420 = vmatpush1.msra.mxu0 0.0
        %2421 = vmatprep.subr.mxu0 0.0
        %2422 = vmatpush1.msra.mxu0 0.0
        %2423 = vmatprep.subr.mxu0 0.0
        %2424 = vmatpush1.msra.mxu0 0.0
        %2425 = vmatprep.subr.mxu0 0.0
        %2426 = vmatpush1.msra.mxu0 0.0
        %2427 = vmatprep.subr.mxu0 0.0
        %2428 = vmatpush1.msra.mxu0 0.0
        %2429 = vmatprep.subr.mxu0 0.0
        %2430 = vmatpush1.msra.mxu0 0.0
        %2431 = vmatprep.subr.mxu0 0.0
        %2432 = vmatpush1.msra.mxu0 0.0
        %2433 = vmatprep.subr.mxu0 0.0
        %2434 = vmatpush1.msra.mxu0 0.0
        %2435 = vmatprep.subr.mxu0 0.0
        %2436 = vmatpush1.msra.mxu0 0.0
        %2437 = vmatprep.subr.mxu0 0.0
        %2438 = vmatpush1.msra.mxu0 0.0
        %2439 = vmatprep.subr.mxu0 0.0
        %2440 = vmatpush1.msra.mxu0 0.0
        %2441 = vmatprep.subr.mxu0 0.0
        %2442 = vmatpush1.msra.mxu0 0.0
        %2443 = vmatprep.subr.mxu0 0.0
        %2444 = vmatpush1.msra.mxu0 0.0
        %2445 = vmatprep.subr.mxu0 0.0
        %2446 = vmatpush1.msra.mxu0 0.0
        %2447 = vmatprep.mubr.f32.mxu0 0.0
        %2448 = vmatmul.mubr.f32.gmra.mrb[0].mxu0 %v2381
        %v2449 = vpop.f32.mrb[0].mxu0
        %v2450 = vadd.f32 %v2377, %v2449
        %v2451 = vpop.f32.mrb[0].mxu0
        %2452 = vdwg.mxu0
        %v2453 = vlaneseq
        %v2454 = vshrl.u32 %v2453, 7
        %v2455 = vsub.s32 0, %v2454
        %v2456 = vrot.slane %v2304, %v2455
        %v2457 = vadd.f32 %v2450, %v2456
        %v2458 = vsel %vm2306, %v2457, 0.0
        %2459 = vadd.xlane.f32.xlu0 %v2458
        %v2460 = vpop.xlane.xlu0 %2459
        %v2461 = vrcp.pop 32.0
        %v2462 = vmul.f32 %v2460, %v2461
        %v2463 = vsub.f32 %v2457, %v2462
        %v2464 = vmul.f32 %v2463, %v2463
        %v2465 = vsel %vm2306, %v2464, 0.0
        %2466 = vadd.xlane.f32.xlu0 %v2465
        %v2467 = vpop.xlane.xlu0 %2466
        %v2468 = vmul.f32 %v2467, %v2461
        %v2469 = vadd.f32 %v2468, 1e-05
        %v2470 = vrsqrt.pop %v2469
        %v2471 = vmul.f32 %v2463, %v2470
        %v2472 = vlaneseq
        %v2473 = vshrl.u32 %v2472, 7
        %v2474 = vsub.s32 1, %v2473
        %v2475 = vrot.slane %v2304, %v2474
        %v2476 = vmul.f32 %v2471, %v2475
        %v2477 = vlaneseq
        %v2478 = vshrl.u32 %v2477, 7
        %v2479 = vsub.s32 2, %v2478
        %v2480 = vrot.slane %v2304, %v2479
        %v2481 = vadd.f32 %v2476, %v2480
        %v2482 = vmax.f32 %v2481, 0.0
        %v2483 = vld [vmem:[%s13] sm:$0xff]
        %v2484 = vld [vmem:[%s13 + $0x8] sm:$0xff]
        %v2485 = vld [vmem:[%s13 + $0x10] sm:$0xff]
        %v2486 = vld [vmem:[%s13 + $0x18] sm:$0xff]
        %v2487 = vlaneseq
        %v2488 = vshrl.u32 %v2487, 7
        %v2489 = vsub.s32 3, %v2488
        %v2490 = vrot.slane %v2304, %v2489
        %v2492 = vsel %vm2306, %v2482, 0
        %2494 = vmatprep.subr.mxu0 0.0
        %2495 = vmatpush1.msra.mxu0 %v2483
        %2496 = vmatprep.subr.mxu0 0.0
        %2497 = vmatpush1.msra.mxu0 %v2484
        %2498 = vmatprep.subr.mxu0 0.0
        %2499 = vmatpush1.msra.mxu0 %v2485
        %2500 = vmatprep.subr.mxu0 0.0
        %2501 = vmatpush1.msra.mxu0 %v2486
        %2502 = vmatprep.subr.mxu0 0.0
        %2503 = vmatpush1.msra.mxu0 0.0
        %2504 = vmatprep.subr.mxu0 0.0
        %2505 = vmatpush1.msra.mxu0 0.0
        %2506 = vmatprep.subr.mxu0 0.0
        %2507 = vmatpush1.msra.mxu0 0.0
        %2508 = vmatprep.subr.mxu0 0.0
        %2509 = vmatpush1.msra.mxu0 0.0
        %2510 = vmatprep.subr.mxu0 0.0
        %2511 = vmatpush1.msra.mxu0 0.0
        %2512 = vmatprep.subr.mxu0 0.0
        %2513 = vmatpush1.msra.mxu0 0.0
        %2514 = vmatprep.subr.mxu0 0.0
        %2515 = vmatpush1.msra.mxu0 0.0
        %2516 = vmatprep.subr.mxu0 0.0
        %2517 = vmatpush1.msra.mxu0 0.0
        %2518 = vmatprep.subr.mxu0 0.0
        %2519 = vmatpush1.msra.mxu0 0.0
        %2520 = vmatprep.subr.mxu0 0.0
        %2521 = vmatpush1.msra.mxu0 0.0
        %2522 = vmatprep.subr.mxu0 0.0
        %2523 = vmatpush1.msra.mxu0 0.0
        %2524 = vmatprep.subr.mxu0 0.0
        %2525 = vmatpush1.msra.mxu0 0.0
        %2526 = vmatprep.subr.mxu0 0.0
        %2527 = vmatpush1.msra.mxu0 0.0
        %2528 = vmatprep.subr.mxu0 0.0
        %2529 = vmatpush1.msra.mxu0 0.0
        %2530 = vmatprep.subr.mxu0 0.0
        %2531 = vmatpush1.msra.mxu0 0.0
        %2532 = vmatprep.subr.mxu0 0.0
        %2533 = vmatpush1.msra.mxu0 0.0
        %2534 = vmatprep.subr.mxu0 0.0
        %2535 = vmatpush1.msra.mxu0 0.0
        %2536 = vmatprep.subr.mxu0 0.0
        %2537 = vmatpush1.msra.mxu0 0.0
        %2538 = vmatprep.subr.mxu0 0.0
        %2539 = vmatpush1.msra.mxu0 0.0
        %2540 = vmatprep.subr.mxu0 0.0
        %2541 = vmatpush1.msra.mxu0 0.0
        %2542 = vmatprep.subr.mxu0 0.0
        %2543 = vmatpush1.msra.mxu0 0.0
        %2544 = vmatprep.subr.mxu0 0.0
        %2545 = vmatpush1.msra.mxu0 0.0
        %2546 = vmatprep.subr.mxu0 0.0
        %2547 = vmatpush1.msra.mxu0 0.0
        %2548 = vmatprep.subr.mxu0 0.0
        %2549 = vmatpush1.msra.mxu0 0.0
        %2550 = vmatprep.subr.mxu0 0.0
        %2551 = vmatpush1.msra.mxu0 0.0
        %2552 = vmatprep.subr.mxu0 0.0
        %2553 = vmatpush1.msra.mxu0 0.0
        %2554 = vmatprep.subr.mxu0 0.0
        %2555 = vmatpush1.msra.mxu0 0.0
        %2556 = vmatprep.subr.mxu0 0.0
        %2557 = vmatpush1.msra.mxu0 0.0
        %2558 = vmatprep.mubr.f32.mxu0 0.0
        %2559 = vmatmul.mubr.f32.gmra.mrb[0].mxu0 %v2492
        %v2560 = vpop.f32.mrb[0].mxu0
        %v2561 = vadd.f32 %v2490, %v2560
        %v2562 = vpop.f32.mrb[0].mxu0
        %2563 = vdwg.mxu0
        %v2564 = vadd.f32 %v2561, %v2295
        %2566 = vrot.lane.b32.xlu0 %v2288, 32
        %v2567 = vpop.permute.xlu0 %2566
        %v2569 = vsel %vm2306, %v2564, %v2567
        %vm2570 = vcmask 326656
        %v2571 = vsel %vm2570, %v2569, 0.0
        %2572 = vst [vmem:[%s624] sm:$0xff] %v2571
      $region84: #{_lambda_.1} parent=71 // pred_fallthru
        _
      %p2573 = scmp.lt.s32.totalorder %s40, 2
      %s2574 = scalar_select %p2573, %s40, 2
      %s2575 = smul.addr %s2574, 8
      %s2576 = scalar_lea.vmem %s15, %s2575
      // Predicated region
      $region85: #{_lambda_.1} parent=71 // pred_check
        %p2577 = pneg %p391
      $region86: #{_lambda_.1} parent=71 // pred_check_branch
        %2579 = sbr.rel (%p2577) target = $region88
      $region87: #{_lambda_.1} parent=71 // pred_region
        _
      $region88: #{_lambda_.1} parent=71 // pred_fallthru
        _
    $region72: #{_lambda_.1} parent=5 // pred_fallthru
      _
    %p2580 = scmp.le.s32.totalorder 2, %s31
    // Predicated region
    $region89: #{_lambda_.1} parent=5 // pred_check
      %p2581 = pneg %p2580
    $region90: #{_lambda_.1} parent=5 // pred_check_branch
      %2583 = sbr.rel (%p2581) target = $region92
    $region91: #{_lambda_.1} parent=5 // pred_region
      %s2584 = ssub.s32 %s31, 2
      // Predicated region
      $region93: #{_lambda_.1} parent=91 // pred_check
        %p2585 = pneg %p397
      $region94: #{_lambda_.1} parent=91 // pred_check_branch
        %2587 = sbr.rel (%p2585) target = $region96
      $region95: #{_lambda_.1} parent=91 // pred_region
        %p2588 = scmp.lt.s32.totalorder %s42, 2
        %s2589 = scalar_select %p2588, %s42, 2
        %s2590 = smul.addr %s2589, 8
        %s2591 = scalar_lea.vmem %s15, %s2590
      $region96: #{_lambda_.1} parent=91 // pred_fallthru
        _
    $region92: #{_lambda_.1} parent=5 // pred_fallthru
      _
  $region6: #{_lambda_.1} parent=0 // loop_footer
    %s35 = sadd.s32 1, %s31
  $region7: #{_lambda_.1} parent=0 // loop_footer_branch
    %30 = sbr.rel target = $region3
  $region8: #{_lambda_.1} parent=0 // loop_exit
    _

</llo_original>
